<compile_context>
chip_gen: v7x
topology: tpu7x:2x2x1
jax: 0.10.0
libtpu: 0.0.40
codegen_flags: <defaults>
</compile_context>

<pallas_src>
import functools
import inspect

import jax
import jax.numpy as jnp
from jax.experimental import pallas as pl
from jax.experimental.pallas import tpu as pltpu

LANE = 128

try:
    _HAS_PIPELINE_MODE = (
        hasattr(pl, "Buffered")
        and "pipeline_mode" in inspect.signature(pl.BlockSpec).parameters)
except (TypeError, ValueError):  # pragma: no cover - very old BlockSpec
    _HAS_PIPELINE_MODE = False


def _round_up(v, m):
    return (v + m - 1) // m * m


def _pad2(a, rows, cols):
    out = jnp.zeros((rows, cols), jnp.float32)
    return out.at[:a.shape[0], :a.shape[1]].set(a.astype(jnp.float32))


def _spec(shape, index_map, *, single_buffer):
    if single_buffer and _HAS_PIPELINE_MODE:
        # Constant-index-map blocks never change; one buffer halves their VMEM.
        return pl.BlockSpec(shape, index_map, pipeline_mode=pl.Buffered(1))
    return pl.BlockSpec(shape, index_map)


def egcl_edge_kernel(packed_ref, row_l_ref, xw_src_ref, xw_dst_ref,
                     erad_ref, eb1_ref, ew2_ref, eb2_ref,
                     agg_ref, *, precision):
    """One edge tile: one-hot gather -> edge MLP -> segment-sum into agg_ref."""
    e = pl.program_id(1)
    te = packed_ref.shape[0]
    n_pad = xw_src_ref.shape[0]

    @pl.when(e == 0)
    def _init():
        agg_ref[...] = jnp.zeros_like(agg_ref)

    packed = packed_ref[...]                        # [TE, 3]: row, col, radial
    row_ids = packed[:, 0:1].astype(jnp.int32)      # exact: ids < 2**24
    col_ids = packed[:, 1:2].astype(jnp.int32)
    radial = packed[:, 2:3]

    # Gather rows of x@W via one-hot matmuls (last-dim contraction, lane dense).
    gather_iota = jax.lax.broadcasted_iota(jnp.int32, (te, n_pad), 1)
    oh_row = (row_ids == gather_iota).astype(jnp.float32)      # [TE, N]
    oh_col = (col_ids == gather_iota).astype(jnp.float32)      # [TE, N]

    # edge_mlp layer 1: W_src/W_dst already folded into xw_src/xw_dst.
    h = (jnp.dot(oh_row, xw_src_ref[...],
                 preferred_element_type=jnp.float32, precision=precision)
         + jnp.dot(oh_col, xw_dst_ref[...],
                   preferred_element_type=jnp.float32, precision=precision)
         + radial * erad_ref[...]
         + eb1_ref[...])
    h = jnp.maximum(h, 0.0)                                     # ReLU
    edge_feat = jnp.maximum(
        jnp.dot(h, ew2_ref[...],
                preferred_element_type=jnp.float32, precision=precision)
        + eb2_ref[...],
        0.0)                                                    # [TE, H]

    # unsorted_segment_sum over `row` as a [N, TE] one-hot matmul. Padded edges
    # have row id == N_pad (sentinel) which matches no iota value 0..N_pad-1, so
    # their (bias-only, nonzero) edge_feat rows are masked out right here.
    scatter_iota = jax.lax.broadcasted_iota(jnp.int32, (n_pad, te), 0)
    oh_scat = (row_l_ref[...] == scatter_iota).astype(jnp.float32)  # [N, TE]
    agg_ref[...] += jnp.dot(oh_scat, edge_feat,
                            preferred_element_type=jnp.float32,
                            precision=precision)


def e_gcl_forward(x, coord, edge_index, params, edge_attr=None, node_attr=None,
                  *, edge_tile=1024, num_cores=2,
                  precision=jax.lax.Precision.HIGHEST):
    """E_GCL.forward with default flags (returns node features only)."""
    assert edge_attr is None and node_attr is None, "edge_attr/node_attr unsupported"
    # TODO(synk): equivariant / attention / recurrent branches not implemented.

    N, _F = x.shape
    E = edge_index.shape[1]
    H = params["ew2"].shape[0]

    H_pad = _round_up(H, LANE)
    N_pad = _round_up(N, LANE)
    assert N_pad < (1 << 24), "node ids must stay exact in float32"

    # Edge tile: large enough to amortize per-grid-step overhead, capped so the
    # three [TE, N_pad] f32 one-hot transients stay within a VMEM budget.
    onehot_budget = 12 * 1024 * 1024
    te_cap = max(LANE, (onehot_budget // (3 * N_pad * 4)) // LANE * LANE)
    TE = max(LANE, min(edge_tile, te_cap, _round_up(E, LANE)))
    E_pad = _round_up(E, num_cores * TE)
    n_tiles_pc = E_pad // (num_cores * TE)

    row = edge_index[0].astype(jnp.int32)
    col = edge_index[1].astype(jnp.int32)

    # radial via a cheap XLA gather (4 bytes/edge into the kernel). norm_diff
    # only rescales coord_diff, which is unused when equivariant=False.
    coord_diff = coord[row] - coord[col]
    radial = jnp.sum(coord_diff * coord_diff, axis=1)           # [E]

    # Fold edge-MLP layer 1 into the gather: (x @ W)[row] == x[row] @ W.
    xw_src = jnp.dot(x, params["ew_src"], precision=precision)  # [N, H]
    xw_dst = jnp.dot(x, params["ew_dst"], precision=precision)  # [N, H]

    sentinel = float(N_pad)  # padded edges -> node id that matches no iota value
    packed = jnp.full((E_pad, 3), sentinel, jnp.float32)
    packed = packed.at[:, 2].set(0.0)
    packed = packed.at[:E, 0].set(row.astype(jnp.float32))
    packed = packed.at[:E, 1].set(col.astype(jnp.float32))
    packed = packed.at[:E, 2].set(radial)

    row_l = jnp.full((1, E_pad), N_pad, jnp.int32).at[0, :E].set(row)

    xw_src_p = _pad2(xw_src, N_pad, H_pad)
    xw_dst_p = _pad2(xw_dst, N_pad, H_pad)
    erad_p = _pad2(params["ew_rad"], 1, H_pad)
    eb1_p = _pad2(params["eb1"], 1, H_pad)
    ew2_p = _pad2(params["ew2"], H_pad, H_pad)
    eb2_p = _pad2(params["eb2"], 1, H_pad)

    res = functools.partial(_spec, single_buffer=True)
    in_specs = [
        pl.BlockSpec((TE, 3), lambda c, e: (c * n_tiles_pc + e, 0)),   # row|col|radial
        pl.BlockSpec((1, TE), lambda c, e: (0, c * n_tiles_pc + e)),   # row (lane axis)
        res((N_pad, H_pad), lambda c, e: (0, 0)),   # x @ W_src
        res((N_pad, H_pad), lambda c, e: (0, 0)),   # x @ W_dst
        res((1, H_pad), lambda c, e: (0, 0)),       # W_radial row
        res((1, H_pad), lambda c, e: (0, 0)),       # edge bias 1
        res((H_pad, H_pad), lambda c, e: (0, 0)),   # edge-MLP layer 2
        res((1, H_pad), lambda c, e: (0, 0)),       # edge bias 2
    ]
    out_specs = res((N_pad, H_pad), lambda c, e: (c, 0))   # per-core agg accumulator

    # VMEM accounting (vmem_limit_bytes is a cap, not a reservation).
    rf = 1 if _HAS_PIPELINE_MODE else 2
    resident_bytes = rf * (2 * N_pad * H_pad + H_pad * H_pad + 3 * 8 * H_pad) * 4
    out_bytes = rf * N_pad * H_pad * 4
    stream_bytes = 2 * (TE * LANE + 8 * TE) * 4     # double-buffered edge streams
    transient_bytes = (3 * TE * N_pad + 2 * TE * H_pad
                       + N_pad * H_pad + TE * LANE) * 4
    vmem_need = resident_bytes + out_bytes + stream_bytes + transient_bytes
    vmem_limit = int(min(max(int(vmem_need * 1.5), 8 * 1024 * 1024),
                         100 * 1024 * 1024))

    flops = E_pad * (6 * N_pad * H_pad + 2 * H_pad * H_pad)
    args = (packed, row_l, xw_src_p, xw_dst_p, erad_p, eb1_p, ew2_p, eb2_p)
    bytes_accessed = (sum(int(a.size) * a.dtype.itemsize for a in args)
                      + num_cores * N_pad * H_pad * 4)

    agg_parts = pl.pallas_call(
        functools.partial(egcl_edge_kernel, precision=precision),
        out_shape=jax.ShapeDtypeStruct((num_cores * N_pad, H_pad), jnp.float32),
        grid_spec=pltpu.PrefetchScalarGridSpec(
            num_scalar_prefetch=0,
            grid=(num_cores, n_tiles_pc),
            in_specs=in_specs,
            out_specs=out_specs,
        ),
        compiler_params=pltpu.CompilerParams(
            # c splits edge tiles across TensorCores (v7x megacore); e carries
            # the agg accumulation so it must stay "arbitrary".
            dimension_semantics=("parallel", "arbitrary"),
            vmem_limit_bytes=vmem_limit,
        ),
        cost_estimate=pl.CostEstimate(flops=int(flops), transcendentals=0,
                                      bytes_accessed=int(bytes_accessed)),
    )(*args)
    # TODO(synk): for large sparse graphs, add a block-sparse (edge-tile x
    # node-tile) skip via scalar prefetch (or pre-sort edges by destination) so
    # the agg read-modify-write does not touch the full N_pad slab every tile.

    agg = agg_parts.reshape(num_cores, N_pad, H_pad).sum(axis=0)[:N, :H]

    # Node MLP: tiny dense epilogue in plain XLA on unpadded shapes (exact f32).
    h2 = jnp.maximum(
        jnp.dot(x, params["nw_x"], precision=precision)
        + jnp.dot(agg, params["nw_agg"], precision=precision)
        + params["nb1"][0],
        0.0)
    return jnp.dot(h2, params["nw2"], precision=precision) + params["nb2"][0]


def make_params(key, input_channels, output_channels, hidden_channels):
    """Deterministic synthetic weights matching the E_GCL __init__ shapes."""
    F, H, O = input_channels, hidden_channels, output_channels
    ks = jax.random.split(key, 8)
    scale = 0.1
    # edge_mlp: Linear(2F+1, H), ReLU, Linear(H, H), ReLU
    W1 = scale * jax.random.normal(ks[0], (2 * F + 1, H), jnp.float32)
    b1 = scale * jax.random.normal(ks[1], (1, H), jnp.float32)
    W2 = scale * jax.random.normal(ks[2], (H, H), jnp.float32)
    b2 = scale * jax.random.normal(ks[3], (1, H), jnp.float32)
    # node_mlp: Linear(H + F, H), ReLU, Linear(H, O)
    W3 = scale * jax.random.normal(ks[4], (F + H, H), jnp.float32)
    b3 = scale * jax.random.normal(ks[5], (1, H), jnp.float32)
    W4 = scale * jax.random.normal(ks[6], (H, O), jnp.float32)
    b4 = scale * jax.random.normal(ks[7], (1, O), jnp.float32)
    return {
        "ew_src": W1[:F], "ew_dst": W1[F:2 * F], "ew_rad": W1[2 * F:2 * F + 1],
        "eb1": b1, "ew2": W2, "eb2": b2,
        "nw_x": W3[:F], "nw_agg": W3[F:], "nb1": b3,
        "nw2": W4, "nb2": b4,
    }


def e_gcl_reference(x, coord, edge_index, params):
    """Pure-JAX replica of the PyTorch E_GCL.forward (default flags), f32."""
    prec = jax.lax.Precision.HIGHEST
    row, col = edge_index[0], edge_index[1]
    coord_diff = coord[row] - coord[col]
    radial = jnp.sum(coord_diff ** 2, axis=1, keepdims=True)
    W1 = jnp.concatenate([params["ew_src"], params["ew_dst"], params["ew_rad"]], axis=0)
    edge_in = jnp.concatenate([x[row], x[col], radial], axis=1)
    h = jnp.maximum(jnp.dot(edge_in, W1, precision=prec) + params["eb1"][0], 0.0)
    edge_feat = jnp.maximum(jnp.dot(h, params["ew2"], precision=prec)
                            + params["eb2"][0], 0.0)
    agg = jnp.zeros((x.shape[0], edge_feat.shape[1]),
                    jnp.float32).at[row].add(edge_feat)
    W3 = jnp.concatenate([params["nw_x"], params["nw_agg"]], axis=0)
    node_in = jnp.concatenate([x, agg], axis=1)
    h2 = jnp.maximum(jnp.dot(node_in, W3, precision=prec) + params["nb1"][0], 0.0)
    return jnp.dot(h2, params["nw2"], precision=prec) + params["nb2"][0]


if __name__ == "__main__":
    key = jax.random.PRNGKey(0)
    k_x, k_c, k_r, k_col, k_p = jax.random.split(key, 5)

    N, E = 8, 16                       # nodes, edges
    F_IN, HIDDEN, F_OUT = 8, 32, 8     # feature dims

    x = jax.random.normal(k_x, (N, F_IN), jnp.float32)
    coord = jax.random.normal(k_c, (N, 3), jnp.float32)
    row = jax.random.randint(k_r, (E,), 0, N, jnp.int32)
    col = jax.random.randint(k_col, (E,), 0, N, jnp.int32)
    edge_index = jnp.stack([row, col], axis=0)     # [2, E]

    params = make_params(k_p, F_IN, F_OUT, HIDDEN)

    out = e_gcl_forward(x, coord, edge_index, params)
    out = jax.block_until_ready(out)

    ref = e_gcl_reference(x, coord, edge_index, params)
    assert out.shape == (N, F_OUT)
    assert jnp.allclose(out, ref, atol=1e-4, rtol=1e-4), "mismatch vs reference"
    print("KERNEL_OK")
</pallas_src>

<mosaic_0001>
module attributes {stable_mosaic.version = 11 : i64} {
  func.func @egcl_edge_kernel(%arg0: i32, %arg1: i32, %arg2: memref<128x3xf32, #tpu.memory_space<vmem>>, %arg3: memref<1x128xi32, #tpu.memory_space<vmem>>, %arg4: memref<128x128xf32, #tpu.memory_space<vmem>>, %arg5: memref<128x128xf32, #tpu.memory_space<vmem>>, %arg6: memref<1x128xf32, #tpu.memory_space<vmem>>, %arg7: memref<1x128xf32, #tpu.memory_space<vmem>>, %arg8: memref<128x128xf32, #tpu.memory_space<vmem>>, %arg9: memref<1x128xf32, #tpu.memory_space<vmem>>, %arg10: memref<128x128xf32, #tpu.memory_space<vmem>>) attributes {dimension_semantics = [#tpu.dimension_semantics<parallel>, #tpu.dimension_semantics<arbitrary>], iteration_bounds = array<i64: 2, 1>, scalar_prefetch = 0 : i64, scratch_operands = 0 : i64, tpu.core_type = #tpu.core_type<tc>, window_params = [{transform_indices = @transform_0, window_bounds = array<i64: 128, 3>}, {transform_indices = @transform_1, window_bounds = array<i64: 1, 128>}, {pipeline_mode = #tpu.pipeline_mode<synchronous>, transform_indices = @transform_2, window_bounds = array<i64: 128, 128>}, {pipeline_mode = #tpu.pipeline_mode<synchronous>, transform_indices = @transform_3, window_bounds = array<i64: 128, 128>}, {pipeline_mode = #tpu.pipeline_mode<synchronous>, transform_indices = @transform_4, window_bounds = array<i64: 1, 128>}, {pipeline_mode = #tpu.pipeline_mode<synchronous>, transform_indices = @transform_5, window_bounds = array<i64: 1, 128>}, {pipeline_mode = #tpu.pipeline_mode<synchronous>, transform_indices = @transform_6, window_bounds = array<i64: 128, 128>}, {pipeline_mode = #tpu.pipeline_mode<synchronous>, transform_indices = @transform_7, window_bounds = array<i64: 1, 128>}, {pipeline_mode = #tpu.pipeline_mode<synchronous>, transform_indices = @transform_8, window_bounds = array<i64: 128, 128>}]} {
    %c0_i32 = arith.constant 0 : i32
    %0 = arith.cmpi eq, %arg1, %c0_i32 : i32
    %1 = arith.extui %0 : i1 to i32
    %c0_i32_0 = arith.constant 0 : i32
    %2 = arith.cmpi ne, %1, %c0_i32_0 : i32
    scf.if %2 {
      %cst_25 = arith.constant 0.000000e+00 : f32
      %50 = vector.broadcast %cst_25 : f32 to vector<128x128xf32>
      %c0_26 = arith.constant 0 : index
      %c0_27 = arith.constant 0 : index
      %51 = vector.load %arg10[%c0_26, %c0_27] : memref<128x128xf32, #tpu.memory_space<vmem>>, vector<128x128xf32>
      tpu.vector_store %arg10[%c0_26, %c0_27], %50 {strides = array<i32>} : memref<128x128xf32, #tpu.memory_space<vmem>>, vector<128x128xf32>,
    } else {
    }
    %c0 = arith.constant 0 : index
    %c0_1 = arith.constant 0 : index
    %3 = vector.load %arg2[%c0, %c0_1] : memref<128x3xf32, #tpu.memory_space<vmem>>, vector<128x3xf32>
    %4 = vector.extract_strided_slice %3 {offsets = [0, 0], sizes = [128, 1], strides = [1, 1]} : vector<128x3xf32> to vector<128x1xf32>
    %5 = arith.fptosi %4 : vector<128x1xf32> to vector<128x1xi32>
    %6 = vector.extract_strided_slice %3 {offsets = [0, 1], sizes = [128, 1], strides = [1, 1]} : vector<128x3xf32> to vector<128x1xf32>
    %7 = arith.fptosi %6 : vector<128x1xf32> to vector<128x1xi32>
    %8 = vector.extract_strided_slice %3 {offsets = [0, 2], sizes = [128, 1], strides = [1, 1]} : vector<128x3xf32> to vector<128x1xf32>
    %9 = tpu.iota {dimensions = array<i32: 1>} : vector<128x128xi32>
    %10 = vector.broadcast %5 : vector<128x1xi32> to vector<128x128xi32>
    %11 = arith.cmpi eq, %10, %9 : vector<128x128xi32>
    %12 = arith.extui %11 : vector<128x128xi1> to vector<128x128xi32>
    %13 = arith.sitofp %12 : vector<128x128xi32> to vector<128x128xf32>
    %14 = vector.broadcast %7 : vector<128x1xi32> to vector<128x128xi32>
    %15 = arith.cmpi eq, %14, %9 : vector<128x128xi32>
    %16 = arith.extui %15 : vector<128x128xi1> to vector<128x128xi32>
    %17 = arith.sitofp %16 : vector<128x128xi32> to vector<128x128xf32>
    %c0_2 = arith.constant 0 : index
    %c0_3 = arith.constant 0 : index
    %18 = vector.load %arg4[%c0_2, %c0_3] : memref<128x128xf32, #tpu.memory_space<vmem>>, vector<128x128xf32>
    %cst = arith.constant dense<0.000000e+00> : vector<128x128xf32>
    %19 = tpu.matmul %13, %18, %cst {dimension_numbers = #tpu.dot_dimension_numbers<[1], [0], [0], [1], [0, 0, 1, 1], [], []>, precision = #tpu.contract_precision<fp32>} : vector<128x128xf32>, vector<128x128xf32>, vector<128x128xf32> -> vector<128x128xf32>
    %c0_4 = arith.constant 0 : index
    %c0_5 = arith.constant 0 : index
    %20 = vector.load %arg5[%c0_4, %c0_5] : memref<128x128xf32, #tpu.memory_space<vmem>>, vector<128x128xf32>
    %cst_6 = arith.constant dense<0.000000e+00> : vector<128x128xf32>
    %21 = tpu.matmul %17, %20, %cst_6 {dimension_numbers = #tpu.dot_dimension_numbers<[1], [0], [0], [1], [0, 0, 1, 1], [], []>, precision = #tpu.contract_precision<fp32>} : vector<128x128xf32>, vector<128x128xf32>, vector<128x128xf32> -> vector<128x128xf32>
    %22 = arith.addf %19, %21 : vector<128x128xf32>
    %c0_7 = arith.constant 0 : index
    %c0_8 = arith.constant 0 : index
    %23 = vector.load %arg6[%c0_7, %c0_8] : memref<1x128xf32, #tpu.memory_space<vmem>>, vector<1x128xf32>
    %24 = vector.broadcast %8 : vector<128x1xf32> to vector<128x128xf32>
    %25 = vector.broadcast %23 : vector<1x128xf32> to vector<128x128xf32>
    %26 = arith.mulf %24, %25 : vector<128x128xf32>
    %27 = arith.addf %22, %26 : vector<128x128xf32>
    %c0_9 = arith.constant 0 : index
    %c0_10 = arith.constant 0 : index
    %28 = vector.load %arg7[%c0_9, %c0_10] : memref<1x128xf32, #tpu.memory_space<vmem>>, vector<1x128xf32>
    %29 = vector.broadcast %28 : vector<1x128xf32> to vector<128x128xf32>
    %30 = arith.addf %27, %29 : vector<128x128xf32>
    %cst_11 = arith.constant 0.000000e+00 : f32
    %31 = vector.broadcast %cst_11 : f32 to vector<128x128xf32>
    %32 = arith.maximumf %30, %31 : vector<128x128xf32>
    %c0_12 = arith.constant 0 : index
    %c0_13 = arith.constant 0 : index
    %33 = vector.load %arg8[%c0_12, %c0_13] : memref<128x128xf32, #tpu.memory_space<vmem>>, vector<128x128xf32>
    %cst_14 = arith.constant dense<0.000000e+00> : vector<128x128xf32>
    %34 = tpu.matmul %32, %33, %cst_14 {dimension_numbers = #tpu.dot_dimension_numbers<[1], [0], [0], [1], [0, 0, 1, 1], [], []>, precision = #tpu.contract_precision<fp32>} : vector<128x128xf32>, vector<128x128xf32>, vector<128x128xf32> -> vector<128x128xf32>
    %c0_15 = arith.constant 0 : index
    %c0_16 = arith.constant 0 : index
    %35 = vector.load %arg9[%c0_15, %c0_16] : memref<1x128xf32, #tpu.memory_space<vmem>>, vector<1x128xf32>
    %36 = vector.broadcast %35 : vector<1x128xf32> to vector<128x128xf32>
    %37 = arith.addf %34, %36 : vector<128x128xf32>
    %cst_17 = arith.constant 0.000000e+00 : f32
    %38 = vector.broadcast %cst_17 : f32 to vector<128x128xf32>
    %39 = arith.maximumf %37, %38 : vector<128x128xf32>
    %40 = tpu.iota {dimensions = array<i32: 0>} : vector<128x128xi32>
    %c0_18 = arith.constant 0 : index
    %c0_19 = arith.constant 0 : index
    %41 = vector.load %arg3[%c0_18, %c0_19] : memref<1x128xi32, #tpu.memory_space<vmem>>, vector<1x128xi32>
    %42 = vector.broadcast %41 : vector<1x128xi32> to vector<128x128xi32>
    %43 = arith.cmpi eq, %42, %40 : vector<128x128xi32>
    %44 = arith.extui %43 : vector<128x128xi1> to vector<128x128xi32>
    %45 = arith.sitofp %44 : vector<128x128xi32> to vector<128x128xf32>
    %c0_20 = arith.constant 0 : index
    %c0_21 = arith.constant 0 : index
    %46 = vector.load %arg10[%c0_20, %c0_21] : memref<128x128xf32, #tpu.memory_space<vmem>>, vector<128x128xf32>
    %cst_22 = arith.constant dense<0.000000e+00> : vector<128x128xf32>
    %47 = tpu.matmul %45, %39, %cst_22 {dimension_numbers = #tpu.dot_dimension_numbers<[1], [0], [0], [1], [0, 0, 1, 1], [], []>, precision = #tpu.contract_precision<fp32>} : vector<128x128xf32>, vector<128x128xf32>, vector<128x128xf32> -> vector<128x128xf32>
    %48 = arith.addf %46, %47 : vector<128x128xf32>
    %c0_23 = arith.constant 0 : index
    %c0_24 = arith.constant 0 : index
    %49 = vector.load %arg10[%c0_23, %c0_24] : memref<128x128xf32, #tpu.memory_space<vmem>>, vector<128x128xf32>
    tpu.vector_store %arg10[%c0_23, %c0_24], %48 {strides = array<i32>} : memref<128x128xf32, #tpu.memory_space<vmem>>, vector<128x128xf32>,
    return
  }
  func.func @transform_0(%arg0: i32, %arg1: i32) -> (i32, i32) {
    %c1_i32 = arith.constant 1 : i32
    %0 = arith.muli %arg0, %c1_i32 : i32
    %1 = arith.addi %0, %arg1 : i32
    %c0_i32 = arith.constant 0 : i32
    %c0_i32_0 = arith.constant 0 : i32
    return %1, %c0_i32 : i32, i32
  }
  func.func @transform_1(%arg0: i32, %arg1: i32) -> (i32, i32) {
    %c1_i32 = arith.constant 1 : i32
    %0 = arith.muli %arg0, %c1_i32 : i32
    %1 = arith.addi %0, %arg1 : i32
    %c0_i32 = arith.constant 0 : i32
    %c0_i32_0 = arith.constant 0 : i32
    return %c0_i32, %1 : i32, i32
  }
  func.func @transform_2(%arg0: i32, %arg1: i32) -> (i32, i32) {
    %c0_i32 = arith.constant 0 : i32
    %c0_i32_0 = arith.constant 0 : i32
    %c0_i32_1 = arith.constant 0 : i32
    return %c0_i32, %c0_i32_0 : i32, i32
  }
  func.func @transform_3(%arg0: i32, %arg1: i32) -> (i32, i32) {
    %c0_i32 = arith.constant 0 : i32
    %c0_i32_0 = arith.constant 0 : i32
    %c0_i32_1 = arith.constant 0 : i32
    return %c0_i32, %c0_i32_0 : i32, i32
  }
  func.func @transform_4(%arg0: i32, %arg1: i32) -> (i32, i32) {
    %c0_i32 = arith.constant 0 : i32
    %c0_i32_0 = arith.constant 0 : i32
    %c0_i32_1 = arith.constant 0 : i32
    return %c0_i32, %c0_i32_0 : i32, i32
  }
  func.func @transform_5(%arg0: i32, %arg1: i32) -> (i32, i32) {
    %c0_i32 = arith.constant 0 : i32
    %c0_i32_0 = arith.constant 0 : i32
    %c0_i32_1 = arith.constant 0 : i32
    return %c0_i32, %c0_i32_0 : i32, i32
  }
  func.func @transform_6(%arg0: i32, %arg1: i32) -> (i32, i32) {
    %c0_i32 = arith.constant 0 : i32
    %c0_i32_0 = arith.constant 0 : i32
    %c0_i32_1 = arith.constant 0 : i32
    return %c0_i32, %c0_i32_0 : i32, i32
  }
  func.func @transform_7(%arg0: i32, %arg1: i32) -> (i32, i32) {
    %c0_i32 = arith.constant 0 : i32
    %c0_i32_0 = arith.constant 0 : i32
    %c0_i32_1 = arith.constant 0 : i32
    return %c0_i32, %c0_i32_0 : i32, i32
  }
  func.func @transform_8(%arg0: i32, %arg1: i32) -> (i32, i32) {
    %c0_i32 = arith.constant 0 : i32
    %c0_i32_0 = arith.constant 0 : i32
    return %arg0, %c0_i32 : i32, i32
  }
}

</mosaic_0001>

<llo_original>
// kernel: tpu_custom_call.1
$region0: #{tpu_custom_call.1}
  #allocation0 [shape = 'u32[]', space=smem, size = 0x4, offset = 0x4, fixed_abs, tag = 'smem constant byte address 0x4 - core index']
  #allocation1 [shape = 'u32[144,128]{1,0:T(1,128)}', space=vmem, size = 0x12000, scoped, tag = 'internal scratch']
  %s0 = inlined_call_operand.vmem [shape: f32[256,3], index: 0, kind: input, shape index: {}]
  %s1 = inlined_call_operand.vmem [shape: s32[1,256], index: 1, kind: input, shape index: {}]
  %s2 = inlined_call_operand.vmem [shape: f32[128,128], index: 2, kind: input, shape index: {}]
  %s3 = inlined_call_operand.vmem [shape: f32[128,128], index: 3, kind: input, shape index: {}]
  %s4 = inlined_call_operand.vmem [shape: f32[1,128], index: 4, kind: input, shape index: {}]
  %s5 = inlined_call_operand.vmem [shape: f32[1,128], index: 5, kind: input, shape index: {}]
  %s6 = inlined_call_operand.hbm [shape: f32[128,128], index: 6, kind: input, shape index: {}]
  %s7 = inlined_call_operand.vmem [shape: f32[1,128], index: 7, kind: input, shape index: {}]
  %s8 = inlined_call_operand.hbm [shape: f32[256,128], index: 8, kind: output, shape index: {}]
  %s9 = sld [smem:[#allocation0]]
  $region73: #{tpu_custom_call.1} parent=0
    _
  %s11 = ssub.s32 1, %s9
  %s12 = scalar_select 0, %s11, %s9
  $region1: #{tpu_custom_call.1} parent=0
    #allocation2 [shape = 'u8[65536]{0}', space=vmem, size = 0x10000, scoped, tag = 'input window, operand 6, single buffered']
    #allocation3 [shape = 's32[2]{0}', space=sflag, size = 0x8, scoped, tag = 'scoped memory for tpu_custom_call.1']
    #allocation4 [shape = 's32[2]{0}', space=sflag, size = 0x8, scoped, tag = 'scoped memory for tpu_custom_call.1']
    #allocation5 [shape = 'u8[65536]{0}', space=vmem, size = 0x10000, scoped, tag = 'output window, operand 0, single buffered']
    %13 = vsyncpa [#allocation3], 0
    %14 = vsyncpa [#allocation4], 0
    loop: start=0, step=1, limit=4
    $region2: #{tpu_custom_call.1} parent=1 // loop_pre_header
      _
    $region3: #{tpu_custom_call.1} parent=1 // loop_header
      %s16 = sphi 0, %s20
      %p17 = scmp.ge.s32.totalorder %s16, 4
      %s23 = sphi 0, %s35
      %s24 = sphi 0, %s31
      %s25 = sphi 0, %s23
      %s26 = sphi 0, %s24
      %s27 = sphi 0, %s25
      %s28 = sphi 0, %s26
      %s40 = sphi 0, %s42
      %s43 = sphi 0, %s40
      %s44 = sphi 0, %s43
      %s60 = sphi 0, %s44
      %s68 = sphi 0, %s70
      %s71 = sphi 0, %s68
      %s72 = sphi 0, %s71
      %s88 = sphi 0, %s72
      %s92 = sphi 0, %s92
      %s94 = sphi 0, %s92
      %s95 = sphi 0, %s94
      %s109 = sphi 0, %s95
      %s113 = sphi 0, %s113
      %s115 = sphi 0, %s113
      %s116 = sphi 0, %s115
      %s130 = sphi 0, %s116
      %s134 = sphi 0, %s134
      %s136 = sphi 0, %s134
      %s137 = sphi 0, %s136
      %s151 = sphi 0, %s137
      %s155 = sphi 0, %s155
      %s157 = sphi 0, %s155
      %s158 = sphi 0, %s157
      %s172 = sphi 0, %s158
      %s176 = sphi 0, %s176
      %s178 = sphi 0, %s176
      %s179 = sphi 0, %s178
      %s193 = sphi 0, %s179
      %s197 = sphi 0, %s197
      %s199 = sphi 0, %s197
      %s200 = sphi 0, %s199
      %s214 = sphi 0, %s200
      %s220 = sphi 0, %s222
      %s223 = sphi 0, %s220
      %s224 = sphi 0, %s223
      %s240 = sphi 0, %s224
    $region4: #{tpu_custom_call.1} parent=1 // loop_header_branch
      %19 = sbr.rel (%p17) target = $region8
    $region5: #{tpu_custom_call.1} parent=1 // loop_body
      %s21 = ssub.s32 %s16, 1
      %s22 = ssub.s32 %s16, 2
      %s29 = sadd.s32 1, %s24
      %p30 = scmp.ge.s32.totalorder %s29, 1
      %s31 = scalar_select %p30, 0, %s29
      %s32 = sadd.s32 1, %s23
      %s33 = scalar_select %p30, %s32, %s23
      %p34 = scmp.ge.s32.totalorder %s33, 2
      %s35 = scalar_select %p34, 0, %s33
      %s36 = sadd.s32 %s23, %s24
      %s37 = sadd.s32 %s35, %s31
      %s38 = ssub.s32 %s36, %s37
      %p39 = scmp.eq.s32.totalorder %s38, 0
      %s41 = sadd.s32 %s40, 1
      %s42 = scalar_select %p39, %s40, %s41
      %p45 = pneg %p39
      %p46 = scmp.eq.s32.totalorder %s16, 1
      %p47 = por %p45, %p46
      %p48 = scmp.ne.s32.totalorder %s40, %s43
      %p49 = scmp.eq.s32.totalorder %s16, 0
      %p50 = por %p48, %p49
      %p51 = scmp.ne.s32.totalorder %s40, %s43
      %p52 = scmp.eq.s32.totalorder %s21, 1
      %p53 = por %p51, %p52
      %p54 = scmp.ne.s32.totalorder %s43, %s44
      %p55 = scmp.eq.s32.totalorder %s21, 0
      %p56 = por %p54, %p55
      %p57 = scmp.ne.s32.totalorder %s43, %s44
      %p58 = scmp.eq.s32.totalorder %s22, 1
      %p59 = por %p57, %p58
      %p61 = scmp.ne.s32.totalorder %s44, %s60
      %p62 = scmp.eq.s32.totalorder %s22, 0
      %p63 = por %p61, %p62
      %s64 = sadd.s32 %s23, %s24
      %s65 = sadd.s32 %s35, %s31
      %s66 = ssub.s32 %s64, %s65
      %p67 = scmp.eq.s32.totalorder %s66, 0
      %s69 = sadd.s32 %s68, 1
      %s70 = scalar_select %p67, %s68, %s69
      %p73 = pneg %p67
      %p74 = scmp.eq.s32.totalorder %s16, 1
      %p75 = por %p73, %p74
      %p76 = scmp.ne.s32.totalorder %s68, %s71
      %p77 = scmp.eq.s32.totalorder %s16, 0
      %p78 = por %p76, %p77
      %p79 = scmp.ne.s32.totalorder %s68, %s71
      %p80 = scmp.eq.s32.totalorder %s21, 1
      %p81 = por %p79, %p80
      %p82 = scmp.ne.s32.totalorder %s71, %s72
      %p83 = scmp.eq.s32.totalorder %s21, 0
      %p84 = por %p82, %p83
      %p85 = scmp.ne.s32.totalorder %s71, %s72
      %p86 = scmp.eq.s32.totalorder %s22, 1
      %p87 = por %p85, %p86
      %p89 = scmp.ne.s32.totalorder %s72, %s88
      %p90 = scmp.eq.s32.totalorder %s22, 0
      %p91 = por %p89, %p90
      %s93 = sadd.s32 %s92, 1
      %p96 = scmp.eq.s32.totalorder %s16, 1
      %p97 = scmp.ne.s32.totalorder %s92, %s94
      %p98 = scmp.eq.s32.totalorder %s16, 0
      %p99 = por %p97, %p98
      %p100 = scmp.ne.s32.totalorder %s92, %s94
      %p101 = scmp.eq.s32.totalorder %s21, 1
      %p102 = por %p100, %p101
      %p103 = scmp.ne.s32.totalorder %s94, %s95
      %p104 = scmp.eq.s32.totalorder %s21, 0
      %p105 = por %p103, %p104
      %p106 = scmp.ne.s32.totalorder %s94, %s95
      %p107 = scmp.eq.s32.totalorder %s22, 1
      %p108 = por %p106, %p107
      %p110 = scmp.ne.s32.totalorder %s95, %s109
      %p111 = scmp.eq.s32.totalorder %s22, 0
      %p112 = por %p110, %p111
      %s114 = sadd.s32 %s113, 1
      %p117 = scmp.eq.s32.totalorder %s16, 1
      %p118 = scmp.ne.s32.totalorder %s113, %s115
      %p119 = scmp.eq.s32.totalorder %s16, 0
      %p120 = por %p118, %p119
      %p121 = scmp.ne.s32.totalorder %s113, %s115
      %p122 = scmp.eq.s32.totalorder %s21, 1
      %p123 = por %p121, %p122
      %p124 = scmp.ne.s32.totalorder %s115, %s116
      %p125 = scmp.eq.s32.totalorder %s21, 0
      %p126 = por %p124, %p125
      %p127 = scmp.ne.s32.totalorder %s115, %s116
      %p128 = scmp.eq.s32.totalorder %s22, 1
      %p129 = por %p127, %p128
      %p131 = scmp.ne.s32.totalorder %s116, %s130
      %p132 = scmp.eq.s32.totalorder %s22, 0
      %p133 = por %p131, %p132
      %s135 = sadd.s32 %s134, 1
      %p138 = scmp.eq.s32.totalorder %s16, 1
      %p139 = scmp.ne.s32.totalorder %s134, %s136
      %p140 = scmp.eq.s32.totalorder %s16, 0
      %p141 = por %p139, %p140
      %p142 = scmp.ne.s32.totalorder %s134, %s136
      %p143 = scmp.eq.s32.totalorder %s21, 1
      %p144 = por %p142, %p143
      %p145 = scmp.ne.s32.totalorder %s136, %s137
      %p146 = scmp.eq.s32.totalorder %s21, 0
      %p147 = por %p145, %p146
      %p148 = scmp.ne.s32.totalorder %s136, %s137
      %p149 = scmp.eq.s32.totalorder %s22, 1
      %p150 = por %p148, %p149
      %p152 = scmp.ne.s32.totalorder %s137, %s151
      %p153 = scmp.eq.s32.totalorder %s22, 0
      %p154 = por %p152, %p153
      %s156 = sadd.s32 %s155, 1
      %p159 = scmp.eq.s32.totalorder %s16, 1
      %p160 = scmp.ne.s32.totalorder %s155, %s157
      %p161 = scmp.eq.s32.totalorder %s16, 0
      %p162 = por %p160, %p161
      %p163 = scmp.ne.s32.totalorder %s155, %s157
      %p164 = scmp.eq.s32.totalorder %s21, 1
      %p165 = por %p163, %p164
      %p166 = scmp.ne.s32.totalorder %s157, %s158
      %p167 = scmp.eq.s32.totalorder %s21, 0
      %p168 = por %p166, %p167
      %p169 = scmp.ne.s32.totalorder %s157, %s158
      %p170 = scmp.eq.s32.totalorder %s22, 1
      %p171 = por %p169, %p170
      %p173 = scmp.ne.s32.totalorder %s158, %s172
      %p174 = scmp.eq.s32.totalorder %s22, 0
      %p175 = por %p173, %p174
      %s177 = sadd.s32 %s176, 1
      %p180 = scmp.eq.s32.totalorder %s16, 1
      %p181 = scmp.ne.s32.totalorder %s176, %s178
      %p182 = scmp.eq.s32.totalorder %s16, 0
      %p183 = por %p181, %p182
      %p184 = scmp.ne.s32.totalorder %s176, %s178
      %p185 = scmp.eq.s32.totalorder %s21, 1
      %p186 = por %p184, %p185
      %p187 = scmp.ne.s32.totalorder %s178, %s179
      %p188 = scmp.eq.s32.totalorder %s21, 0
      %p189 = por %p187, %p188
      %p190 = scmp.ne.s32.totalorder %s178, %s179
      %p191 = scmp.eq.s32.totalorder %s22, 1
      %p192 = por %p190, %p191
      %p194 = scmp.ne.s32.totalorder %s179, %s193
      %p195 = scmp.eq.s32.totalorder %s22, 0
      %p196 = por %p194, %p195
      %s198 = sadd.s32 %s197, 1
      %p201 = scmp.eq.s32.totalorder %s16, 1
      %p202 = scmp.ne.s32.totalorder %s197, %s199
      %p203 = scmp.eq.s32.totalorder %s16, 0
      %p204 = por %p202, %p203
      %p205 = scmp.ne.s32.totalorder %s197, %s199
      %p206 = scmp.eq.s32.totalorder %s21, 1
      %p207 = por %p205, %p206
      %p208 = scmp.ne.s32.totalorder %s199, %s200
      %p209 = scmp.eq.s32.totalorder %s21, 0
      %p210 = por %p208, %p209
      %p211 = scmp.ne.s32.totalorder %s199, %s200
      %p212 = scmp.eq.s32.totalorder %s22, 1
      %p213 = por %p211, %p212
      %p215 = scmp.ne.s32.totalorder %s200, %s214
      %p216 = scmp.eq.s32.totalorder %s22, 0
      %p217 = por %p215, %p216
      %s218 = ssub.s32 %s23, %s35
      %p219 = scmp.eq.s32.totalorder %s218, 0
      %s221 = sadd.s32 %s220, 1
      %s222 = scalar_select %p219, %s220, %s221
      %p225 = pneg %p219
      %p226 = scmp.eq.s32.totalorder %s16, 1
      %p227 = por %p225, %p226
      %p228 = scmp.ne.s32.totalorder %s220, %s223
      %p229 = scmp.eq.s32.totalorder %s16, 0
      %p230 = por %p228, %p229
      %p231 = scmp.ne.s32.totalorder %s220, %s223
      %p232 = scmp.eq.s32.totalorder %s21, 1
      %p233 = por %p231, %p232
      %p234 = scmp.ne.s32.totalorder %s223, %s224
      %p235 = scmp.eq.s32.totalorder %s21, 0
      %p236 = por %p234, %p235
      %p237 = scmp.ne.s32.totalorder %s223, %s224
      %p238 = scmp.eq.s32.totalorder %s22, 1
      %p239 = por %p237, %p238
      %p241 = scmp.ne.s32.totalorder %s224, %s240
      %p242 = scmp.eq.s32.totalorder %s22, 0
      %p243 = por %p241, %p242
      %p244 = scmp.le.s32.totalorder 1, %s16
      %p245 = scmp.lt.s32.totalorder %s16, 3
      %p246 = pnand %p244, %p245
      %p247 = pneg %p246
      // Predicated region
      $region9: #{tpu_custom_call.1} parent=5 // pred_check
        _
      $region10: #{tpu_custom_call.1} parent=5 // pred_check_branch
        %249 = sbr.rel (%p246) target = $region12
      $region11: #{tpu_custom_call.1} parent=5 // pred_region
        %s250 = ssub.s32 %s16, 1
        // Predicated region
        $region13: #{tpu_custom_call.1} parent=11 // pred_check
          %p251 = pneg %p105
        $region14: #{tpu_custom_call.1} parent=11 // pred_check_branch
          %253 = sbr.rel (%p251) target = $region16
        $region15: #{tpu_custom_call.1} parent=11 // pred_region
          _
        $region16: #{tpu_custom_call.1} parent=11 // pred_fallthru
          _
        // Predicated region
        $region17: #{tpu_custom_call.1} parent=11 // pred_check
          %p254 = pneg %p126
        $region18: #{tpu_custom_call.1} parent=11 // pred_check_branch
          %256 = sbr.rel (%p254) target = $region20
        $region19: #{tpu_custom_call.1} parent=11 // pred_region
          _
        $region20: #{tpu_custom_call.1} parent=11 // pred_fallthru
          _
        // Predicated region
        $region21: #{tpu_custom_call.1} parent=11 // pred_check
          %p257 = pneg %p147
        $region22: #{tpu_custom_call.1} parent=11 // pred_check_branch
          %259 = sbr.rel (%p257) target = $region24
        $region23: #{tpu_custom_call.1} parent=11 // pred_region
          _
        $region24: #{tpu_custom_call.1} parent=11 // pred_fallthru
          _
        // Predicated region
        $region25: #{tpu_custom_call.1} parent=11 // pred_check
          %p260 = pneg %p168
        $region26: #{tpu_custom_call.1} parent=11 // pred_check_branch
          %262 = sbr.rel (%p260) target = $region28
        $region27: #{tpu_custom_call.1} parent=11 // pred_region
          _
        $region28: #{tpu_custom_call.1} parent=11 // pred_fallthru
          _
        // Predicated region
        $region29: #{tpu_custom_call.1} parent=11 // pred_check
          %p263 = pneg %p189
        $region30: #{tpu_custom_call.1} parent=11 // pred_check_branch
          %265 = sbr.rel (%p263) target = $region32
        $region31: #{tpu_custom_call.1} parent=11 // pred_region
          %s267 = ssub.s32 2048, 2048
          %268 = vsyncadd [#allocation3], %s267
          %s269 = sshll.u32 [#allocation2], 4
          %s270 = int_to_ptr.vmem [resolvable:$true] %s269
          %275 = dma.hbm_to_vmem [thread:$0]  %s6, 2048, %s270, [#allocation3], 128, 128, 8
        $region32: #{tpu_custom_call.1} parent=11 // pred_fallthru
          _
        // Predicated region
        $region33: #{tpu_custom_call.1} parent=11 // pred_check
          %p276 = pneg %p210
        $region34: #{tpu_custom_call.1} parent=11 // pred_check_branch
          %278 = sbr.rel (%p276) target = $region36
        $region35: #{tpu_custom_call.1} parent=11 // pred_region
          _
        $region36: #{tpu_custom_call.1} parent=11 // pred_fallthru
          _
      $region12: #{tpu_custom_call.1} parent=5 // pred_fallthru
        _
      %p279 = scmp.lt.s32.totalorder %s16, 2
      // Predicated region
      $region37: #{tpu_custom_call.1} parent=5 // pred_check
        %p280 = pneg %p279
      $region38: #{tpu_custom_call.1} parent=5 // pred_check_branch
        %282 = sbr.rel (%p280) target = $region40
      $region39: #{tpu_custom_call.1} parent=5 // pred_region
        // Predicated region
        $region41: #{tpu_custom_call.1} parent=39 // pred_check
          %p283 = pneg %p50
        $region42: #{tpu_custom_call.1} parent=39 // pred_check_branch
          %285 = sbr.rel (%p283) target = $region44
        $region43: #{tpu_custom_call.1} parent=39 // pred_region
          %s286 = sadd.s32 %s23, %s24
          %s287 = smul.u32 16, %s286
          %p288 = scmp.lt.s32.totalorder %s287, 31
          %s289 = scalar_select %p288, %s287, 31
          %s290 = smul.addr %s289, 8
          %s291 = scalar_lea.vmem %s0, %s290
          %s292 = sadd.s32 %s23, %s24
          %s293 = smul.u32 16, %s292
        $region44: #{tpu_custom_call.1} parent=39 // pred_fallthru
          _
        // Predicated region
        $region45: #{tpu_custom_call.1} parent=39 // pred_check
          %p294 = pneg %p78
        $region46: #{tpu_custom_call.1} parent=39 // pred_check_branch
          %296 = sbr.rel (%p294) target = $region48
        $region47: #{tpu_custom_call.1} parent=39 // pred_region
          %s297 = sadd.s32 %s23, %s24
          %p298 = scmp.lt.s32.totalorder %s297, 1
          %s299 = scalar_select %p298, %s297, 1
          %s300 = scalar_lea.vmem %s1, %s299
          %s301 = sadd.s32 %s23, %s24
        $region48: #{tpu_custom_call.1} parent=39 // pred_fallthru
          _
      $region40: #{tpu_custom_call.1} parent=5 // pred_fallthru
        _
      %p302 = scmp.le.s32.totalorder 1, %s16
      %p303 = scmp.lt.s32.totalorder %s16, 3
      %p304 = pnand %p302, %p303
      %p305 = pneg %p304
      // Predicated region
      $region49: #{tpu_custom_call.1} parent=5 // pred_check
        _
      $region50: #{tpu_custom_call.1} parent=5 // pred_check_branch
        %307 = sbr.rel (%p304) target = $region52
      $region51: #{tpu_custom_call.1} parent=5 // pred_region
        %s308 = ssub.s32 %s16, 1
        // Predicated region
        $region53: #{tpu_custom_call.1} parent=51 // pred_check
          %p309 = pneg %p189
        $region54: #{tpu_custom_call.1} parent=51 // pred_check_branch
          %311 = sbr.rel (%p309) target = $region56
        $region55: #{tpu_custom_call.1} parent=51 // pred_region
          %312 = dma.done [#allocation3], 2048
        $region56: #{tpu_custom_call.1} parent=51 // pred_fallthru
          _
        %s313 = sadd.s32 %s25, %s26
        %s314 = smul.u32 16, %s313
        %p315 = scmp.lt.s32.totalorder %s314, 31
        %s316 = scalar_select %p315, %s314, 31
        %s317 = smul.addr %s316, 8
        %s318 = scalar_lea.vmem %s0, %s317
        %p319 = pneg %p56
        %p320 = pneg %p53
        %s321 = sadd.s32 %s25, %s26
        %p322 = scmp.lt.s32.totalorder %s321, 1
        %s323 = scalar_select %p322, %s321, 1
        %s324 = scalar_lea.vmem %s1, %s323
        %p325 = pneg %p84
        %p326 = pneg %p81
        %p327 = pneg %p105
        %p328 = pneg %p102
        %p329 = pneg %p126
        %p330 = pneg %p123
        %p331 = pneg %p147
        %p332 = pneg %p144
        %p333 = pneg %p168
        %p334 = pneg %p165
        %p335 = pneg %p189
        %p336 = pneg %p186
        %p337 = pneg %p210
        %p338 = pneg %p207
        %p339 = pneg %p236
        %p340 = pneg %p233
        %s341 = sadd.s32 %s25, %s26
        %s342 = smul.u32 16, %s341
        %p343 = scmp.lt.s32.totalorder %s342, 31
        %s344 = scalar_select %p343, %s342, 31
        %s345 = smul.addr %s344, 8
        %s346 = scalar_lea.vmem %s0, %s345
        %s347 = sadd.s32 %s25, %s26
        %s348 = smul.u32 16, %s347
        %s349 = sadd.s32 %s25, %s26
        %p350 = scmp.lt.s32.totalorder %s349, 1
        %s351 = scalar_select %p350, %s349, 1
        %s352 = scalar_lea.vmem %s1, %s351
        %s353 = sadd.s32 %s25, %s26
        %s354 = smul.u32 16, %s25
        %p355 = scmp.eq.s32.totalorder %s26, 0
        // Predicated region
        $region57: #{tpu_custom_call.1} parent=51 // pred_check
          %p356 = pneg %p355
        $region58: #{tpu_custom_call.1} parent=51 // pred_check_branch
          %358 = sbr.rel (%p356) target = $region60
        $region59: #{tpu_custom_call.1} parent=51 // pred_region
          %359 = vst [vmem:[#allocation5] sm:$0xff] 0.0
          %360 = vst [vmem:[#allocation5 + $0x8] sm:$0xff] 0.0
          %361 = vst [vmem:[#allocation5 + $0x10] sm:$0xff] 0.0
          %362 = vst [vmem:[#allocation5 + $0x18] sm:$0xff] 0.0
          %363 = vst [vmem:[#allocation5 + $0x20] sm:$0xff] 0.0
          %364 = vst [vmem:[#allocation5 + $0x28] sm:$0xff] 0.0
          %365 = vst [vmem:[#allocation5 + $0x30] sm:$0xff] 0.0
          %366 = vst [vmem:[#allocation5 + $0x38] sm:$0xff] 0.0
          %367 = vst [vmem:[#allocation5 + $0x40] sm:$0xff] 0.0
          %368 = vst [vmem:[#allocation5 + $0x48] sm:$0xff] 0.0
          %369 = vst [vmem:[#allocation5 + $0x50] sm:$0xff] 0.0
          %370 = vst [vmem:[#allocation5 + $0x58] sm:$0xff] 0.0
          %371 = vst [vmem:[#allocation5 + $0x60] sm:$0xff] 0.0
          %372 = vst [vmem:[#allocation5 + $0x68] sm:$0xff] 0.0
          %373 = vst [vmem:[#allocation5 + $0x70] sm:$0xff] 0.0
          %374 = vst [vmem:[#allocation5 + $0x78] sm:$0xff] 0.0
        $region60: #{tpu_custom_call.1} parent=51 // pred_fallthru
          _
        %v375 = vld [vmem:[%s346] sm:$0xff]
        %v376 = vld [vmem:[%s346 + $0x8] sm:$0xff]
        %v377 = vld [vmem:[%s346 + $0x10] sm:$0xff]
        %v378 = vld [vmem:[%s346 + $0x18] sm:$0xff]
        %v379 = vld [vmem:[%s346 + $0x20] sm:$0xff]
        %v380 = vld [vmem:[%s346 + $0x28] sm:$0xff]
        %v381 = vld [vmem:[%s346 + $0x30] sm:$0xff]
        %v382 = vld [vmem:[%s346 + $0x38] sm:$0xff]
        %v383 = vld [vmem:[%s346 + $0x40] sm:$0xff]
        %v384 = vld [vmem:[%s346 + $0x48] sm:$0xff]
        %v385 = vld [vmem:[%s346 + $0x50] sm:$0xff]
        %v386 = vld [vmem:[%s346 + $0x58] sm:$0xff]
        %v387 = vld [vmem:[%s346 + $0x60] sm:$0xff]
        %v388 = vld [vmem:[%s346 + $0x68] sm:$0xff]
        %v389 = vld [vmem:[%s346 + $0x70] sm:$0xff]
        %v390 = vld [vmem:[%s346 + $0x78] sm:$0xff]
        %v391 = vcvt.f32.s32.to.zero.pseudo %v375
        %v392 = vcvt.f32.s32.to.zero.pseudo %v376
        %v393 = vcvt.f32.s32.to.zero.pseudo %v377
        %v394 = vcvt.f32.s32.to.zero.pseudo %v378
        %v395 = vcvt.f32.s32.to.zero.pseudo %v379
        %v396 = vcvt.f32.s32.to.zero.pseudo %v380
        %v397 = vcvt.f32.s32.to.zero.pseudo %v381
        %v398 = vcvt.f32.s32.to.zero.pseudo %v382
        %v399 = vcvt.f32.s32.to.zero.pseudo %v383
        %v400 = vcvt.f32.s32.to.zero.pseudo %v384
        %v401 = vcvt.f32.s32.to.zero.pseudo %v385
        %v402 = vcvt.f32.s32.to.zero.pseudo %v386
        %v403 = vcvt.f32.s32.to.zero.pseudo %v387
        %v404 = vcvt.f32.s32.to.zero.pseudo %v388
        %v405 = vcvt.f32.s32.to.zero.pseudo %v389
        %v406 = vcvt.f32.s32.to.zero.pseudo %v390
        %v407 = vlaneseq
        %v408 = vand.u32 %v407, 127
        %409 = vset.pattern.permute.xlu0 0
        %410 = vperm.xlu0 %409, %v391
        %v411 = vpop.permute.xlu0 %410
        %412 = vset.pattern.permute.xlu0 0
        %413 = vperm.xlu0 %412, %v392
        %v414 = vpop.permute.xlu0 %413
        %415 = vset.pattern.permute.xlu0 0
        %416 = vperm.xlu0 %415, %v393
        %v417 = vpop.permute.xlu0 %416
        %418 = vset.pattern.permute.xlu0 0
        %419 = vperm.xlu0 %418, %v394
        %v420 = vpop.permute.xlu0 %419
        %421 = vset.pattern.permute.xlu0 0
        %422 = vperm.xlu0 %421, %v395
        %v423 = vpop.permute.xlu0 %422
        %424 = vset.pattern.permute.xlu0 0
        %425 = vperm.xlu0 %424, %v396
        %v426 = vpop.permute.xlu0 %425
        %427 = vset.pattern.permute.xlu0 0
        %428 = vperm.xlu0 %427, %v397
        %v429 = vpop.permute.xlu0 %428
        %430 = vset.pattern.permute.xlu0 0
        %431 = vperm.xlu0 %430, %v398
        %v432 = vpop.permute.xlu0 %431
        %433 = vset.pattern.permute.xlu0 0
        %434 = vperm.xlu0 %433, %v399
        %v435 = vpop.permute.xlu0 %434
        %436 = vset.pattern.permute.xlu0 0
        %437 = vperm.xlu0 %436, %v400
        %v438 = vpop.permute.xlu0 %437
        %439 = vset.pattern.permute.xlu0 0
        %440 = vperm.xlu0 %439, %v401
        %v441 = vpop.permute.xlu0 %440
        %442 = vset.pattern.permute.xlu0 0
        %443 = vperm.xlu0 %442, %v402
        %v444 = vpop.permute.xlu0 %443
        %445 = vset.pattern.permute.xlu0 0
        %446 = vperm.xlu0 %445, %v403
        %v447 = vpop.permute.xlu0 %446
        %448 = vset.pattern.permute.xlu0 0
        %449 = vperm.xlu0 %448, %v404
        %v450 = vpop.permute.xlu0 %449
        %451 = vset.pattern.permute.xlu0 0
        %452 = vperm.xlu0 %451, %v405
        %v453 = vpop.permute.xlu0 %452
        %454 = vset.pattern.permute.xlu0 0
        %455 = vperm.xlu0 %454, %v406
        %v456 = vpop.permute.xlu0 %455
        %vm457 = vcmp.eq.s32.totalorder %v411, %v408
        %vm458 = vcmp.eq.s32.totalorder %v414, %v408
        %vm459 = vcmp.eq.s32.totalorder %v417, %v408
        %vm460 = vcmp.eq.s32.totalorder %v420, %v408
        %vm461 = vcmp.eq.s32.totalorder %v423, %v408
        %vm462 = vcmp.eq.s32.totalorder %v426, %v408
        %vm463 = vcmp.eq.s32.totalorder %v429, %v408
        %vm464 = vcmp.eq.s32.totalorder %v432, %v408
        %vm465 = vcmp.eq.s32.totalorder %v435, %v408
        %vm466 = vcmp.eq.s32.totalorder %v438, %v408
        %vm467 = vcmp.eq.s32.totalorder %v441, %v408
        %vm468 = vcmp.eq.s32.totalorder %v444, %v408
        %vm469 = vcmp.eq.s32.totalorder %v447, %v408
        %vm470 = vcmp.eq.s32.totalorder %v450, %v408
        %vm471 = vcmp.eq.s32.totalorder %v453, %v408
        %vm472 = vcmp.eq.s32.totalorder %v456, %v408
        %v473 = vsel %vm457, 1, 0
        %v474 = vsel %vm458, 1, 0
        %v475 = vsel %vm459, 1, 0
        %v476 = vsel %vm460, 1, 0
        %v477 = vsel %vm461, 1, 0
        %v478 = vsel %vm462, 1, 0
        %v479 = vsel %vm463, 1, 0
        %v480 = vsel %vm464, 1, 0
        %v481 = vsel %vm465, 1, 0
        %v482 = vsel %vm466, 1, 0
        %v483 = vsel %vm467, 1, 0
        %v484 = vsel %vm468, 1, 0
        %v485 = vsel %vm469, 1, 0
        %v486 = vsel %vm470, 1, 0
        %v487 = vsel %vm471, 1, 0
        %v488 = vsel %vm472, 1, 0
        %v489 = vcvt.s32.f32 %v473
        %v490 = vcvt.s32.f32 %v474
        %v491 = vcvt.s32.f32 %v475
        %v492 = vcvt.s32.f32 %v476
        %v493 = vcvt.s32.f32 %v477
        %v494 = vcvt.s32.f32 %v478
        %v495 = vcvt.s32.f32 %v479
        %v496 = vcvt.s32.f32 %v480
        %v497 = vcvt.s32.f32 %v481
        %v498 = vcvt.s32.f32 %v482
        %v499 = vcvt.s32.f32 %v483
        %v500 = vcvt.s32.f32 %v484
        %v501 = vcvt.s32.f32 %v485
        %v502 = vcvt.s32.f32 %v486
        %v503 = vcvt.s32.f32 %v487
        %v504 = vcvt.s32.f32 %v488
        %505 = vset.pattern.permute.xlu0 1
        %506 = vperm.xlu0 %505, %v391
        %v507 = vpop.permute.xlu0 %506
        %508 = vset.pattern.permute.xlu0 1
        %509 = vperm.xlu0 %508, %v392
        %v510 = vpop.permute.xlu0 %509
        %511 = vset.pattern.permute.xlu0 1
        %512 = vperm.xlu0 %511, %v393
        %v513 = vpop.permute.xlu0 %512
        %514 = vset.pattern.permute.xlu0 1
        %515 = vperm.xlu0 %514, %v394
        %v516 = vpop.permute.xlu0 %515
        %517 = vset.pattern.permute.xlu0 1
        %518 = vperm.xlu0 %517, %v395
        %v519 = vpop.permute.xlu0 %518
        %520 = vset.pattern.permute.xlu0 1
        %521 = vperm.xlu0 %520, %v396
        %v522 = vpop.permute.xlu0 %521
        %523 = vset.pattern.permute.xlu0 1
        %524 = vperm.xlu0 %523, %v397
        %v525 = vpop.permute.xlu0 %524
        %526 = vset.pattern.permute.xlu0 1
        %527 = vperm.xlu0 %526, %v398
        %v528 = vpop.permute.xlu0 %527
        %529 = vset.pattern.permute.xlu0 1
        %530 = vperm.xlu0 %529, %v399
        %v531 = vpop.permute.xlu0 %530
        %532 = vset.pattern.permute.xlu0 1
        %533 = vperm.xlu0 %532, %v400
        %v534 = vpop.permute.xlu0 %533
        %535 = vset.pattern.permute.xlu0 1
        %536 = vperm.xlu0 %535, %v401
        %v537 = vpop.permute.xlu0 %536
        %538 = vset.pattern.permute.xlu0 1
        %539 = vperm.xlu0 %538, %v402
        %v540 = vpop.permute.xlu0 %539
        %541 = vset.pattern.permute.xlu0 1
        %542 = vperm.xlu0 %541, %v403
        %v543 = vpop.permute.xlu0 %542
        %544 = vset.pattern.permute.xlu0 1
        %545 = vperm.xlu0 %544, %v404
        %v546 = vpop.permute.xlu0 %545
        %547 = vset.pattern.permute.xlu0 1
        %548 = vperm.xlu0 %547, %v405
        %v549 = vpop.permute.xlu0 %548
        %550 = vset.pattern.permute.xlu0 1
        %551 = vperm.xlu0 %550, %v406
        %v552 = vpop.permute.xlu0 %551
        %vm553 = vcmp.eq.s32.totalorder %v507, %v408
        %vm554 = vcmp.eq.s32.totalorder %v510, %v408
        %vm555 = vcmp.eq.s32.totalorder %v513, %v408
        %vm556 = vcmp.eq.s32.totalorder %v516, %v408
        %vm557 = vcmp.eq.s32.totalorder %v519, %v408
        %vm558 = vcmp.eq.s32.totalorder %v522, %v408
        %vm559 = vcmp.eq.s32.totalorder %v525, %v408
        %vm560 = vcmp.eq.s32.totalorder %v528, %v408
        %vm561 = vcmp.eq.s32.totalorder %v531, %v408
        %vm562 = vcmp.eq.s32.totalorder %v534, %v408
        %vm563 = vcmp.eq.s32.totalorder %v537, %v408
        %vm564 = vcmp.eq.s32.totalorder %v540, %v408
        %vm565 = vcmp.eq.s32.totalorder %v543, %v408
        %vm566 = vcmp.eq.s32.totalorder %v546, %v408
        %vm567 = vcmp.eq.s32.totalorder %v549, %v408
        %vm568 = vcmp.eq.s32.totalorder %v552, %v408
        %v569 = vsel %vm553, 1, 0
        %v570 = vsel %vm554, 1, 0
        %v571 = vsel %vm555, 1, 0
        %v572 = vsel %vm556, 1, 0
        %v573 = vsel %vm557, 1, 0
        %v574 = vsel %vm558, 1, 0
        %v575 = vsel %vm559, 1, 0
        %v576 = vsel %vm560, 1, 0
        %v577 = vsel %vm561, 1, 0
        %v578 = vsel %vm562, 1, 0
        %v579 = vsel %vm563, 1, 0
        %v580 = vsel %vm564, 1, 0
        %v581 = vsel %vm565, 1, 0
        %v582 = vsel %vm566, 1, 0
        %v583 = vsel %vm567, 1, 0
        %v584 = vsel %vm568, 1, 0
        %v585 = vcvt.s32.f32 %v569
        %v586 = vcvt.s32.f32 %v570
        %v587 = vcvt.s32.f32 %v571
        %v588 = vcvt.s32.f32 %v572
        %v589 = vcvt.s32.f32 %v573
        %v590 = vcvt.s32.f32 %v574
        %v591 = vcvt.s32.f32 %v575
        %v592 = vcvt.s32.f32 %v576
        %v593 = vcvt.s32.f32 %v577
        %v594 = vcvt.s32.f32 %v578
        %v595 = vcvt.s32.f32 %v579
        %v596 = vcvt.s32.f32 %v580
        %v597 = vcvt.s32.f32 %v581
        %v598 = vcvt.s32.f32 %v582
        %v599 = vcvt.s32.f32 %v583
        %v600 = vcvt.s32.f32 %v584
        %v601 = vld [vmem:[%s2] sm:$0xff]
        %v602 = vld [vmem:[%s2 + $0x8] sm:$0xff]
        %v603 = vld [vmem:[%s2 + $0x10] sm:$0xff]
        %v604 = vld [vmem:[%s2 + $0x18] sm:$0xff]
        %v605 = vld [vmem:[%s2 + $0x20] sm:$0xff]
        %v606 = vld [vmem:[%s2 + $0x28] sm:$0xff]
        %v607 = vld [vmem:[%s2 + $0x30] sm:$0xff]
        %v608 = vld [vmem:[%s2 + $0x38] sm:$0xff]
        %v609 = vld [vmem:[%s2 + $0x40] sm:$0xff]
        %v610 = vld [vmem:[%s2 + $0x48] sm:$0xff]
        %v611 = vld [vmem:[%s2 + $0x50] sm:$0xff]
        %v612 = vld [vmem:[%s2 + $0x58] sm:$0xff]
        %v613 = vld [vmem:[%s2 + $0x60] sm:$0xff]
        %v614 = vld [vmem:[%s2 + $0x68] sm:$0xff]
        %v615 = vld [vmem:[%s2 + $0x70] sm:$0xff]
        %v616 = vld [vmem:[%s2 + $0x78] sm:$0xff]
        %v617 = vld [vmem:[%s3] sm:$0xff]
        %v618 = vld [vmem:[%s3 + $0x8] sm:$0xff]
        %v619 = vld [vmem:[%s3 + $0x10] sm:$0xff]
        %v620 = vld [vmem:[%s3 + $0x18] sm:$0xff]
        %v621 = vld [vmem:[%s3 + $0x20] sm:$0xff]
        %v622 = vld [vmem:[%s3 + $0x28] sm:$0xff]
        %v623 = vld [vmem:[%s3 + $0x30] sm:$0xff]
        %v624 = vld [vmem:[%s3 + $0x38] sm:$0xff]
        %v625 = vld [vmem:[%s3 + $0x40] sm:$0xff]
        %v626 = vld [vmem:[%s3 + $0x48] sm:$0xff]
        %v627 = vld [vmem:[%s3 + $0x50] sm:$0xff]
        %v628 = vld [vmem:[%s3 + $0x58] sm:$0xff]
        %v629 = vld [vmem:[%s3 + $0x60] sm:$0xff]
        %v630 = vld [vmem:[%s3 + $0x68] sm:$0xff]
        %v631 = vld [vmem:[%s3 + $0x70] sm:$0xff]
        %v632 = vld [vmem:[%s3 + $0x78] sm:$0xff]
        %633 = vmatprep.subr.mxu0 0.0
        %v634 = vand.u32 %v617, 4294901760
        %635 = vmatpush1.msra.mxu0 %v634
        %636 = vmatprep.subr.mxu0 0.0
        %v637 = vand.u32 %v618, 4294901760
        %638 = vmatpush1.msra.mxu0 %v637
        %639 = vmatprep.subr.mxu0 0.0
        %v640 = vand.u32 %v619, 4294901760
        %641 = vmatpush1.msra.mxu0 %v640
        %642 = vmatprep.subr.mxu0 0.0
        %v643 = vand.u32 %v620, 4294901760
        %644 = vmatpush1.msra.mxu0 %v643
        %645 = vmatprep.subr.mxu0 0.0
        %v646 = vand.u32 %v621, 4294901760
        %647 = vmatpush1.msra.mxu0 %v646
        %648 = vmatprep.subr.mxu0 0.0
        %v649 = vand.u32 %v622, 4294901760
        %650 = vmatpush1.msra.mxu0 %v649
        %651 = vmatprep.subr.mxu0 0.0
        %v652 = vand.u32 %v623, 4294901760
        %653 = vmatpush1.msra.mxu0 %v652
        %654 = vmatprep.subr.mxu0 0.0
        %v655 = vand.u32 %v624, 4294901760
        %656 = vmatpush1.msra.mxu0 %v655
        %657 = vmatprep.subr.mxu0 0.0
        %v658 = vand.u32 %v625, 4294901760
        %659 = vmatpush1.msra.mxu0 %v658
        %660 = vmatprep.subr.mxu0 0.0
        %v661 = vand.u32 %v626, 4294901760
        %662 = vmatpush1.msra.mxu0 %v661
        %663 = vmatprep.subr.mxu0 0.0
        %v664 = vand.u32 %v627, 4294901760
        %665 = vmatpush1.msra.mxu0 %v664
        %666 = vmatprep.subr.mxu0 0.0
        %v667 = vand.u32 %v628, 4294901760
        %668 = vmatpush1.msra.mxu0 %v667
        %669 = vmatprep.subr.mxu0 0.0
        %v670 = vand.u32 %v629, 4294901760
        %671 = vmatpush1.msra.mxu0 %v670
        %672 = vmatprep.subr.mxu0 0.0
        %v673 = vand.u32 %v630, 4294901760
        %674 = vmatpush1.msra.mxu0 %v673
        %675 = vmatprep.subr.mxu0 0.0
        %v676 = vand.u32 %v631, 4294901760
        %677 = vmatpush1.msra.mxu0 %v676
        %678 = vmatprep.subr.mxu0 0.0
        %v679 = vand.u32 %v632, 4294901760
        %680 = vmatpush1.msra.mxu0 %v679
        %681 = vmatprep.subr.mxu0 0.0
        %682 = vmatpush1.msra.mxu0 0.0
        %683 = vmatprep.subr.mxu0 0.0
        %684 = vmatpush1.msra.mxu0 0.0
        %685 = vmatprep.subr.mxu0 0.0
        %686 = vmatpush1.msra.mxu0 0.0
        %687 = vmatprep.subr.mxu0 0.0
        %688 = vmatpush1.msra.mxu0 0.0
        %689 = vmatprep.subr.mxu0 0.0
        %690 = vmatpush1.msra.mxu0 0.0
        %691 = vmatprep.subr.mxu0 0.0
        %692 = vmatpush1.msra.mxu0 0.0
        %693 = vmatprep.subr.mxu0 0.0
        %694 = vmatpush1.msra.mxu0 0.0
        %695 = vmatprep.subr.mxu0 0.0
        %696 = vmatpush1.msra.mxu0 0.0
        %697 = vmatprep.subr.mxu0 0.0
        %698 = vmatpush1.msra.mxu0 0.0
        %699 = vmatprep.subr.mxu0 0.0
        %700 = vmatpush1.msra.mxu0 0.0
        %701 = vmatprep.subr.mxu0 0.0
        %702 = vmatpush1.msra.mxu0 0.0
        %703 = vmatprep.subr.mxu0 0.0
        %704 = vmatpush1.msra.mxu0 0.0
        %705 = vmatprep.subr.mxu0 0.0
        %706 = vmatpush1.msra.mxu0 0.0
        %707 = vmatprep.subr.mxu0 0.0
        %708 = vmatpush1.msra.mxu0 0.0
        %709 = vmatprep.subr.mxu0 0.0
        %710 = vmatpush1.msra.mxu0 0.0
        %711 = vmatprep.subr.mxu0 0.0
        %712 = vmatpush1.msra.mxu0 0.0
        %713 = vmatprep.mubr.f32.mxu0 0.0
        %v714 = vand.u32 %v585, 4294901760
        %v715 = vsub.f32 %v585, %v714
        %v716 = vand.u32 %v715, 4294901760
        %v717 = vsub.f32 %v715, %v716
        %v718 = vand.u32 %v717, 4294901760
        %719 = vmatmul.mubr.f32.gmra.mrb[0].mxu0 %v718
        %v720 = vpop.f32.mrb[0].mxu0
        %v721 = vadd.f32 0.0, %v720
        %v722 = vpop.f32.mrb[0].mxu0
        %723 = vmatprep.mubr.f32.mxu0 0.0
        %v724 = vand.u32 %v586, 4294901760
        %v725 = vsub.f32 %v586, %v724
        %v726 = vand.u32 %v725, 4294901760
        %v727 = vsub.f32 %v725, %v726
        %v728 = vand.u32 %v727, 4294901760
        %729 = vmatmul.mubr.f32.gmra.mrb[0].mxu0 %v728
        %v730 = vpop.f32.mrb[0].mxu0
        %v731 = vadd.f32 0.0, %v730
        %v732 = vpop.f32.mrb[0].mxu0
        %733 = vmatprep.mubr.f32.mxu0 0.0
        %v734 = vand.u32 %v587, 4294901760
        %v735 = vsub.f32 %v587, %v734
        %v736 = vand.u32 %v735, 4294901760
        %v737 = vsub.f32 %v735, %v736
        %v738 = vand.u32 %v737, 4294901760
        %739 = vmatmul.mubr.f32.gmra.mrb[0].mxu0 %v738
        %v740 = vpop.f32.mrb[0].mxu0
        %v741 = vadd.f32 0.0, %v740
        %v742 = vpop.f32.mrb[0].mxu0
        %743 = vmatprep.mubr.f32.mxu0 0.0
        %v744 = vand.u32 %v588, 4294901760
        %v745 = vsub.f32 %v588, %v744
        %v746 = vand.u32 %v745, 4294901760
        %v747 = vsub.f32 %v745, %v746
        %v748 = vand.u32 %v747, 4294901760
        %749 = vmatmul.mubr.f32.gmra.mrb[0].mxu0 %v748
        %v750 = vpop.f32.mrb[0].mxu0
        %v751 = vadd.f32 0.0, %v750
        %v752 = vpop.f32.mrb[0].mxu0
        %753 = vmatprep.mubr.f32.mxu0 0.0
        %v754 = vand.u32 %v589, 4294901760
        %v755 = vsub.f32 %v589, %v754
        %v756 = vand.u32 %v755, 4294901760
        %v757 = vsub.f32 %v755, %v756
        %v758 = vand.u32 %v757, 4294901760
        %759 = vmatmul.mubr.f32.gmra.mrb[0].mxu0 %v758
        %v760 = vpop.f32.mrb[0].mxu0
        %v761 = vadd.f32 0.0, %v760
        %v762 = vpop.f32.mrb[0].mxu0
        %763 = vmatprep.mubr.f32.mxu0 0.0
        %v764 = vand.u32 %v590, 4294901760
        %v765 = vsub.f32 %v590, %v764
        %v766 = vand.u32 %v765, 4294901760
        %v767 = vsub.f32 %v765, %v766
        %v768 = vand.u32 %v767, 4294901760
        %769 = vmatmul.mubr.f32.gmra.mrb[0].mxu0 %v768
        %v770 = vpop.f32.mrb[0].mxu0
        %v771 = vadd.f32 0.0, %v770
        %v772 = vpop.f32.mrb[0].mxu0
        %773 = vmatprep.mubr.f32.mxu0 0.0
        %v774 = vand.u32 %v591, 4294901760
        %v775 = vsub.f32 %v591, %v774
        %v776 = vand.u32 %v775, 4294901760
        %v777 = vsub.f32 %v775, %v776
        %v778 = vand.u32 %v777, 4294901760
        %779 = vmatmul.mubr.f32.gmra.mrb[0].mxu0 %v778
        %v780 = vpop.f32.mrb[0].mxu0
        %v781 = vadd.f32 0.0, %v780
        %v782 = vpop.f32.mrb[0].mxu0
        %783 = vmatprep.mubr.f32.mxu0 0.0
        %v784 = vand.u32 %v592, 4294901760
        %v785 = vsub.f32 %v592, %v784
        %v786 = vand.u32 %v785, 4294901760
        %v787 = vsub.f32 %v785, %v786
        %v788 = vand.u32 %v787, 4294901760
        %789 = vmatmul.mubr.f32.gmra.mrb[0].mxu0 %v788
        %v790 = vpop.f32.mrb[0].mxu0
        %v791 = vadd.f32 0.0, %v790
        %v792 = vpop.f32.mrb[0].mxu0
        %793 = vmatprep.mubr.f32.mxu0 0.0
        %v794 = vand.u32 %v593, 4294901760
        %v795 = vsub.f32 %v593, %v794
        %v796 = vand.u32 %v795, 4294901760
        %v797 = vsub.f32 %v795, %v796
        %v798 = vand.u32 %v797, 4294901760
        %799 = vmatmul.mubr.f32.gmra.mrb[0].mxu0 %v798
        %v800 = vpop.f32.mrb[0].mxu0
        %v801 = vadd.f32 0.0, %v800
        %v802 = vpop.f32.mrb[0].mxu0
        %803 = vmatprep.mubr.f32.mxu0 0.0
        %v804 = vand.u32 %v594, 4294901760
        %v805 = vsub.f32 %v594, %v804
        %v806 = vand.u32 %v805, 4294901760
        %v807 = vsub.f32 %v805, %v806
        %v808 = vand.u32 %v807, 4294901760
        %809 = vmatmul.mubr.f32.gmra.mrb[0].mxu0 %v808
        %v810 = vpop.f32.mrb[0].mxu0
        %v811 = vadd.f32 0.0, %v810
        %v812 = vpop.f32.mrb[0].mxu0
        %813 = vmatprep.mubr.f32.mxu0 0.0
        %v814 = vand.u32 %v595, 4294901760
        %v815 = vsub.f32 %v595, %v814
        %v816 = vand.u32 %v815, 4294901760
        %v817 = vsub.f32 %v815, %v816
        %v818 = vand.u32 %v817, 4294901760
        %819 = vmatmul.mubr.f32.gmra.mrb[0].mxu0 %v818
        %v820 = vpop.f32.mrb[0].mxu0
        %v821 = vadd.f32 0.0, %v820
        %v822 = vpop.f32.mrb[0].mxu0
        %823 = vmatprep.mubr.f32.mxu0 0.0
        %v824 = vand.u32 %v596, 4294901760
        %v825 = vsub.f32 %v596, %v824
        %v826 = vand.u32 %v825, 4294901760
        %v827 = vsub.f32 %v825, %v826
        %v828 = vand.u32 %v827, 4294901760
        %829 = vmatmul.mubr.f32.gmra.mrb[0].mxu0 %v828
        %v830 = vpop.f32.mrb[0].mxu0
        %v831 = vadd.f32 0.0, %v830
        %v832 = vpop.f32.mrb[0].mxu0
        %833 = vmatprep.mubr.f32.mxu0 0.0
        %v834 = vand.u32 %v597, 4294901760
        %v835 = vsub.f32 %v597, %v834
        %v836 = vand.u32 %v835, 4294901760
        %v837 = vsub.f32 %v835, %v836
        %v838 = vand.u32 %v837, 4294901760
        %839 = vmatmul.mubr.f32.gmra.mrb[0].mxu0 %v838
        %v840 = vpop.f32.mrb[0].mxu0
        %v841 = vadd.f32 0.0, %v840
        %v842 = vpop.f32.mrb[0].mxu0
        %843 = vmatprep.mubr.f32.mxu0 0.0
        %v844 = vand.u32 %v598, 4294901760
        %v845 = vsub.f32 %v598, %v844
        %v846 = vand.u32 %v845, 4294901760
        %v847 = vsub.f32 %v845, %v846
        %v848 = vand.u32 %v847, 4294901760
        %849 = vmatmul.mubr.f32.gmra.mrb[0].mxu0 %v848
        %v850 = vpop.f32.mrb[0].mxu0
        %v851 = vadd.f32 0.0, %v850
        %v852 = vpop.f32.mrb[0].mxu0
        %853 = vmatprep.mubr.f32.mxu0 0.0
        %v854 = vand.u32 %v599, 4294901760
        %v855 = vsub.f32 %v599, %v854
        %v856 = vand.u32 %v855, 4294901760
        %v857 = vsub.f32 %v855, %v856
        %v858 = vand.u32 %v857, 4294901760
        %859 = vmatmul.mubr.f32.gmra.mrb[0].mxu0 %v858
        %v860 = vpop.f32.mrb[0].mxu0
        %v861 = vadd.f32 0.0, %v860
        %v862 = vpop.f32.mrb[0].mxu0
        %863 = vmatprep.mubr.f32.mxu0 0.0
        %v864 = vand.u32 %v600, 4294901760
        %v865 = vsub.f32 %v600, %v864
        %v866 = vand.u32 %v865, 4294901760
        %v867 = vsub.f32 %v865, %v866
        %v868 = vand.u32 %v867, 4294901760
        %869 = vmatmul.mubr.f32.gmra.mrb[0].mxu0 %v868
        %v870 = vpop.f32.mrb[0].mxu0
        %v871 = vadd.f32 0.0, %v870
        %v872 = vpop.f32.mrb[0].mxu0
        %873 = vdwg.mxu0
        %874 = vmatprep.subr.mxu0 0.0
        %v875 = vand.u32 %v617, 4294901760
        %v876 = vsub.f32 %v617, %v875
        %v877 = vand.u32 %v876, 4294901760
        %v878 = vsub.f32 %v876, %v877
        %v879 = vand.u32 %v878, 4294901760
        %880 = vmatpush1.msra.mxu0 %v879
        %881 = vmatprep.subr.mxu0 0.0
        %v882 = vand.u32 %v618, 4294901760
        %v883 = vsub.f32 %v618, %v882
        %v884 = vand.u32 %v883, 4294901760
        %v885 = vsub.f32 %v883, %v884
        %v886 = vand.u32 %v885, 4294901760
        %887 = vmatpush1.msra.mxu0 %v886
        %888 = vmatprep.subr.mxu0 0.0
        %v889 = vand.u32 %v619, 4294901760
        %v890 = vsub.f32 %v619, %v889
        %v891 = vand.u32 %v890, 4294901760
        %v892 = vsub.f32 %v890, %v891
        %v893 = vand.u32 %v892, 4294901760
        %894 = vmatpush1.msra.mxu0 %v893
        %895 = vmatprep.subr.mxu0 0.0
        %v896 = vand.u32 %v620, 4294901760
        %v897 = vsub.f32 %v620, %v896
        %v898 = vand.u32 %v897, 4294901760
        %v899 = vsub.f32 %v897, %v898
        %v900 = vand.u32 %v899, 4294901760
        %901 = vmatpush1.msra.mxu0 %v900
        %902 = vmatprep.subr.mxu0 0.0
        %v903 = vand.u32 %v621, 4294901760
        %v904 = vsub.f32 %v621, %v903
        %v905 = vand.u32 %v904, 4294901760
        %v906 = vsub.f32 %v904, %v905
        %v907 = vand.u32 %v906, 4294901760
        %908 = vmatpush1.msra.mxu0 %v907
        %909 = vmatprep.subr.mxu0 0.0
        %v910 = vand.u32 %v622, 4294901760
        %v911 = vsub.f32 %v622, %v910
        %v912 = vand.u32 %v911, 4294901760
        %v913 = vsub.f32 %v911, %v912
        %v914 = vand.u32 %v913, 4294901760
        %915 = vmatpush1.msra.mxu0 %v914
        %916 = vmatprep.subr.mxu0 0.0
        %v917 = vand.u32 %v623, 4294901760
        %v918 = vsub.f32 %v623, %v917
        %v919 = vand.u32 %v918, 4294901760
        %v920 = vsub.f32 %v918, %v919
        %v921 = vand.u32 %v920, 4294901760
        %922 = vmatpush1.msra.mxu0 %v921
        %923 = vmatprep.subr.mxu0 0.0
        %v924 = vand.u32 %v624, 4294901760
        %v925 = vsub.f32 %v624, %v924
        %v926 = vand.u32 %v925, 4294901760
        %v927 = vsub.f32 %v925, %v926
        %v928 = vand.u32 %v927, 4294901760
        %929 = vmatpush1.msra.mxu0 %v928
        %930 = vmatprep.subr.mxu0 0.0
        %v931 = vand.u32 %v625, 4294901760
        %v932 = vsub.f32 %v625, %v931
        %v933 = vand.u32 %v932, 4294901760
        %v934 = vsub.f32 %v932, %v933
        %v935 = vand.u32 %v934, 4294901760
        %936 = vmatpush1.msra.mxu0 %v935
        %937 = vmatprep.subr.mxu0 0.0
        %v938 = vand.u32 %v626, 4294901760
        %v939 = vsub.f32 %v626, %v938
        %v940 = vand.u32 %v939, 4294901760
        %v941 = vsub.f32 %v939, %v940
        %v942 = vand.u32 %v941, 4294901760
        %943 = vmatpush1.msra.mxu0 %v942
        %944 = vmatprep.subr.mxu0 0.0
        %v945 = vand.u32 %v627, 4294901760
        %v946 = vsub.f32 %v627, %v945
        %v947 = vand.u32 %v946, 4294901760
        %v948 = vsub.f32 %v946, %v947
        %v949 = vand.u32 %v948, 4294901760
        %950 = vmatpush1.msra.mxu0 %v949
        %951 = vmatprep.subr.mxu0 0.0
        %v952 = vand.u32 %v628, 4294901760
        %v953 = vsub.f32 %v628, %v952
        %v954 = vand.u32 %v953, 4294901760
        %v955 = vsub.f32 %v953, %v954
        %v956 = vand.u32 %v955, 4294901760
        %957 = vmatpush1.msra.mxu0 %v956
        %958 = vmatprep.subr.mxu0 0.0
        %v959 = vand.u32 %v629, 4294901760
        %v960 = vsub.f32 %v629, %v959
        %v961 = vand.u32 %v960, 4294901760
        %v962 = vsub.f32 %v960, %v961
        %v963 = vand.u32 %v962, 4294901760
        %964 = vmatpush1.msra.mxu0 %v963
        %965 = vmatprep.subr.mxu0 0.0
        %v966 = vand.u32 %v630, 4294901760
        %v967 = vsub.f32 %v630, %v966
        %v968 = vand.u32 %v967, 4294901760
        %v969 = vsub.f32 %v967, %v968
        %v970 = vand.u32 %v969, 4294901760
        %971 = vmatpush1.msra.mxu0 %v970
        %972 = vmatprep.subr.mxu0 0.0
        %v973 = vand.u32 %v631, 4294901760
        %v974 = vsub.f32 %v631, %v973
        %v975 = vand.u32 %v974, 4294901760
        %v976 = vsub.f32 %v974, %v975
        %v977 = vand.u32 %v976, 4294901760
        %978 = vmatpush1.msra.mxu0 %v977
        %979 = vmatprep.subr.mxu0 0.0
        %v980 = vand.u32 %v632, 4294901760
        %v981 = vsub.f32 %v632, %v980
        %v982 = vand.u32 %v981, 4294901760
        %v983 = vsub.f32 %v981, %v982
        %v984 = vand.u32 %v983, 4294901760
        %985 = vmatpush1.msra.mxu0 %v984
        %986 = vmatprep.subr.mxu0 0.0
        %987 = vmatpush1.msra.mxu0 0.0
        %988 = vmatprep.subr.mxu0 0.0
        %989 = vmatpush1.msra.mxu0 0.0
        %990 = vmatprep.subr.mxu0 0.0
        %991 = vmatpush1.msra.mxu0 0.0
        %992 = vmatprep.subr.mxu0 0.0
        %993 = vmatpush1.msra.mxu0 0.0
        %994 = vmatprep.subr.mxu0 0.0
        %995 = vmatpush1.msra.mxu0 0.0
        %996 = vmatprep.subr.mxu0 0.0
        %997 = vmatpush1.msra.mxu0 0.0
        %998 = vmatprep.subr.mxu0 0.0
        %999 = vmatpush1.msra.mxu0 0.0
        %1000 = vmatprep.subr.mxu0 0.0
        %1001 = vmatpush1.msra.mxu0 0.0
        %1002 = vmatprep.subr.mxu0 0.0
        %1003 = vmatpush1.msra.mxu0 0.0
        %1004 = vmatprep.subr.mxu0 0.0
        %1005 = vmatpush1.msra.mxu0 0.0
        %1006 = vmatprep.subr.mxu0 0.0
        %1007 = vmatpush1.msra.mxu0 0.0
        %1008 = vmatprep.subr.mxu0 0.0
        %1009 = vmatpush1.msra.mxu0 0.0
        %1010 = vmatprep.subr.mxu0 0.0
        %1011 = vmatpush1.msra.mxu0 0.0
        %1012 = vmatprep.subr.mxu0 0.0
        %1013 = vmatpush1.msra.mxu0 0.0
        %1014 = vmatprep.subr.mxu0 0.0
        %1015 = vmatpush1.msra.mxu0 0.0
        %1016 = vmatprep.subr.mxu0 0.0
        %1017 = vmatpush1.msra.mxu0 0.0
        %1018 = vmatprep.mubr.f32.mxu0 0.0
        %v1019 = vand.u32 %v585, 4294901760
        %1020 = vmatmul.mubr.f32.gmra.mrb[0].mxu0 %v1019
        %v1021 = vpop.f32.mrb[0].mxu0
        %v1022 = vadd.f32 %v721, %v1021
        %v1023 = vpop.f32.mrb[0].mxu0
        %1024 = vmatprep.mubr.f32.mxu0 0.0
        %v1025 = vand.u32 %v586, 4294901760
        %1026 = vmatmul.mubr.f32.gmra.mrb[0].mxu0 %v1025
        %v1027 = vpop.f32.mrb[0].mxu0
        %v1028 = vadd.f32 %v731, %v1027
        %v1029 = vpop.f32.mrb[0].mxu0
        %1030 = vmatprep.mubr.f32.mxu0 0.0
        %v1031 = vand.u32 %v587, 4294901760
        %1032 = vmatmul.mubr.f32.gmra.mrb[0].mxu0 %v1031
        %v1033 = vpop.f32.mrb[0].mxu0
        %v1034 = vadd.f32 %v741, %v1033
        %v1035 = vpop.f32.mrb[0].mxu0
        %1036 = vmatprep.mubr.f32.mxu0 0.0
        %v1037 = vand.u32 %v588, 4294901760
        %1038 = vmatmul.mubr.f32.gmra.mrb[0].mxu0 %v1037
        %v1039 = vpop.f32.mrb[0].mxu0
        %v1040 = vadd.f32 %v751, %v1039
        %v1041 = vpop.f32.mrb[0].mxu0
        %1042 = vmatprep.mubr.f32.mxu0 0.0
        %v1043 = vand.u32 %v589, 4294901760
        %1044 = vmatmul.mubr.f32.gmra.mrb[0].mxu0 %v1043
        %v1045 = vpop.f32.mrb[0].mxu0
        %v1046 = vadd.f32 %v761, %v1045
        %v1047 = vpop.f32.mrb[0].mxu0
        %1048 = vmatprep.mubr.f32.mxu0 0.0
        %v1049 = vand.u32 %v590, 4294901760
        %1050 = vmatmul.mubr.f32.gmra.mrb[0].mxu0 %v1049
        %v1051 = vpop.f32.mrb[0].mxu0
        %v1052 = vadd.f32 %v771, %v1051
        %v1053 = vpop.f32.mrb[0].mxu0
        %1054 = vmatprep.mubr.f32.mxu0 0.0
        %v1055 = vand.u32 %v591, 4294901760
        %1056 = vmatmul.mubr.f32.gmra.mrb[0].mxu0 %v1055
        %v1057 = vpop.f32.mrb[0].mxu0
        %v1058 = vadd.f32 %v781, %v1057
        %v1059 = vpop.f32.mrb[0].mxu0
        %1060 = vmatprep.mubr.f32.mxu0 0.0
        %v1061 = vand.u32 %v592, 4294901760
        %1062 = vmatmul.mubr.f32.gmra.mrb[0].mxu0 %v1061
        %v1063 = vpop.f32.mrb[0].mxu0
        %v1064 = vadd.f32 %v791, %v1063
        %v1065 = vpop.f32.mrb[0].mxu0
        %1066 = vmatprep.mubr.f32.mxu0 0.0
        %v1067 = vand.u32 %v593, 4294901760
        %1068 = vmatmul.mubr.f32.gmra.mrb[0].mxu0 %v1067
        %v1069 = vpop.f32.mrb[0].mxu0
        %v1070 = vadd.f32 %v801, %v1069
        %v1071 = vpop.f32.mrb[0].mxu0
        %1072 = vmatprep.mubr.f32.mxu0 0.0
        %v1073 = vand.u32 %v594, 4294901760
        %1074 = vmatmul.mubr.f32.gmra.mrb[0].mxu0 %v1073
        %v1075 = vpop.f32.mrb[0].mxu0
        %v1076 = vadd.f32 %v811, %v1075
        %v1077 = vpop.f32.mrb[0].mxu0
        %1078 = vmatprep.mubr.f32.mxu0 0.0
        %v1079 = vand.u32 %v595, 4294901760
        %1080 = vmatmul.mubr.f32.gmra.mrb[0].mxu0 %v1079
        %v1081 = vpop.f32.mrb[0].mxu0
        %v1082 = vadd.f32 %v821, %v1081
        %v1083 = vpop.f32.mrb[0].mxu0
        %1084 = vmatprep.mubr.f32.mxu0 0.0
        %v1085 = vand.u32 %v596, 4294901760
        %1086 = vmatmul.mubr.f32.gmra.mrb[0].mxu0 %v1085
        %v1087 = vpop.f32.mrb[0].mxu0
        %v1088 = vadd.f32 %v831, %v1087
        %v1089 = vpop.f32.mrb[0].mxu0
        %1090 = vmatprep.mubr.f32.mxu0 0.0
        %v1091 = vand.u32 %v597, 4294901760
        %1092 = vmatmul.mubr.f32.gmra.mrb[0].mxu0 %v1091
        %v1093 = vpop.f32.mrb[0].mxu0
        %v1094 = vadd.f32 %v841, %v1093
        %v1095 = vpop.f32.mrb[0].mxu0
        %1096 = vmatprep.mubr.f32.mxu0 0.0
        %v1097 = vand.u32 %v598, 4294901760
        %1098 = vmatmul.mubr.f32.gmra.mrb[0].mxu0 %v1097
        %v1099 = vpop.f32.mrb[0].mxu0
        %v1100 = vadd.f32 %v851, %v1099
        %v1101 = vpop.f32.mrb[0].mxu0
        %1102 = vmatprep.mubr.f32.mxu0 0.0
        %v1103 = vand.u32 %v599, 4294901760
        %1104 = vmatmul.mubr.f32.gmra.mrb[0].mxu0 %v1103
        %v1105 = vpop.f32.mrb[0].mxu0
        %v1106 = vadd.f32 %v861, %v1105
        %v1107 = vpop.f32.mrb[0].mxu0
        %1108 = vmatprep.mubr.f32.mxu0 0.0
        %v1109 = vand.u32 %v600, 4294901760
        %1110 = vmatmul.mubr.f32.gmra.mrb[0].mxu0 %v1109
        %v1111 = vpop.f32.mrb[0].mxu0
        %v1112 = vadd.f32 %v871, %v1111
        %v1113 = vpop.f32.mrb[0].mxu0
        %1114 = vdwg.mxu0
        %1115 = vmatprep.subr.mxu0 0.0
        %v1116 = vand.u32 %v617, 4294901760
        %v1117 = vsub.f32 %v617, %v1116
        %1118 = vmatpush1.msra.mxu0 %v1117
        %1119 = vmatprep.subr.mxu0 0.0
        %v1120 = vand.u32 %v618, 4294901760
        %v1121 = vsub.f32 %v618, %v1120
        %1122 = vmatpush1.msra.mxu0 %v1121
        %1123 = vmatprep.subr.mxu0 0.0
        %v1124 = vand.u32 %v619, 4294901760
        %v1125 = vsub.f32 %v619, %v1124
        %1126 = vmatpush1.msra.mxu0 %v1125
        %1127 = vmatprep.subr.mxu0 0.0
        %v1128 = vand.u32 %v620, 4294901760
        %v1129 = vsub.f32 %v620, %v1128
        %1130 = vmatpush1.msra.mxu0 %v1129
        %1131 = vmatprep.subr.mxu0 0.0
        %v1132 = vand.u32 %v621, 4294901760
        %v1133 = vsub.f32 %v621, %v1132
        %1134 = vmatpush1.msra.mxu0 %v1133
        %1135 = vmatprep.subr.mxu0 0.0
        %v1136 = vand.u32 %v622, 4294901760
        %v1137 = vsub.f32 %v622, %v1136
        %1138 = vmatpush1.msra.mxu0 %v1137
        %1139 = vmatprep.subr.mxu0 0.0
        %v1140 = vand.u32 %v623, 4294901760
        %v1141 = vsub.f32 %v623, %v1140
        %1142 = vmatpush1.msra.mxu0 %v1141
        %1143 = vmatprep.subr.mxu0 0.0
        %v1144 = vand.u32 %v624, 4294901760
        %v1145 = vsub.f32 %v624, %v1144
        %1146 = vmatpush1.msra.mxu0 %v1145
        %1147 = vmatprep.subr.mxu0 0.0
        %v1148 = vand.u32 %v625, 4294901760
        %v1149 = vsub.f32 %v625, %v1148
        %1150 = vmatpush1.msra.mxu0 %v1149
        %1151 = vmatprep.subr.mxu0 0.0
        %v1152 = vand.u32 %v626, 4294901760
        %v1153 = vsub.f32 %v626, %v1152
        %1154 = vmatpush1.msra.mxu0 %v1153
        %1155 = vmatprep.subr.mxu0 0.0
        %v1156 = vand.u32 %v627, 4294901760
        %v1157 = vsub.f32 %v627, %v1156
        %1158 = vmatpush1.msra.mxu0 %v1157
        %1159 = vmatprep.subr.mxu0 0.0
        %v1160 = vand.u32 %v628, 4294901760
        %v1161 = vsub.f32 %v628, %v1160
        %1162 = vmatpush1.msra.mxu0 %v1161
        %1163 = vmatprep.subr.mxu0 0.0
        %v1164 = vand.u32 %v629, 4294901760
        %v1165 = vsub.f32 %v629, %v1164
        %1166 = vmatpush1.msra.mxu0 %v1165
        %1167 = vmatprep.subr.mxu0 0.0
        %v1168 = vand.u32 %v630, 4294901760
        %v1169 = vsub.f32 %v630, %v1168
        %1170 = vmatpush1.msra.mxu0 %v1169
        %1171 = vmatprep.subr.mxu0 0.0
        %v1172 = vand.u32 %v631, 4294901760
        %v1173 = vsub.f32 %v631, %v1172
        %1174 = vmatpush1.msra.mxu0 %v1173
        %1175 = vmatprep.subr.mxu0 0.0
        %v1176 = vand.u32 %v632, 4294901760
        %v1177 = vsub.f32 %v632, %v1176
        %1178 = vmatpush1.msra.mxu0 %v1177
        %1179 = vmatprep.subr.mxu0 0.0
        %1180 = vmatpush1.msra.mxu0 0.0
        %1181 = vmatprep.subr.mxu0 0.0
        %1182 = vmatpush1.msra.mxu0 0.0
        %1183 = vmatprep.subr.mxu0 0.0
        %1184 = vmatpush1.msra.mxu0 0.0
        %1185 = vmatprep.subr.mxu0 0.0
        %1186 = vmatpush1.msra.mxu0 0.0
        %1187 = vmatprep.subr.mxu0 0.0
        %1188 = vmatpush1.msra.mxu0 0.0
        %1189 = vmatprep.subr.mxu0 0.0
        %1190 = vmatpush1.msra.mxu0 0.0
        %1191 = vmatprep.subr.mxu0 0.0
        %1192 = vmatpush1.msra.mxu0 0.0
        %1193 = vmatprep.subr.mxu0 0.0
        %1194 = vmatpush1.msra.mxu0 0.0
        %1195 = vmatprep.subr.mxu0 0.0
        %1196 = vmatpush1.msra.mxu0 0.0
        %1197 = vmatprep.subr.mxu0 0.0
        %1198 = vmatpush1.msra.mxu0 0.0
        %1199 = vmatprep.subr.mxu0 0.0
        %1200 = vmatpush1.msra.mxu0 0.0
        %1201 = vmatprep.subr.mxu0 0.0
        %1202 = vmatpush1.msra.mxu0 0.0
        %1203 = vmatprep.subr.mxu0 0.0
        %1204 = vmatpush1.msra.mxu0 0.0
        %1205 = vmatprep.subr.mxu0 0.0
        %1206 = vmatpush1.msra.mxu0 0.0
        %1207 = vmatprep.subr.mxu0 0.0
        %1208 = vmatpush1.msra.mxu0 0.0
        %1209 = vmatprep.subr.mxu0 0.0
        %1210 = vmatpush1.msra.mxu0 0.0
        %1211 = vmatprep.mubr.f32.mxu0 0.0
        %v1212 = vand.u32 %v585, 4294901760
        %v1213 = vsub.f32 %v585, %v1212
        %1214 = vmatmul.mubr.f32.gmra.mrb[0].mxu0 %v1213
        %v1215 = vpop.f32.mrb[0].mxu0
        %v1216 = vadd.f32 %v1022, %v1215
        %v1217 = vpop.f32.mrb[0].mxu0
        %1218 = vmatprep.mubr.f32.mxu0 0.0
        %v1219 = vand.u32 %v586, 4294901760
        %v1220 = vsub.f32 %v586, %v1219
        %1221 = vmatmul.mubr.f32.gmra.mrb[0].mxu0 %v1220
        %v1222 = vpop.f32.mrb[0].mxu0
        %v1223 = vadd.f32 %v1028, %v1222
        %v1224 = vpop.f32.mrb[0].mxu0
        %1225 = vmatprep.mubr.f32.mxu0 0.0
        %v1226 = vand.u32 %v587, 4294901760
        %v1227 = vsub.f32 %v587, %v1226
        %1228 = vmatmul.mubr.f32.gmra.mrb[0].mxu0 %v1227
        %v1229 = vpop.f32.mrb[0].mxu0
        %v1230 = vadd.f32 %v1034, %v1229
        %v1231 = vpop.f32.mrb[0].mxu0
        %1232 = vmatprep.mubr.f32.mxu0 0.0
        %v1233 = vand.u32 %v588, 4294901760
        %v1234 = vsub.f32 %v588, %v1233
        %1235 = vmatmul.mubr.f32.gmra.mrb[0].mxu0 %v1234
        %v1236 = vpop.f32.mrb[0].mxu0
        %v1237 = vadd.f32 %v1040, %v1236
        %v1238 = vpop.f32.mrb[0].mxu0
        %1239 = vmatprep.mubr.f32.mxu0 0.0
        %v1240 = vand.u32 %v589, 4294901760
        %v1241 = vsub.f32 %v589, %v1240
        %1242 = vmatmul.mubr.f32.gmra.mrb[0].mxu0 %v1241
        %v1243 = vpop.f32.mrb[0].mxu0
        %v1244 = vadd.f32 %v1046, %v1243
        %v1245 = vpop.f32.mrb[0].mxu0
        %1246 = vmatprep.mubr.f32.mxu0 0.0
        %v1247 = vand.u32 %v590, 4294901760
        %v1248 = vsub.f32 %v590, %v1247
        %1249 = vmatmul.mubr.f32.gmra.mrb[0].mxu0 %v1248
        %v1250 = vpop.f32.mrb[0].mxu0
        %v1251 = vadd.f32 %v1052, %v1250
        %v1252 = vpop.f32.mrb[0].mxu0
        %1253 = vmatprep.mubr.f32.mxu0 0.0
        %v1254 = vand.u32 %v591, 4294901760
        %v1255 = vsub.f32 %v591, %v1254
        %1256 = vmatmul.mubr.f32.gmra.mrb[0].mxu0 %v1255
        %v1257 = vpop.f32.mrb[0].mxu0
        %v1258 = vadd.f32 %v1058, %v1257
        %v1259 = vpop.f32.mrb[0].mxu0
        %1260 = vmatprep.mubr.f32.mxu0 0.0
        %v1261 = vand.u32 %v592, 4294901760
        %v1262 = vsub.f32 %v592, %v1261
        %1263 = vmatmul.mubr.f32.gmra.mrb[0].mxu0 %v1262
        %v1264 = vpop.f32.mrb[0].mxu0
        %v1265 = vadd.f32 %v1064, %v1264
        %v1266 = vpop.f32.mrb[0].mxu0
        %1267 = vmatprep.mubr.f32.mxu0 0.0
        %v1268 = vand.u32 %v593, 4294901760
        %v1269 = vsub.f32 %v593, %v1268
        %1270 = vmatmul.mubr.f32.gmra.mrb[0].mxu0 %v1269
        %v1271 = vpop.f32.mrb[0].mxu0
        %v1272 = vadd.f32 %v1070, %v1271
        %v1273 = vpop.f32.mrb[0].mxu0
        %1274 = vmatprep.mubr.f32.mxu0 0.0
        %v1275 = vand.u32 %v594, 4294901760
        %v1276 = vsub.f32 %v594, %v1275
        %1277 = vmatmul.mubr.f32.gmra.mrb[0].mxu0 %v1276
        %v1278 = vpop.f32.mrb[0].mxu0
        %v1279 = vadd.f32 %v1076, %v1278
        %v1280 = vpop.f32.mrb[0].mxu0
        %1281 = vmatprep.mubr.f32.mxu0 0.0
        %v1282 = vand.u32 %v595, 4294901760
        %v1283 = vsub.f32 %v595, %v1282
        %1284 = vmatmul.mubr.f32.gmra.mrb[0].mxu0 %v1283
        %v1285 = vpop.f32.mrb[0].mxu0
        %v1286 = vadd.f32 %v1082, %v1285
        %v1287 = vpop.f32.mrb[0].mxu0
        %1288 = vmatprep.mubr.f32.mxu0 0.0
        %v1289 = vand.u32 %v596, 4294901760
        %v1290 = vsub.f32 %v596, %v1289
        %1291 = vmatmul.mubr.f32.gmra.mrb[0].mxu0 %v1290
        %v1292 = vpop.f32.mrb[0].mxu0
        %v1293 = vadd.f32 %v1088, %v1292
        %v1294 = vpop.f32.mrb[0].mxu0
        %1295 = vmatprep.mubr.f32.mxu0 0.0
        %v1296 = vand.u32 %v597, 4294901760
        %v1297 = vsub.f32 %v597, %v1296
        %1298 = vmatmul.mubr.f32.gmra.mrb[0].mxu0 %v1297
        %v1299 = vpop.f32.mrb[0].mxu0
        %v1300 = vadd.f32 %v1094, %v1299
        %v1301 = vpop.f32.mrb[0].mxu0
        %1302 = vmatprep.mubr.f32.mxu0 0.0
        %v1303 = vand.u32 %v598, 4294901760
        %v1304 = vsub.f32 %v598, %v1303
        %1305 = vmatmul.mubr.f32.gmra.mrb[0].mxu0 %v1304
        %v1306 = vpop.f32.mrb[0].mxu0
        %v1307 = vadd.f32 %v1100, %v1306
        %v1308 = vpop.f32.mrb[0].mxu0
        %1309 = vmatprep.mubr.f32.mxu0 0.0
        %v1310 = vand.u32 %v599, 4294901760
        %v1311 = vsub.f32 %v599, %v1310
        %1312 = vmatmul.mubr.f32.gmra.mrb[0].mxu0 %v1311
        %v1313 = vpop.f32.mrb[0].mxu0
        %v1314 = vadd.f32 %v1106, %v1313
        %v1315 = vpop.f32.mrb[0].mxu0
        %1316 = vmatprep.mubr.f32.mxu0 0.0
        %v1317 = vand.u32 %v600, 4294901760
        %v1318 = vsub.f32 %v600, %v1317
        %1319 = vmatmul.mubr.f32.gmra.mrb[0].mxu0 %v1318
        %v1320 = vpop.f32.mrb[0].mxu0
        %v1321 = vadd.f32 %v1112, %v1320
        %v1322 = vpop.f32.mrb[0].mxu0
        %1323 = vdwg.mxu0
        %1324 = vmatprep.subr.mxu0 0.0
        %v1325 = vand.u32 %v617, 4294901760
        %1326 = vmatpush1.msra.mxu0 %v1325
        %1327 = vmatprep.subr.mxu0 0.0
        %v1328 = vand.u32 %v618, 4294901760
        %1329 = vmatpush1.msra.mxu0 %v1328
        %1330 = vmatprep.subr.mxu0 0.0
        %v1331 = vand.u32 %v619, 4294901760
        %1332 = vmatpush1.msra.mxu0 %v1331
        %1333 = vmatprep.subr.mxu0 0.0
        %v1334 = vand.u32 %v620, 4294901760
        %1335 = vmatpush1.msra.mxu0 %v1334
        %1336 = vmatprep.subr.mxu0 0.0
        %v1337 = vand.u32 %v621, 4294901760
        %1338 = vmatpush1.msra.mxu0 %v1337
        %1339 = vmatprep.subr.mxu0 0.0
        %v1340 = vand.u32 %v622, 4294901760
        %1341 = vmatpush1.msra.mxu0 %v1340
        %1342 = vmatprep.subr.mxu0 0.0
        %v1343 = vand.u32 %v623, 4294901760
        %1344 = vmatpush1.msra.mxu0 %v1343
        %1345 = vmatprep.subr.mxu0 0.0
        %v1346 = vand.u32 %v624, 4294901760
        %1347 = vmatpush1.msra.mxu0 %v1346
        %1348 = vmatprep.subr.mxu0 0.0
        %v1349 = vand.u32 %v625, 4294901760
        %1350 = vmatpush1.msra.mxu0 %v1349
        %1351 = vmatprep.subr.mxu0 0.0
        %v1352 = vand.u32 %v626, 4294901760
        %1353 = vmatpush1.msra.mxu0 %v1352
        %1354 = vmatprep.subr.mxu0 0.0
        %v1355 = vand.u32 %v627, 4294901760
        %1356 = vmatpush1.msra.mxu0 %v1355
        %1357 = vmatprep.subr.mxu0 0.0
        %v1358 = vand.u32 %v628, 4294901760
        %1359 = vmatpush1.msra.mxu0 %v1358
        %1360 = vmatprep.subr.mxu0 0.0
        %v1361 = vand.u32 %v629, 4294901760
        %1362 = vmatpush1.msra.mxu0 %v1361
        %1363 = vmatprep.subr.mxu0 0.0
        %v1364 = vand.u32 %v630, 4294901760
        %1365 = vmatpush1.msra.mxu0 %v1364
        %1366 = vmatprep.subr.mxu0 0.0
        %v1367 = vand.u32 %v631, 4294901760
        %1368 = vmatpush1.msra.mxu0 %v1367
        %1369 = vmatprep.subr.mxu0 0.0
        %v1370 = vand.u32 %v632, 4294901760
        %1371 = vmatpush1.msra.mxu0 %v1370
        %1372 = vmatprep.subr.mxu0 0.0
        %1373 = vmatpush1.msra.mxu0 0.0
        %1374 = vmatprep.subr.mxu0 0.0
        %1375 = vmatpush1.msra.mxu0 0.0
        %1376 = vmatprep.subr.mxu0 0.0
        %1377 = vmatpush1.msra.mxu0 0.0
        %1378 = vmatprep.subr.mxu0 0.0
        %1379 = vmatpush1.msra.mxu0 0.0
        %1380 = vmatprep.subr.mxu0 0.0
        %1381 = vmatpush1.msra.mxu0 0.0
        %1382 = vmatprep.subr.mxu0 0.0
        %1383 = vmatpush1.msra.mxu0 0.0
        %1384 = vmatprep.subr.mxu0 0.0
        %1385 = vmatpush1.msra.mxu0 0.0
        %1386 = vmatprep.subr.mxu0 0.0
        %1387 = vmatpush1.msra.mxu0 0.0
        %1388 = vmatprep.subr.mxu0 0.0
        %1389 = vmatpush1.msra.mxu0 0.0
        %1390 = vmatprep.subr.mxu0 0.0
        %1391 = vmatpush1.msra.mxu0 0.0
        %1392 = vmatprep.subr.mxu0 0.0
        %1393 = vmatpush1.msra.mxu0 0.0
        %1394 = vmatprep.subr.mxu0 0.0
        %1395 = vmatpush1.msra.mxu0 0.0
        %1396 = vmatprep.subr.mxu0 0.0
        %1397 = vmatpush1.msra.mxu0 0.0
        %1398 = vmatprep.subr.mxu0 0.0
        %1399 = vmatpush1.msra.mxu0 0.0
        %1400 = vmatprep.subr.mxu0 0.0
        %1401 = vmatpush1.msra.mxu0 0.0
        %1402 = vmatprep.subr.mxu0 0.0
        %1403 = vmatpush1.msra.mxu0 0.0
        %1404 = vmatprep.mubr.f32.mxu0 0.0
        %v1405 = vand.u32 %v585, 4294901760
        %v1406 = vsub.f32 %v585, %v1405
        %v1407 = vand.u32 %v1406, 4294901760
        %1408 = vmatmul.mubr.f32.gmra.mrb[0].mxu0 %v1407
        %v1409 = vpop.f32.mrb[0].mxu0
        %v1410 = vadd.f32 %v1216, %v1409
        %v1411 = vpop.f32.mrb[0].mxu0
        %1412 = vmatprep.mubr.f32.mxu0 0.0
        %v1413 = vand.u32 %v586, 4294901760
        %v1414 = vsub.f32 %v586, %v1413
        %v1415 = vand.u32 %v1414, 4294901760
        %1416 = vmatmul.mubr.f32.gmra.mrb[0].mxu0 %v1415
        %v1417 = vpop.f32.mrb[0].mxu0
        %v1418 = vadd.f32 %v1223, %v1417
        %v1419 = vpop.f32.mrb[0].mxu0
        %1420 = vmatprep.mubr.f32.mxu0 0.0
        %v1421 = vand.u32 %v587, 4294901760
        %v1422 = vsub.f32 %v587, %v1421
        %v1423 = vand.u32 %v1422, 4294901760
        %1424 = vmatmul.mubr.f32.gmra.mrb[0].mxu0 %v1423
        %v1425 = vpop.f32.mrb[0].mxu0
        %v1426 = vadd.f32 %v1230, %v1425
        %v1427 = vpop.f32.mrb[0].mxu0
        %1428 = vmatprep.mubr.f32.mxu0 0.0
        %v1429 = vand.u32 %v588, 4294901760
        %v1430 = vsub.f32 %v588, %v1429
        %v1431 = vand.u32 %v1430, 4294901760
        %1432 = vmatmul.mubr.f32.gmra.mrb[0].mxu0 %v1431
        %v1433 = vpop.f32.mrb[0].mxu0
        %v1434 = vadd.f32 %v1237, %v1433
        %v1435 = vpop.f32.mrb[0].mxu0
        %1436 = vmatprep.mubr.f32.mxu0 0.0
        %v1437 = vand.u32 %v589, 4294901760
        %v1438 = vsub.f32 %v589, %v1437
        %v1439 = vand.u32 %v1438, 4294901760
        %1440 = vmatmul.mubr.f32.gmra.mrb[0].mxu0 %v1439
        %v1441 = vpop.f32.mrb[0].mxu0
        %v1442 = vadd.f32 %v1244, %v1441
        %v1443 = vpop.f32.mrb[0].mxu0
        %1444 = vmatprep.mubr.f32.mxu0 0.0
        %v1445 = vand.u32 %v590, 4294901760
        %v1446 = vsub.f32 %v590, %v1445
        %v1447 = vand.u32 %v1446, 4294901760
        %1448 = vmatmul.mubr.f32.gmra.mrb[0].mxu0 %v1447
        %v1449 = vpop.f32.mrb[0].mxu0
        %v1450 = vadd.f32 %v1251, %v1449
        %v1451 = vpop.f32.mrb[0].mxu0
        %1452 = vmatprep.mubr.f32.mxu0 0.0
        %v1453 = vand.u32 %v591, 4294901760
        %v1454 = vsub.f32 %v591, %v1453
        %v1455 = vand.u32 %v1454, 4294901760
        %1456 = vmatmul.mubr.f32.gmra.mrb[0].mxu0 %v1455
        %v1457 = vpop.f32.mrb[0].mxu0
        %v1458 = vadd.f32 %v1258, %v1457
        %v1459 = vpop.f32.mrb[0].mxu0
        %1460 = vmatprep.mubr.f32.mxu0 0.0
        %v1461 = vand.u32 %v592, 4294901760
        %v1462 = vsub.f32 %v592, %v1461
        %v1463 = vand.u32 %v1462, 4294901760
        %1464 = vmatmul.mubr.f32.gmra.mrb[0].mxu0 %v1463
        %v1465 = vpop.f32.mrb[0].mxu0
        %v1466 = vadd.f32 %v1265, %v1465
        %v1467 = vpop.f32.mrb[0].mxu0
        %1468 = vmatprep.mubr.f32.mxu0 0.0
        %v1469 = vand.u32 %v593, 4294901760
        %v1470 = vsub.f32 %v593, %v1469
        %v1471 = vand.u32 %v1470, 4294901760
        %1472 = vmatmul.mubr.f32.gmra.mrb[0].mxu0 %v1471
        %v1473 = vpop.f32.mrb[0].mxu0
        %v1474 = vadd.f32 %v1272, %v1473
        %v1475 = vpop.f32.mrb[0].mxu0
        %1476 = vmatprep.mubr.f32.mxu0 0.0
        %v1477 = vand.u32 %v594, 4294901760
        %v1478 = vsub.f32 %v594, %v1477
        %v1479 = vand.u32 %v1478, 4294901760
        %1480 = vmatmul.mubr.f32.gmra.mrb[0].mxu0 %v1479
        %v1481 = vpop.f32.mrb[0].mxu0
        %v1482 = vadd.f32 %v1279, %v1481
        %v1483 = vpop.f32.mrb[0].mxu0
        %1484 = vmatprep.mubr.f32.mxu0 0.0
        %v1485 = vand.u32 %v595, 4294901760
        %v1486 = vsub.f32 %v595, %v1485
        %v1487 = vand.u32 %v1486, 4294901760
        %1488 = vmatmul.mubr.f32.gmra.mrb[0].mxu0 %v1487
        %v1489 = vpop.f32.mrb[0].mxu0
        %v1490 = vadd.f32 %v1286, %v1489
        %v1491 = vpop.f32.mrb[0].mxu0
        %1492 = vmatprep.mubr.f32.mxu0 0.0
        %v1493 = vand.u32 %v596, 4294901760
        %v1494 = vsub.f32 %v596, %v1493
        %v1495 = vand.u32 %v1494, 4294901760
        %1496 = vmatmul.mubr.f32.gmra.mrb[0].mxu0 %v1495
        %v1497 = vpop.f32.mrb[0].mxu0
        %v1498 = vadd.f32 %v1293, %v1497
        %v1499 = vpop.f32.mrb[0].mxu0
        %1500 = vmatprep.mubr.f32.mxu0 0.0
        %v1501 = vand.u32 %v597, 4294901760
        %v1502 = vsub.f32 %v597, %v1501
        %v1503 = vand.u32 %v1502, 4294901760
        %1504 = vmatmul.mubr.f32.gmra.mrb[0].mxu0 %v1503
        %v1505 = vpop.f32.mrb[0].mxu0
        %v1506 = vadd.f32 %v1300, %v1505
        %v1507 = vpop.f32.mrb[0].mxu0
        %1508 = vmatprep.mubr.f32.mxu0 0.0
        %v1509 = vand.u32 %v598, 4294901760
        %v1510 = vsub.f32 %v598, %v1509
        %v1511 = vand.u32 %v1510, 4294901760
        %1512 = vmatmul.mubr.f32.gmra.mrb[0].mxu0 %v1511
        %v1513 = vpop.f32.mrb[0].mxu0
        %v1514 = vadd.f32 %v1307, %v1513
        %v1515 = vpop.f32.mrb[0].mxu0
        %1516 = vmatprep.mubr.f32.mxu0 0.0
        %v1517 = vand.u32 %v599, 4294901760
        %v1518 = vsub.f32 %v599, %v1517
        %v1519 = vand.u32 %v1518, 4294901760
        %1520 = vmatmul.mubr.f32.gmra.mrb[0].mxu0 %v1519
        %v1521 = vpop.f32.mrb[0].mxu0
        %v1522 = vadd.f32 %v1314, %v1521
        %v1523 = vpop.f32.mrb[0].mxu0
        %1524 = vmatprep.mubr.f32.mxu0 0.0
        %v1525 = vand.u32 %v600, 4294901760
        %v1526 = vsub.f32 %v600, %v1525
        %v1527 = vand.u32 %v1526, 4294901760
        %1528 = vmatmul.mubr.f32.gmra.mrb[0].mxu0 %v1527
        %v1529 = vpop.f32.mrb[0].mxu0
        %v1530 = vadd.f32 %v1321, %v1529
        %v1531 = vpop.f32.mrb[0].mxu0
        %1532 = vdwg.mxu0
        %1533 = vmatprep.subr.mxu0 0.0
        %v1534 = vand.u32 %v617, 4294901760
        %v1535 = vsub.f32 %v617, %v1534
        %v1536 = vand.u32 %v1535, 4294901760
        %1537 = vmatpush1.msra.mxu0 %v1536
        %1538 = vmatprep.subr.mxu0 0.0
        %v1539 = vand.u32 %v618, 4294901760
        %v1540 = vsub.f32 %v618, %v1539
        %v1541 = vand.u32 %v1540, 4294901760
        %1542 = vmatpush1.msra.mxu0 %v1541
        %1543 = vmatprep.subr.mxu0 0.0
        %v1544 = vand.u32 %v619, 4294901760
        %v1545 = vsub.f32 %v619, %v1544
        %v1546 = vand.u32 %v1545, 4294901760
        %1547 = vmatpush1.msra.mxu0 %v1546
        %1548 = vmatprep.subr.mxu0 0.0
        %v1549 = vand.u32 %v620, 4294901760
        %v1550 = vsub.f32 %v620, %v1549
        %v1551 = vand.u32 %v1550, 4294901760
        %1552 = vmatpush1.msra.mxu0 %v1551
        %1553 = vmatprep.subr.mxu0 0.0
        %v1554 = vand.u32 %v621, 4294901760
        %v1555 = vsub.f32 %v621, %v1554
        %v1556 = vand.u32 %v1555, 4294901760
        %1557 = vmatpush1.msra.mxu0 %v1556
        %1558 = vmatprep.subr.mxu0 0.0
        %v1559 = vand.u32 %v622, 4294901760
        %v1560 = vsub.f32 %v622, %v1559
        %v1561 = vand.u32 %v1560, 4294901760
        %1562 = vmatpush1.msra.mxu0 %v1561
        %1563 = vmatprep.subr.mxu0 0.0
        %v1564 = vand.u32 %v623, 4294901760
        %v1565 = vsub.f32 %v623, %v1564
        %v1566 = vand.u32 %v1565, 4294901760
        %1567 = vmatpush1.msra.mxu0 %v1566
        %1568 = vmatprep.subr.mxu0 0.0
        %v1569 = vand.u32 %v624, 4294901760
        %v1570 = vsub.f32 %v624, %v1569
        %v1571 = vand.u32 %v1570, 4294901760
        %1572 = vmatpush1.msra.mxu0 %v1571
        %1573 = vmatprep.subr.mxu0 0.0
        %v1574 = vand.u32 %v625, 4294901760
        %v1575 = vsub.f32 %v625, %v1574
        %v1576 = vand.u32 %v1575, 4294901760
        %1577 = vmatpush1.msra.mxu0 %v1576
        %1578 = vmatprep.subr.mxu0 0.0
        %v1579 = vand.u32 %v626, 4294901760
        %v1580 = vsub.f32 %v626, %v1579
        %v1581 = vand.u32 %v1580, 4294901760
        %1582 = vmatpush1.msra.mxu0 %v1581
        %1583 = vmatprep.subr.mxu0 0.0
        %v1584 = vand.u32 %v627, 4294901760
        %v1585 = vsub.f32 %v627, %v1584
        %v1586 = vand.u32 %v1585, 4294901760
        %1587 = vmatpush1.msra.mxu0 %v1586
        %1588 = vmatprep.subr.mxu0 0.0
        %v1589 = vand.u32 %v628, 4294901760
        %v1590 = vsub.f32 %v628, %v1589
        %v1591 = vand.u32 %v1590, 4294901760
        %1592 = vmatpush1.msra.mxu0 %v1591
        %1593 = vmatprep.subr.mxu0 0.0
        %v1594 = vand.u32 %v629, 4294901760
        %v1595 = vsub.f32 %v629, %v1594
        %v1596 = vand.u32 %v1595, 4294901760
        %1597 = vmatpush1.msra.mxu0 %v1596
        %1598 = vmatprep.subr.mxu0 0.0
        %v1599 = vand.u32 %v630, 4294901760
        %v1600 = vsub.f32 %v630, %v1599
        %v1601 = vand.u32 %v1600, 4294901760
        %1602 = vmatpush1.msra.mxu0 %v1601
        %1603 = vmatprep.subr.mxu0 0.0
        %v1604 = vand.u32 %v631, 4294901760
        %v1605 = vsub.f32 %v631, %v1604
        %v1606 = vand.u32 %v1605, 4294901760
        %1607 = vmatpush1.msra.mxu0 %v1606
        %1608 = vmatprep.subr.mxu0 0.0
        %v1609 = vand.u32 %v632, 4294901760
        %v1610 = vsub.f32 %v632, %v1609
        %v1611 = vand.u32 %v1610, 4294901760
        %1612 = vmatpush1.msra.mxu0 %v1611
        %1613 = vmatprep.subr.mxu0 0.0
        %1614 = vmatpush1.msra.mxu0 0.0
        %1615 = vmatprep.subr.mxu0 0.0
        %1616 = vmatpush1.msra.mxu0 0.0
        %1617 = vmatprep.subr.mxu0 0.0
        %1618 = vmatpush1.msra.mxu0 0.0
        %1619 = vmatprep.subr.mxu0 0.0
        %1620 = vmatpush1.msra.mxu0 0.0
        %1621 = vmatprep.subr.mxu0 0.0
        %1622 = vmatpush1.msra.mxu0 0.0
        %1623 = vmatprep.subr.mxu0 0.0
        %1624 = vmatpush1.msra.mxu0 0.0
        %1625 = vmatprep.subr.mxu0 0.0
        %1626 = vmatpush1.msra.mxu0 0.0
        %1627 = vmatprep.subr.mxu0 0.0
        %1628 = vmatpush1.msra.mxu0 0.0
        %1629 = vmatprep.subr.mxu0 0.0
        %1630 = vmatpush1.msra.mxu0 0.0
        %1631 = vmatprep.subr.mxu0 0.0
        %1632 = vmatpush1.msra.mxu0 0.0
        %1633 = vmatprep.subr.mxu0 0.0
        %1634 = vmatpush1.msra.mxu0 0.0
        %1635 = vmatprep.subr.mxu0 0.0
        %1636 = vmatpush1.msra.mxu0 0.0
        %1637 = vmatprep.subr.mxu0 0.0
        %1638 = vmatpush1.msra.mxu0 0.0
        %1639 = vmatprep.subr.mxu0 0.0
        %1640 = vmatpush1.msra.mxu0 0.0
        %1641 = vmatprep.subr.mxu0 0.0
        %1642 = vmatpush1.msra.mxu0 0.0
        %1643 = vmatprep.subr.mxu0 0.0
        %1644 = vmatpush1.msra.mxu0 0.0
        %1645 = vmatprep.mubr.f32.mxu0 0.0
        %v1646 = vand.u32 %v585, 4294901760
        %1647 = vmatmul.mubr.f32.gmra.mrb[0].mxu0 %v1646
        %v1648 = vpop.f32.mrb[0].mxu0
        %v1649 = vadd.f32 %v1410, %v1648
        %v1650 = vpop.f32.mrb[0].mxu0
        %1651 = vmatprep.mubr.f32.mxu0 0.0
        %v1652 = vand.u32 %v586, 4294901760
        %1653 = vmatmul.mubr.f32.gmra.mrb[0].mxu0 %v1652
        %v1654 = vpop.f32.mrb[0].mxu0
        %v1655 = vadd.f32 %v1418, %v1654
        %v1656 = vpop.f32.mrb[0].mxu0
        %1657 = vmatprep.mubr.f32.mxu0 0.0
        %v1658 = vand.u32 %v587, 4294901760
        %1659 = vmatmul.mubr.f32.gmra.mrb[0].mxu0 %v1658
        %v1660 = vpop.f32.mrb[0].mxu0
        %v1661 = vadd.f32 %v1426, %v1660
        %v1662 = vpop.f32.mrb[0].mxu0
        %1663 = vmatprep.mubr.f32.mxu0 0.0
        %v1664 = vand.u32 %v588, 4294901760
        %1665 = vmatmul.mubr.f32.gmra.mrb[0].mxu0 %v1664
        %v1666 = vpop.f32.mrb[0].mxu0
        %v1667 = vadd.f32 %v1434, %v1666
        %v1668 = vpop.f32.mrb[0].mxu0
        %1669 = vmatprep.mubr.f32.mxu0 0.0
        %v1670 = vand.u32 %v589, 4294901760
        %1671 = vmatmul.mubr.f32.gmra.mrb[0].mxu0 %v1670
        %v1672 = vpop.f32.mrb[0].mxu0
        %v1673 = vadd.f32 %v1442, %v1672
        %v1674 = vpop.f32.mrb[0].mxu0
        %1675 = vmatprep.mubr.f32.mxu0 0.0
        %v1676 = vand.u32 %v590, 4294901760
        %1677 = vmatmul.mubr.f32.gmra.mrb[0].mxu0 %v1676
        %v1678 = vpop.f32.mrb[0].mxu0
        %v1679 = vadd.f32 %v1450, %v1678
        %v1680 = vpop.f32.mrb[0].mxu0
        %1681 = vmatprep.mubr.f32.mxu0 0.0
        %v1682 = vand.u32 %v591, 4294901760
        %1683 = vmatmul.mubr.f32.gmra.mrb[0].mxu0 %v1682
        %v1684 = vpop.f32.mrb[0].mxu0
        %v1685 = vadd.f32 %v1458, %v1684
        %v1686 = vpop.f32.mrb[0].mxu0
        %1687 = vmatprep.mubr.f32.mxu0 0.0
        %v1688 = vand.u32 %v592, 4294901760
        %1689 = vmatmul.mubr.f32.gmra.mrb[0].mxu0 %v1688
        %v1690 = vpop.f32.mrb[0].mxu0
        %v1691 = vadd.f32 %v1466, %v1690
        %v1692 = vpop.f32.mrb[0].mxu0
        %1693 = vmatprep.mubr.f32.mxu0 0.0
        %v1694 = vand.u32 %v593, 4294901760
        %1695 = vmatmul.mubr.f32.gmra.mrb[0].mxu0 %v1694
        %v1696 = vpop.f32.mrb[0].mxu0
        %v1697 = vadd.f32 %v1474, %v1696
        %v1698 = vpop.f32.mrb[0].mxu0
        %1699 = vmatprep.mubr.f32.mxu0 0.0
        %v1700 = vand.u32 %v594, 4294901760
        %1701 = vmatmul.mubr.f32.gmra.mrb[0].mxu0 %v1700
        %v1702 = vpop.f32.mrb[0].mxu0
        %v1703 = vadd.f32 %v1482, %v1702
        %v1704 = vpop.f32.mrb[0].mxu0
        %1705 = vmatprep.mubr.f32.mxu0 0.0
        %v1706 = vand.u32 %v595, 4294901760
        %1707 = vmatmul.mubr.f32.gmra.mrb[0].mxu0 %v1706
        %v1708 = vpop.f32.mrb[0].mxu0
        %v1709 = vadd.f32 %v1490, %v1708
        %v1710 = vpop.f32.mrb[0].mxu0
        %1711 = vmatprep.mubr.f32.mxu0 0.0
        %v1712 = vand.u32 %v596, 4294901760
        %1713 = vmatmul.mubr.f32.gmra.mrb[0].mxu0 %v1712
        %v1714 = vpop.f32.mrb[0].mxu0
        %v1715 = vadd.f32 %v1498, %v1714
        %v1716 = vpop.f32.mrb[0].mxu0
        %1717 = vmatprep.mubr.f32.mxu0 0.0
        %v1718 = vand.u32 %v597, 4294901760
        %1719 = vmatmul.mubr.f32.gmra.mrb[0].mxu0 %v1718
        %v1720 = vpop.f32.mrb[0].mxu0
        %v1721 = vadd.f32 %v1506, %v1720
        %v1722 = vpop.f32.mrb[0].mxu0
        %1723 = vmatprep.mubr.f32.mxu0 0.0
        %v1724 = vand.u32 %v598, 4294901760
        %1725 = vmatmul.mubr.f32.gmra.mrb[0].mxu0 %v1724
        %v1726 = vpop.f32.mrb[0].mxu0
        %v1727 = vadd.f32 %v1514, %v1726
        %v1728 = vpop.f32.mrb[0].mxu0
        %1729 = vmatprep.mubr.f32.mxu0 0.0
        %v1730 = vand.u32 %v599, 4294901760
        %1731 = vmatmul.mubr.f32.gmra.mrb[0].mxu0 %v1730
        %v1732 = vpop.f32.mrb[0].mxu0
        %v1733 = vadd.f32 %v1522, %v1732
        %v1734 = vpop.f32.mrb[0].mxu0
        %1735 = vmatprep.mubr.f32.mxu0 0.0
        %v1736 = vand.u32 %v600, 4294901760
        %1737 = vmatmul.mubr.f32.gmra.mrb[0].mxu0 %v1736
        %v1738 = vpop.f32.mrb[0].mxu0
        %v1739 = vadd.f32 %v1530, %v1738
        %v1740 = vpop.f32.mrb[0].mxu0
        %1741 = vdwg.mxu0
        %1742 = vmatprep.subr.mxu0 0.0
        %v1743 = vand.u32 %v617, 4294901760
        %1744 = vmatpush1.msra.mxu0 %v1743
        %1745 = vmatprep.subr.mxu0 0.0
        %v1746 = vand.u32 %v618, 4294901760
        %1747 = vmatpush1.msra.mxu0 %v1746
        %1748 = vmatprep.subr.mxu0 0.0
        %v1749 = vand.u32 %v619, 4294901760
        %1750 = vmatpush1.msra.mxu0 %v1749
        %1751 = vmatprep.subr.mxu0 0.0
        %v1752 = vand.u32 %v620, 4294901760
        %1753 = vmatpush1.msra.mxu0 %v1752
        %1754 = vmatprep.subr.mxu0 0.0
        %v1755 = vand.u32 %v621, 4294901760
        %1756 = vmatpush1.msra.mxu0 %v1755
        %1757 = vmatprep.subr.mxu0 0.0
        %v1758 = vand.u32 %v622, 4294901760
        %1759 = vmatpush1.msra.mxu0 %v1758
        %1760 = vmatprep.subr.mxu0 0.0
        %v1761 = vand.u32 %v623, 4294901760
        %1762 = vmatpush1.msra.mxu0 %v1761
        %1763 = vmatprep.subr.mxu0 0.0
        %v1764 = vand.u32 %v624, 4294901760
        %1765 = vmatpush1.msra.mxu0 %v1764
        %1766 = vmatprep.subr.mxu0 0.0
        %v1767 = vand.u32 %v625, 4294901760
        %1768 = vmatpush1.msra.mxu0 %v1767
        %1769 = vmatprep.subr.mxu0 0.0
        %v1770 = vand.u32 %v626, 4294901760
        %1771 = vmatpush1.msra.mxu0 %v1770
        %1772 = vmatprep.subr.mxu0 0.0
        %v1773 = vand.u32 %v627, 4294901760
        %1774 = vmatpush1.msra.mxu0 %v1773
        %1775 = vmatprep.subr.mxu0 0.0
        %v1776 = vand.u32 %v628, 4294901760
        %1777 = vmatpush1.msra.mxu0 %v1776
        %1778 = vmatprep.subr.mxu0 0.0
        %v1779 = vand.u32 %v629, 4294901760
        %1780 = vmatpush1.msra.mxu0 %v1779
        %1781 = vmatprep.subr.mxu0 0.0
        %v1782 = vand.u32 %v630, 4294901760
        %1783 = vmatpush1.msra.mxu0 %v1782
        %1784 = vmatprep.subr.mxu0 0.0
        %v1785 = vand.u32 %v631, 4294901760
        %1786 = vmatpush1.msra.mxu0 %v1785
        %1787 = vmatprep.subr.mxu0 0.0
        %v1788 = vand.u32 %v632, 4294901760
        %1789 = vmatpush1.msra.mxu0 %v1788
        %1790 = vmatprep.subr.mxu0 0.0
        %1791 = vmatpush1.msra.mxu0 0.0
        %1792 = vmatprep.subr.mxu0 0.0
        %1793 = vmatpush1.msra.mxu0 0.0
        %1794 = vmatprep.subr.mxu0 0.0
        %1795 = vmatpush1.msra.mxu0 0.0
        %1796 = vmatprep.subr.mxu0 0.0
        %1797 = vmatpush1.msra.mxu0 0.0
        %1798 = vmatprep.subr.mxu0 0.0
        %1799 = vmatpush1.msra.mxu0 0.0
        %1800 = vmatprep.subr.mxu0 0.0
        %1801 = vmatpush1.msra.mxu0 0.0
        %1802 = vmatprep.subr.mxu0 0.0
        %1803 = vmatpush1.msra.mxu0 0.0
        %1804 = vmatprep.subr.mxu0 0.0
        %1805 = vmatpush1.msra.mxu0 0.0
        %1806 = vmatprep.subr.mxu0 0.0
        %1807 = vmatpush1.msra.mxu0 0.0
        %1808 = vmatprep.subr.mxu0 0.0
        %1809 = vmatpush1.msra.mxu0 0.0
        %1810 = vmatprep.subr.mxu0 0.0
        %1811 = vmatpush1.msra.mxu0 0.0
        %1812 = vmatprep.subr.mxu0 0.0
        %1813 = vmatpush1.msra.mxu0 0.0
        %1814 = vmatprep.subr.mxu0 0.0
        %1815 = vmatpush1.msra.mxu0 0.0
        %1816 = vmatprep.subr.mxu0 0.0
        %1817 = vmatpush1.msra.mxu0 0.0
        %1818 = vmatprep.subr.mxu0 0.0
        %1819 = vmatpush1.msra.mxu0 0.0
        %1820 = vmatprep.subr.mxu0 0.0
        %1821 = vmatpush1.msra.mxu0 0.0
        %1822 = vmatprep.mubr.f32.mxu0 0.0
        %v1823 = vand.u32 %v585, 4294901760
        %1824 = vmatmul.mubr.f32.gmra.mrb[0].mxu0 %v1823
        %v1825 = vpop.f32.mrb[0].mxu0
        %v1826 = vadd.f32 %v1649, %v1825
        %v1827 = vpop.f32.mrb[0].mxu0
        %1828 = vmatprep.mubr.f32.mxu0 0.0
        %v1829 = vand.u32 %v586, 4294901760
        %1830 = vmatmul.mubr.f32.gmra.mrb[0].mxu0 %v1829
        %v1831 = vpop.f32.mrb[0].mxu0
        %v1832 = vadd.f32 %v1655, %v1831
        %v1833 = vpop.f32.mrb[0].mxu0
        %1834 = vmatprep.mubr.f32.mxu0 0.0
        %v1835 = vand.u32 %v587, 4294901760
        %1836 = vmatmul.mubr.f32.gmra.mrb[0].mxu0 %v1835
        %v1837 = vpop.f32.mrb[0].mxu0
        %v1838 = vadd.f32 %v1661, %v1837
        %v1839 = vpop.f32.mrb[0].mxu0
        %1840 = vmatprep.mubr.f32.mxu0 0.0
        %v1841 = vand.u32 %v588, 4294901760
        %1842 = vmatmul.mubr.f32.gmra.mrb[0].mxu0 %v1841
        %v1843 = vpop.f32.mrb[0].mxu0
        %v1844 = vadd.f32 %v1667, %v1843
        %v1845 = vpop.f32.mrb[0].mxu0
        %1846 = vmatprep.mubr.f32.mxu0 0.0
        %v1847 = vand.u32 %v589, 4294901760
        %1848 = vmatmul.mubr.f32.gmra.mrb[0].mxu0 %v1847
        %v1849 = vpop.f32.mrb[0].mxu0
        %v1850 = vadd.f32 %v1673, %v1849
        %v1851 = vpop.f32.mrb[0].mxu0
        %1852 = vmatprep.mubr.f32.mxu0 0.0
        %v1853 = vand.u32 %v590, 4294901760
        %1854 = vmatmul.mubr.f32.gmra.mrb[0].mxu0 %v1853
        %v1855 = vpop.f32.mrb[0].mxu0
        %v1856 = vadd.f32 %v1679, %v1855
        %v1857 = vpop.f32.mrb[0].mxu0
        %1858 = vmatprep.mubr.f32.mxu0 0.0
        %v1859 = vand.u32 %v591, 4294901760
        %1860 = vmatmul.mubr.f32.gmra.mrb[0].mxu0 %v1859
        %v1861 = vpop.f32.mrb[0].mxu0
        %v1862 = vadd.f32 %v1685, %v1861
        %v1863 = vpop.f32.mrb[0].mxu0
        %1864 = vmatprep.mubr.f32.mxu0 0.0
        %v1865 = vand.u32 %v592, 4294901760
        %1866 = vmatmul.mubr.f32.gmra.mrb[0].mxu0 %v1865
        %v1867 = vpop.f32.mrb[0].mxu0
        %v1868 = vadd.f32 %v1691, %v1867
        %v1869 = vpop.f32.mrb[0].mxu0
        %1870 = vmatprep.mubr.f32.mxu0 0.0
        %v1871 = vand.u32 %v593, 4294901760
        %1872 = vmatmul.mubr.f32.gmra.mrb[0].mxu0 %v1871
        %v1873 = vpop.f32.mrb[0].mxu0
        %v1874 = vadd.f32 %v1697, %v1873
        %v1875 = vpop.f32.mrb[0].mxu0
        %1876 = vmatprep.mubr.f32.mxu0 0.0
        %v1877 = vand.u32 %v594, 4294901760
        %1878 = vmatmul.mubr.f32.gmra.mrb[0].mxu0 %v1877
        %v1879 = vpop.f32.mrb[0].mxu0
        %v1880 = vadd.f32 %v1703, %v1879
        %v1881 = vpop.f32.mrb[0].mxu0
        %1882 = vmatprep.mubr.f32.mxu0 0.0
        %v1883 = vand.u32 %v595, 4294901760
        %1884 = vmatmul.mubr.f32.gmra.mrb[0].mxu0 %v1883
        %v1885 = vpop.f32.mrb[0].mxu0
        %v1886 = vadd.f32 %v1709, %v1885
        %v1887 = vpop.f32.mrb[0].mxu0
        %1888 = vmatprep.mubr.f32.mxu0 0.0
        %v1889 = vand.u32 %v596, 4294901760
        %1890 = vmatmul.mubr.f32.gmra.mrb[0].mxu0 %v1889
        %v1891 = vpop.f32.mrb[0].mxu0
        %v1892 = vadd.f32 %v1715, %v1891
        %v1893 = vpop.f32.mrb[0].mxu0
        %1894 = vmatprep.mubr.f32.mxu0 0.0
        %v1895 = vand.u32 %v597, 4294901760
        %1896 = vmatmul.mubr.f32.gmra.mrb[0].mxu0 %v1895
        %v1897 = vpop.f32.mrb[0].mxu0
        %v1898 = vadd.f32 %v1721, %v1897
        %v1899 = vpop.f32.mrb[0].mxu0
        %1900 = vmatprep.mubr.f32.mxu0 0.0
        %v1901 = vand.u32 %v598, 4294901760
        %1902 = vmatmul.mubr.f32.gmra.mrb[0].mxu0 %v1901
        %v1903 = vpop.f32.mrb[0].mxu0
        %v1904 = vadd.f32 %v1727, %v1903
        %v1905 = vpop.f32.mrb[0].mxu0
        %1906 = vmatprep.mubr.f32.mxu0 0.0
        %v1907 = vand.u32 %v599, 4294901760
        %1908 = vmatmul.mubr.f32.gmra.mrb[0].mxu0 %v1907
        %v1909 = vpop.f32.mrb[0].mxu0
        %v1910 = vadd.f32 %v1733, %v1909
        %v1911 = vpop.f32.mrb[0].mxu0
        %1912 = vmatprep.mubr.f32.mxu0 0.0
        %v1913 = vand.u32 %v600, 4294901760
        %1914 = vmatmul.mubr.f32.gmra.mrb[0].mxu0 %v1913
        %v1915 = vpop.f32.mrb[0].mxu0
        %v1916 = vadd.f32 %v1739, %v1915
        %v1917 = vpop.f32.mrb[0].mxu0
        %1918 = vdwg.mxu0
        %1919 = vmatprep.subr.mxu0 0.0
        %v1920 = vand.u32 %v601, 4294901760
        %1921 = vmatpush1.msra.mxu0 %v1920
        %1922 = vmatprep.subr.mxu0 0.0
        %v1923 = vand.u32 %v602, 4294901760
        %1924 = vmatpush1.msra.mxu0 %v1923
        %1925 = vmatprep.subr.mxu0 0.0
        %v1926 = vand.u32 %v603, 4294901760
        %1927 = vmatpush1.msra.mxu0 %v1926
        %1928 = vmatprep.subr.mxu0 0.0
        %v1929 = vand.u32 %v604, 4294901760
        %1930 = vmatpush1.msra.mxu0 %v1929
        %1931 = vmatprep.subr.mxu0 0.0
        %v1932 = vand.u32 %v605, 4294901760
        %1933 = vmatpush1.msra.mxu0 %v1932
        %1934 = vmatprep.subr.mxu0 0.0
        %v1935 = vand.u32 %v606, 4294901760
        %1936 = vmatpush1.msra.mxu0 %v1935
        %1937 = vmatprep.subr.mxu0 0.0
        %v1938 = vand.u32 %v607, 4294901760
        %1939 = vmatpush1.msra.mxu0 %v1938
        %1940 = vmatprep.subr.mxu0 0.0
        %v1941 = vand.u32 %v608, 4294901760
        %1942 = vmatpush1.msra.mxu0 %v1941
        %1943 = vmatprep.subr.mxu0 0.0
        %v1944 = vand.u32 %v609, 4294901760
        %1945 = vmatpush1.msra.mxu0 %v1944
        %1946 = vmatprep.subr.mxu0 0.0
        %v1947 = vand.u32 %v610, 4294901760
        %1948 = vmatpush1.msra.mxu0 %v1947
        %1949 = vmatprep.subr.mxu0 0.0
        %v1950 = vand.u32 %v611, 4294901760
        %1951 = vmatpush1.msra.mxu0 %v1950
        %1952 = vmatprep.subr.mxu0 0.0
        %v1953 = vand.u32 %v612, 4294901760
        %1954 = vmatpush1.msra.mxu0 %v1953
        %1955 = vmatprep.subr.mxu0 0.0
        %v1956 = vand.u32 %v613, 4294901760
        %1957 = vmatpush1.msra.mxu0 %v1956
        %1958 = vmatprep.subr.mxu0 0.0
        %v1959 = vand.u32 %v614, 4294901760
        %1960 = vmatpush1.msra.mxu0 %v1959
        %1961 = vmatprep.subr.mxu0 0.0
        %v1962 = vand.u32 %v615, 4294901760
        %1963 = vmatpush1.msra.mxu0 %v1962
        %1964 = vmatprep.subr.mxu0 0.0
        %v1965 = vand.u32 %v616, 4294901760
        %1966 = vmatpush1.msra.mxu0 %v1965
        %1967 = vmatprep.subr.mxu0 0.0
        %1968 = vmatpush1.msra.mxu0 0.0
        %1969 = vmatprep.subr.mxu0 0.0
        %1970 = vmatpush1.msra.mxu0 0.0
        %1971 = vmatprep.subr.mxu0 0.0
        %1972 = vmatpush1.msra.mxu0 0.0
        %1973 = vmatprep.subr.mxu0 0.0
        %1974 = vmatpush1.msra.mxu0 0.0
        %1975 = vmatprep.subr.mxu0 0.0
        %1976 = vmatpush1.msra.mxu0 0.0
        %1977 = vmatprep.subr.mxu0 0.0
        %1978 = vmatpush1.msra.mxu0 0.0
        %1979 = vmatprep.subr.mxu0 0.0
        %1980 = vmatpush1.msra.mxu0 0.0
        %1981 = vmatprep.subr.mxu0 0.0
        %1982 = vmatpush1.msra.mxu0 0.0
        %1983 = vmatprep.subr.mxu0 0.0
        %1984 = vmatpush1.msra.mxu0 0.0
        %1985 = vmatprep.subr.mxu0 0.0
        %1986 = vmatpush1.msra.mxu0 0.0
        %1987 = vmatprep.subr.mxu0 0.0
        %1988 = vmatpush1.msra.mxu0 0.0
        %1989 = vmatprep.subr.mxu0 0.0
        %1990 = vmatpush1.msra.mxu0 0.0
        %1991 = vmatprep.subr.mxu0 0.0
        %1992 = vmatpush1.msra.mxu0 0.0
        %1993 = vmatprep.subr.mxu0 0.0
        %1994 = vmatpush1.msra.mxu0 0.0
        %1995 = vmatprep.subr.mxu0 0.0
        %1996 = vmatpush1.msra.mxu0 0.0
        %1997 = vmatprep.subr.mxu0 0.0
        %1998 = vmatpush1.msra.mxu0 0.0
        %1999 = vmatprep.mubr.f32.mxu0 0.0
        %v2000 = vand.u32 %v489, 4294901760
        %v2001 = vsub.f32 %v489, %v2000
        %v2002 = vand.u32 %v2001, 4294901760
        %v2003 = vsub.f32 %v2001, %v2002
        %v2004 = vand.u32 %v2003, 4294901760
        %2005 = vmatmul.mubr.f32.gmra.mrb[0].mxu0 %v2004
        %v2006 = vpop.f32.mrb[0].mxu0
        %v2007 = vadd.f32 %v1826, %v2006
        %v2008 = vpop.f32.mrb[0].mxu0
        %2009 = vmatprep.mubr.f32.mxu0 0.0
        %v2010 = vand.u32 %v490, 4294901760
        %v2011 = vsub.f32 %v490, %v2010
        %v2012 = vand.u32 %v2011, 4294901760
        %v2013 = vsub.f32 %v2011, %v2012
        %v2014 = vand.u32 %v2013, 4294901760
        %2015 = vmatmul.mubr.f32.gmra.mrb[0].mxu0 %v2014
        %v2016 = vpop.f32.mrb[0].mxu0
        %v2017 = vadd.f32 %v1832, %v2016
        %v2018 = vpop.f32.mrb[0].mxu0
        %2019 = vmatprep.mubr.f32.mxu0 0.0
        %v2020 = vand.u32 %v491, 4294901760
        %v2021 = vsub.f32 %v491, %v2020
        %v2022 = vand.u32 %v2021, 4294901760
        %v2023 = vsub.f32 %v2021, %v2022
        %v2024 = vand.u32 %v2023, 4294901760
        %2025 = vmatmul.mubr.f32.gmra.mrb[0].mxu0 %v2024
        %v2026 = vpop.f32.mrb[0].mxu0
        %v2027 = vadd.f32 %v1838, %v2026
        %v2028 = vpop.f32.mrb[0].mxu0
        %2029 = vmatprep.mubr.f32.mxu0 0.0
        %v2030 = vand.u32 %v492, 4294901760
        %v2031 = vsub.f32 %v492, %v2030
        %v2032 = vand.u32 %v2031, 4294901760
        %v2033 = vsub.f32 %v2031, %v2032
        %v2034 = vand.u32 %v2033, 4294901760
        %2035 = vmatmul.mubr.f32.gmra.mrb[0].mxu0 %v2034
        %v2036 = vpop.f32.mrb[0].mxu0
        %v2037 = vadd.f32 %v1844, %v2036
        %v2038 = vpop.f32.mrb[0].mxu0
        %2039 = vmatprep.mubr.f32.mxu0 0.0
        %v2040 = vand.u32 %v493, 4294901760
        %v2041 = vsub.f32 %v493, %v2040
        %v2042 = vand.u32 %v2041, 4294901760
        %v2043 = vsub.f32 %v2041, %v2042
        %v2044 = vand.u32 %v2043, 4294901760
        %2045 = vmatmul.mubr.f32.gmra.mrb[0].mxu0 %v2044
        %v2046 = vpop.f32.mrb[0].mxu0
        %v2047 = vadd.f32 %v1850, %v2046
        %v2048 = vpop.f32.mrb[0].mxu0
        %2049 = vmatprep.mubr.f32.mxu0 0.0
        %v2050 = vand.u32 %v494, 4294901760
        %v2051 = vsub.f32 %v494, %v2050
        %v2052 = vand.u32 %v2051, 4294901760
        %v2053 = vsub.f32 %v2051, %v2052
        %v2054 = vand.u32 %v2053, 4294901760
        %2055 = vmatmul.mubr.f32.gmra.mrb[0].mxu0 %v2054
        %v2056 = vpop.f32.mrb[0].mxu0
        %v2057 = vadd.f32 %v1856, %v2056
        %v2058 = vpop.f32.mrb[0].mxu0
        %2059 = vmatprep.mubr.f32.mxu0 0.0
        %v2060 = vand.u32 %v495, 4294901760
        %v2061 = vsub.f32 %v495, %v2060
        %v2062 = vand.u32 %v2061, 4294901760
        %v2063 = vsub.f32 %v2061, %v2062
        %v2064 = vand.u32 %v2063, 4294901760
        %2065 = vmatmul.mubr.f32.gmra.mrb[0].mxu0 %v2064
        %v2066 = vpop.f32.mrb[0].mxu0
        %v2067 = vadd.f32 %v1862, %v2066
        %v2068 = vpop.f32.mrb[0].mxu0
        %2069 = vmatprep.mubr.f32.mxu0 0.0
        %v2070 = vand.u32 %v496, 4294901760
        %v2071 = vsub.f32 %v496, %v2070
        %v2072 = vand.u32 %v2071, 4294901760
        %v2073 = vsub.f32 %v2071, %v2072
        %v2074 = vand.u32 %v2073, 4294901760
        %2075 = vmatmul.mubr.f32.gmra.mrb[0].mxu0 %v2074
        %v2076 = vpop.f32.mrb[0].mxu0
        %v2077 = vadd.f32 %v1868, %v2076
        %v2078 = vpop.f32.mrb[0].mxu0
        %2079 = vmatprep.mubr.f32.mxu0 0.0
        %v2080 = vand.u32 %v497, 4294901760
        %v2081 = vsub.f32 %v497, %v2080
        %v2082 = vand.u32 %v2081, 4294901760
        %v2083 = vsub.f32 %v2081, %v2082
        %v2084 = vand.u32 %v2083, 4294901760
        %2085 = vmatmul.mubr.f32.gmra.mrb[0].mxu0 %v2084
        %v2086 = vpop.f32.mrb[0].mxu0
        %v2087 = vadd.f32 %v1874, %v2086
        %v2088 = vpop.f32.mrb[0].mxu0
        %2089 = vmatprep.mubr.f32.mxu0 0.0
        %v2090 = vand.u32 %v498, 4294901760
        %v2091 = vsub.f32 %v498, %v2090
        %v2092 = vand.u32 %v2091, 4294901760
        %v2093 = vsub.f32 %v2091, %v2092
        %v2094 = vand.u32 %v2093, 4294901760
        %2095 = vmatmul.mubr.f32.gmra.mrb[0].mxu0 %v2094
        %v2096 = vpop.f32.mrb[0].mxu0
        %v2097 = vadd.f32 %v1880, %v2096
        %v2098 = vpop.f32.mrb[0].mxu0
        %2099 = vmatprep.mubr.f32.mxu0 0.0
        %v2100 = vand.u32 %v499, 4294901760
        %v2101 = vsub.f32 %v499, %v2100
        %v2102 = vand.u32 %v2101, 4294901760
        %v2103 = vsub.f32 %v2101, %v2102
        %v2104 = vand.u32 %v2103, 4294901760
        %2105 = vmatmul.mubr.f32.gmra.mrb[0].mxu0 %v2104
        %v2106 = vpop.f32.mrb[0].mxu0
        %v2107 = vadd.f32 %v1886, %v2106
        %v2108 = vpop.f32.mrb[0].mxu0
        %2109 = vmatprep.mubr.f32.mxu0 0.0
        %v2110 = vand.u32 %v500, 4294901760
        %v2111 = vsub.f32 %v500, %v2110
        %v2112 = vand.u32 %v2111, 4294901760
        %v2113 = vsub.f32 %v2111, %v2112
        %v2114 = vand.u32 %v2113, 4294901760
        %2115 = vmatmul.mubr.f32.gmra.mrb[0].mxu0 %v2114
        %v2116 = vpop.f32.mrb[0].mxu0
        %v2117 = vadd.f32 %v1892, %v2116
        %v2118 = vpop.f32.mrb[0].mxu0
        %2119 = vmatprep.mubr.f32.mxu0 0.0
        %v2120 = vand.u32 %v501, 4294901760
        %v2121 = vsub.f32 %v501, %v2120
        %v2122 = vand.u32 %v2121, 4294901760
        %v2123 = vsub.f32 %v2121, %v2122
        %v2124 = vand.u32 %v2123, 4294901760
        %2125 = vmatmul.mubr.f32.gmra.mrb[0].mxu0 %v2124
        %v2126 = vpop.f32.mrb[0].mxu0
        %v2127 = vadd.f32 %v1898, %v2126
        %v2128 = vpop.f32.mrb[0].mxu0
        %2129 = vmatprep.mubr.f32.mxu0 0.0
        %v2130 = vand.u32 %v502, 4294901760
        %v2131 = vsub.f32 %v502, %v2130
        %v2132 = vand.u32 %v2131, 4294901760
        %v2133 = vsub.f32 %v2131, %v2132
        %v2134 = vand.u32 %v2133, 4294901760
        %2135 = vmatmul.mubr.f32.gmra.mrb[0].mxu0 %v2134
        %v2136 = vpop.f32.mrb[0].mxu0
        %v2137 = vadd.f32 %v1904, %v2136
        %v2138 = vpop.f32.mrb[0].mxu0
        %2139 = vmatprep.mubr.f32.mxu0 0.0
        %v2140 = vand.u32 %v503, 4294901760
        %v2141 = vsub.f32 %v503, %v2140
        %v2142 = vand.u32 %v2141, 4294901760
        %v2143 = vsub.f32 %v2141, %v2142
        %v2144 = vand.u32 %v2143, 4294901760
        %2145 = vmatmul.mubr.f32.gmra.mrb[0].mxu0 %v2144
        %v2146 = vpop.f32.mrb[0].mxu0
        %v2147 = vadd.f32 %v1910, %v2146
        %v2148 = vpop.f32.mrb[0].mxu0
        %2149 = vmatprep.mubr.f32.mxu0 0.0
        %v2150 = vand.u32 %v504, 4294901760
        %v2151 = vsub.f32 %v504, %v2150
        %v2152 = vand.u32 %v2151, 4294901760
        %v2153 = vsub.f32 %v2151, %v2152
        %v2154 = vand.u32 %v2153, 4294901760
        %2155 = vmatmul.mubr.f32.gmra.mrb[0].mxu0 %v2154
        %v2156 = vpop.f32.mrb[0].mxu0
        %v2157 = vadd.f32 %v1916, %v2156
        %v2158 = vpop.f32.mrb[0].mxu0
        %2159 = vdwg.mxu0
        %2160 = vmatprep.subr.mxu0 0.0
        %v2161 = vand.u32 %v601, 4294901760
        %v2162 = vsub.f32 %v601, %v2161
        %v2163 = vand.u32 %v2162, 4294901760
        %v2164 = vsub.f32 %v2162, %v2163
        %v2165 = vand.u32 %v2164, 4294901760
        %2166 = vmatpush1.msra.mxu0 %v2165
        %2167 = vmatprep.subr.mxu0 0.0
        %v2168 = vand.u32 %v602, 4294901760
        %v2169 = vsub.f32 %v602, %v2168
        %v2170 = vand.u32 %v2169, 4294901760
        %v2171 = vsub.f32 %v2169, %v2170
        %v2172 = vand.u32 %v2171, 4294901760
        %2173 = vmatpush1.msra.mxu0 %v2172
        %2174 = vmatprep.subr.mxu0 0.0
        %v2175 = vand.u32 %v603, 4294901760
        %v2176 = vsub.f32 %v603, %v2175
        %v2177 = vand.u32 %v2176, 4294901760
        %v2178 = vsub.f32 %v2176, %v2177
        %v2179 = vand.u32 %v2178, 4294901760
        %2180 = vmatpush1.msra.mxu0 %v2179
        %2181 = vmatprep.subr.mxu0 0.0
        %v2182 = vand.u32 %v604, 4294901760
        %v2183 = vsub.f32 %v604, %v2182
        %v2184 = vand.u32 %v2183, 4294901760
        %v2185 = vsub.f32 %v2183, %v2184
        %v2186 = vand.u32 %v2185, 4294901760
        %2187 = vmatpush1.msra.mxu0 %v2186
        %2188 = vmatprep.subr.mxu0 0.0
        %v2189 = vand.u32 %v605, 4294901760
        %v2190 = vsub.f32 %v605, %v2189
        %v2191 = vand.u32 %v2190, 4294901760
        %v2192 = vsub.f32 %v2190, %v2191
        %v2193 = vand.u32 %v2192, 4294901760
        %2194 = vmatpush1.msra.mxu0 %v2193
        %2195 = vmatprep.subr.mxu0 0.0
        %v2196 = vand.u32 %v606, 4294901760
        %v2197 = vsub.f32 %v606, %v2196
        %v2198 = vand.u32 %v2197, 4294901760
        %v2199 = vsub.f32 %v2197, %v2198
        %v2200 = vand.u32 %v2199, 4294901760
        %2201 = vmatpush1.msra.mxu0 %v2200
        %2202 = vmatprep.subr.mxu0 0.0
        %v2203 = vand.u32 %v607, 4294901760
        %v2204 = vsub.f32 %v607, %v2203
        %v2205 = vand.u32 %v2204, 4294901760
        %v2206 = vsub.f32 %v2204, %v2205
        %v2207 = vand.u32 %v2206, 4294901760
        %2208 = vmatpush1.msra.mxu0 %v2207
        %2209 = vmatprep.subr.mxu0 0.0
        %v2210 = vand.u32 %v608, 4294901760
        %v2211 = vsub.f32 %v608, %v2210
        %v2212 = vand.u32 %v2211, 4294901760
        %v2213 = vsub.f32 %v2211, %v2212
        %v2214 = vand.u32 %v2213, 4294901760
        %2215 = vmatpush1.msra.mxu0 %v2214
        %2216 = vmatprep.subr.mxu0 0.0
        %v2217 = vand.u32 %v609, 4294901760
        %v2218 = vsub.f32 %v609, %v2217
        %v2219 = vand.u32 %v2218, 4294901760
        %v2220 = vsub.f32 %v2218, %v2219
        %v2221 = vand.u32 %v2220, 4294901760
        %2222 = vmatpush1.msra.mxu0 %v2221
        %2223 = vmatprep.subr.mxu0 0.0
        %v2224 = vand.u32 %v610, 4294901760
        %v2225 = vsub.f32 %v610, %v2224
        %v2226 = vand.u32 %v2225, 4294901760
        %v2227 = vsub.f32 %v2225, %v2226
        %v2228 = vand.u32 %v2227, 4294901760
        %2229 = vmatpush1.msra.mxu0 %v2228
        %2230 = vmatprep.subr.mxu0 0.0
        %v2231 = vand.u32 %v611, 4294901760
        %v2232 = vsub.f32 %v611, %v2231
        %v2233 = vand.u32 %v2232, 4294901760
        %v2234 = vsub.f32 %v2232, %v2233
        %v2235 = vand.u32 %v2234, 4294901760
        %2236 = vmatpush1.msra.mxu0 %v2235
        %2237 = vmatprep.subr.mxu0 0.0
        %v2238 = vand.u32 %v612, 4294901760
        %v2239 = vsub.f32 %v612, %v2238
        %v2240 = vand.u32 %v2239, 4294901760
        %v2241 = vsub.f32 %v2239, %v2240
        %v2242 = vand.u32 %v2241, 4294901760
        %2243 = vmatpush1.msra.mxu0 %v2242
        %2244 = vmatprep.subr.mxu0 0.0
        %v2245 = vand.u32 %v613, 4294901760
        %v2246 = vsub.f32 %v613, %v2245
        %v2247 = vand.u32 %v2246, 4294901760
        %v2248 = vsub.f32 %v2246, %v2247
        %v2249 = vand.u32 %v2248, 4294901760
        %2250 = vmatpush1.msra.mxu0 %v2249
        %2251 = vmatprep.subr.mxu0 0.0
        %v2252 = vand.u32 %v614, 4294901760
        %v2253 = vsub.f32 %v614, %v2252
        %v2254 = vand.u32 %v2253, 4294901760
        %v2255 = vsub.f32 %v2253, %v2254
        %v2256 = vand.u32 %v2255, 4294901760
        %2257 = vmatpush1.msra.mxu0 %v2256
        %2258 = vmatprep.subr.mxu0 0.0
        %v2259 = vand.u32 %v615, 4294901760
        %v2260 = vsub.f32 %v615, %v2259
        %v2261 = vand.u32 %v2260, 4294901760
        %v2262 = vsub.f32 %v2260, %v2261
        %v2263 = vand.u32 %v2262, 4294901760
        %2264 = vmatpush1.msra.mxu0 %v2263
        %2265 = vmatprep.subr.mxu0 0.0
        %v2266 = vand.u32 %v616, 4294901760
        %v2267 = vsub.f32 %v616, %v2266
        %v2268 = vand.u32 %v2267, 4294901760
        %v2269 = vsub.f32 %v2267, %v2268
        %v2270 = vand.u32 %v2269, 4294901760
        %2271 = vmatpush1.msra.mxu0 %v2270
        %2272 = vmatprep.subr.mxu0 0.0
        %2273 = vmatpush1.msra.mxu0 0.0
        %2274 = vmatprep.subr.mxu0 0.0
        %2275 = vmatpush1.msra.mxu0 0.0
        %2276 = vmatprep.subr.mxu0 0.0
        %2277 = vmatpush1.msra.mxu0 0.0
        %2278 = vmatprep.subr.mxu0 0.0
        %2279 = vmatpush1.msra.mxu0 0.0
        %2280 = vmatprep.subr.mxu0 0.0
        %2281 = vmatpush1.msra.mxu0 0.0
        %2282 = vmatprep.subr.mxu0 0.0
        %2283 = vmatpush1.msra.mxu0 0.0
        %2284 = vmatprep.subr.mxu0 0.0
        %2285 = vmatpush1.msra.mxu0 0.0
        %2286 = vmatprep.subr.mxu0 0.0
        %2287 = vmatpush1.msra.mxu0 0.0
        %2288 = vmatprep.subr.mxu0 0.0
        %2289 = vmatpush1.msra.mxu0 0.0
        %2290 = vmatprep.subr.mxu0 0.0
        %2291 = vmatpush1.msra.mxu0 0.0
        %2292 = vmatprep.subr.mxu0 0.0
        %2293 = vmatpush1.msra.mxu0 0.0
        %2294 = vmatprep.subr.mxu0 0.0
        %2295 = vmatpush1.msra.mxu0 0.0
        %2296 = vmatprep.subr.mxu0 0.0
        %2297 = vmatpush1.msra.mxu0 0.0
        %2298 = vmatprep.subr.mxu0 0.0
        %2299 = vmatpush1.msra.mxu0 0.0
        %2300 = vmatprep.subr.mxu0 0.0
        %2301 = vmatpush1.msra.mxu0 0.0
        %2302 = vmatprep.subr.mxu0 0.0
        %2303 = vmatpush1.msra.mxu0 0.0
        %2304 = vmatprep.mubr.f32.mxu0 0.0
        %v2305 = vand.u32 %v489, 4294901760
        %2306 = vmatmul.mubr.f32.gmra.mrb[0].mxu0 %v2305
        %v2307 = vpop.f32.mrb[0].mxu0
        %v2308 = vadd.f32 %v2007, %v2307
        %v2309 = vpop.f32.mrb[0].mxu0
        %2310 = vmatprep.mubr.f32.mxu0 0.0
        %v2311 = vand.u32 %v490, 4294901760
        %2312 = vmatmul.mubr.f32.gmra.mrb[0].mxu0 %v2311
        %v2313 = vpop.f32.mrb[0].mxu0
        %v2314 = vadd.f32 %v2017, %v2313
        %v2315 = vpop.f32.mrb[0].mxu0
        %2316 = vmatprep.mubr.f32.mxu0 0.0
        %v2317 = vand.u32 %v491, 4294901760
        %2318 = vmatmul.mubr.f32.gmra.mrb[0].mxu0 %v2317
        %v2319 = vpop.f32.mrb[0].mxu0
        %v2320 = vadd.f32 %v2027, %v2319
        %v2321 = vpop.f32.mrb[0].mxu0
        %2322 = vmatprep.mubr.f32.mxu0 0.0
        %v2323 = vand.u32 %v492, 4294901760
        %2324 = vmatmul.mubr.f32.gmra.mrb[0].mxu0 %v2323
        %v2325 = vpop.f32.mrb[0].mxu0
        %v2326 = vadd.f32 %v2037, %v2325
        %v2327 = vpop.f32.mrb[0].mxu0
        %2328 = vmatprep.mubr.f32.mxu0 0.0
        %v2329 = vand.u32 %v493, 4294901760
        %2330 = vmatmul.mubr.f32.gmra.mrb[0].mxu0 %v2329
        %v2331 = vpop.f32.mrb[0].mxu0
        %v2332 = vadd.f32 %v2047, %v2331
        %v2333 = vpop.f32.mrb[0].mxu0
        %2334 = vmatprep.mubr.f32.mxu0 0.0
        %v2335 = vand.u32 %v494, 4294901760
        %2336 = vmatmul.mubr.f32.gmra.mrb[0].mxu0 %v2335
        %v2337 = vpop.f32.mrb[0].mxu0
        %v2338 = vadd.f32 %v2057, %v2337
        %v2339 = vpop.f32.mrb[0].mxu0
        %2340 = vmatprep.mubr.f32.mxu0 0.0
        %v2341 = vand.u32 %v495, 4294901760
        %2342 = vmatmul.mubr.f32.gmra.mrb[0].mxu0 %v2341
        %v2343 = vpop.f32.mrb[0].mxu0
        %v2344 = vadd.f32 %v2067, %v2343
        %v2345 = vpop.f32.mrb[0].mxu0
        %2346 = vmatprep.mubr.f32.mxu0 0.0
        %v2347 = vand.u32 %v496, 4294901760
        %2348 = vmatmul.mubr.f32.gmra.mrb[0].mxu0 %v2347
        %v2349 = vpop.f32.mrb[0].mxu0
        %v2350 = vadd.f32 %v2077, %v2349
        %v2351 = vpop.f32.mrb[0].mxu0
        %2352 = vmatprep.mubr.f32.mxu0 0.0
        %v2353 = vand.u32 %v497, 4294901760
        %2354 = vmatmul.mubr.f32.gmra.mrb[0].mxu0 %v2353
        %v2355 = vpop.f32.mrb[0].mxu0
        %v2356 = vadd.f32 %v2087, %v2355
        %v2357 = vpop.f32.mrb[0].mxu0
        %2358 = vmatprep.mubr.f32.mxu0 0.0
        %v2359 = vand.u32 %v498, 4294901760
        %2360 = vmatmul.mubr.f32.gmra.mrb[0].mxu0 %v2359
        %v2361 = vpop.f32.mrb[0].mxu0
        %v2362 = vadd.f32 %v2097, %v2361
        %v2363 = vpop.f32.mrb[0].mxu0
        %2364 = vmatprep.mubr.f32.mxu0 0.0
        %v2365 = vand.u32 %v499, 4294901760
        %2366 = vmatmul.mubr.f32.gmra.mrb[0].mxu0 %v2365
        %v2367 = vpop.f32.mrb[0].mxu0
        %v2368 = vadd.f32 %v2107, %v2367
        %v2369 = vpop.f32.mrb[0].mxu0
        %2370 = vmatprep.mubr.f32.mxu0 0.0
        %v2371 = vand.u32 %v500, 4294901760
        %2372 = vmatmul.mubr.f32.gmra.mrb[0].mxu0 %v2371
        %v2373 = vpop.f32.mrb[0].mxu0
        %v2374 = vadd.f32 %v2117, %v2373
        %v2375 = vpop.f32.mrb[0].mxu0
        %2376 = vmatprep.mubr.f32.mxu0 0.0
        %v2377 = vand.u32 %v501, 4294901760
        %2378 = vmatmul.mubr.f32.gmra.mrb[0].mxu0 %v2377
        %v2379 = vpop.f32.mrb[0].mxu0
        %v2380 = vadd.f32 %v2127, %v2379
        %v2381 = vpop.f32.mrb[0].mxu0
        %2382 = vmatprep.mubr.f32.mxu0 0.0
        %v2383 = vand.u32 %v502, 4294901760
        %2384 = vmatmul.mubr.f32.gmra.mrb[0].mxu0 %v2383
        %v2385 = vpop.f32.mrb[0].mxu0
        %v2386 = vadd.f32 %v2137, %v2385
        %v2387 = vpop.f32.mrb[0].mxu0
        %2388 = vmatprep.mubr.f32.mxu0 0.0
        %v2389 = vand.u32 %v503, 4294901760
        %2390 = vmatmul.mubr.f32.gmra.mrb[0].mxu0 %v2389
        %v2391 = vpop.f32.mrb[0].mxu0
        %v2392 = vadd.f32 %v2147, %v2391
        %v2393 = vpop.f32.mrb[0].mxu0
        %2394 = vmatprep.mubr.f32.mxu0 0.0
        %v2395 = vand.u32 %v504, 4294901760
        %2396 = vmatmul.mubr.f32.gmra.mrb[0].mxu0 %v2395
        %v2397 = vpop.f32.mrb[0].mxu0
        %v2398 = vadd.f32 %v2157, %v2397
        %v2399 = vpop.f32.mrb[0].mxu0
        %2400 = vdwg.mxu0
        %2401 = vmatprep.subr.mxu0 0.0
        %v2402 = vand.u32 %v601, 4294901760
        %v2403 = vsub.f32 %v601, %v2402
        %2404 = vmatpush1.msra.mxu0 %v2403
        %2405 = vmatprep.subr.mxu0 0.0
        %v2406 = vand.u32 %v602, 4294901760
        %v2407 = vsub.f32 %v602, %v2406
        %2408 = vmatpush1.msra.mxu0 %v2407
        %2409 = vmatprep.subr.mxu0 0.0
        %v2410 = vand.u32 %v603, 4294901760
        %v2411 = vsub.f32 %v603, %v2410
        %2412 = vmatpush1.msra.mxu0 %v2411
        %2413 = vmatprep.subr.mxu0 0.0
        %v2414 = vand.u32 %v604, 4294901760
        %v2415 = vsub.f32 %v604, %v2414
        %2416 = vmatpush1.msra.mxu0 %v2415
        %2417 = vmatprep.subr.mxu0 0.0
        %v2418 = vand.u32 %v605, 4294901760
        %v2419 = vsub.f32 %v605, %v2418
        %2420 = vmatpush1.msra.mxu0 %v2419
        %2421 = vmatprep.subr.mxu0 0.0
        %v2422 = vand.u32 %v606, 4294901760
        %v2423 = vsub.f32 %v606, %v2422
        %2424 = vmatpush1.msra.mxu0 %v2423
        %2425 = vmatprep.subr.mxu0 0.0
        %v2426 = vand.u32 %v607, 4294901760
        %v2427 = vsub.f32 %v607, %v2426
        %2428 = vmatpush1.msra.mxu0 %v2427
        %2429 = vmatprep.subr.mxu0 0.0
        %v2430 = vand.u32 %v608, 4294901760
        %v2431 = vsub.f32 %v608, %v2430
        %2432 = vmatpush1.msra.mxu0 %v2431
        %2433 = vmatprep.subr.mxu0 0.0
        %v2434 = vand.u32 %v609, 4294901760
        %v2435 = vsub.f32 %v609, %v2434
        %2436 = vmatpush1.msra.mxu0 %v2435
        %2437 = vmatprep.subr.mxu0 0.0
        %v2438 = vand.u32 %v610, 4294901760
        %v2439 = vsub.f32 %v610, %v2438
        %2440 = vmatpush1.msra.mxu0 %v2439
        %2441 = vmatprep.subr.mxu0 0.0
        %v2442 = vand.u32 %v611, 4294901760
        %v2443 = vsub.f32 %v611, %v2442
        %2444 = vmatpush1.msra.mxu0 %v2443
        %2445 = vmatprep.subr.mxu0 0.0
        %v2446 = vand.u32 %v612, 4294901760
        %v2447 = vsub.f32 %v612, %v2446
        %2448 = vmatpush1.msra.mxu0 %v2447
        %2449 = vmatprep.subr.mxu0 0.0
        %v2450 = vand.u32 %v613, 4294901760
        %v2451 = vsub.f32 %v613, %v2450
        %2452 = vmatpush1.msra.mxu0 %v2451
        %2453 = vmatprep.subr.mxu0 0.0
        %v2454 = vand.u32 %v614, 4294901760
        %v2455 = vsub.f32 %v614, %v2454
        %2456 = vmatpush1.msra.mxu0 %v2455
        %2457 = vmatprep.subr.mxu0 0.0
        %v2458 = vand.u32 %v615, 4294901760
        %v2459 = vsub.f32 %v615, %v2458
        %2460 = vmatpush1.msra.mxu0 %v2459
        %2461 = vmatprep.subr.mxu0 0.0
        %v2462 = vand.u32 %v616, 4294901760
        %v2463 = vsub.f32 %v616, %v2462
        %2464 = vmatpush1.msra.mxu0 %v2463
        %2465 = vmatprep.subr.mxu0 0.0
        %2466 = vmatpush1.msra.mxu0 0.0
        %2467 = vmatprep.subr.mxu0 0.0
        %2468 = vmatpush1.msra.mxu0 0.0
        %2469 = vmatprep.subr.mxu0 0.0
        %2470 = vmatpush1.msra.mxu0 0.0
        %2471 = vmatprep.subr.mxu0 0.0
        %2472 = vmatpush1.msra.mxu0 0.0
        %2473 = vmatprep.subr.mxu0 0.0
        %2474 = vmatpush1.msra.mxu0 0.0
        %2475 = vmatprep.subr.mxu0 0.0
        %2476 = vmatpush1.msra.mxu0 0.0
        %2477 = vmatprep.subr.mxu0 0.0
        %2478 = vmatpush1.msra.mxu0 0.0
        %2479 = vmatprep.subr.mxu0 0.0
        %2480 = vmatpush1.msra.mxu0 0.0
        %2481 = vmatprep.subr.mxu0 0.0
        %2482 = vmatpush1.msra.mxu0 0.0
        %2483 = vmatprep.subr.mxu0 0.0
        %2484 = vmatpush1.msra.mxu0 0.0
        %2485 = vmatprep.subr.mxu0 0.0
        %2486 = vmatpush1.msra.mxu0 0.0
        %2487 = vmatprep.subr.mxu0 0.0
        %2488 = vmatpush1.msra.mxu0 0.0
        %2489 = vmatprep.subr.mxu0 0.0
        %2490 = vmatpush1.msra.mxu0 0.0
        %2491 = vmatprep.subr.mxu0 0.0
        %2492 = vmatpush1.msra.mxu0 0.0
        %2493 = vmatprep.subr.mxu0 0.0
        %2494 = vmatpush1.msra.mxu0 0.0
        %2495 = vmatprep.subr.mxu0 0.0
        %2496 = vmatpush1.msra.mxu0 0.0
        %2497 = vmatprep.mubr.f32.mxu0 0.0
        %v2498 = vand.u32 %v489, 4294901760
        %v2499 = vsub.f32 %v489, %v2498
        %2500 = vmatmul.mubr.f32.gmra.mrb[0].mxu0 %v2499
        %v2501 = vpop.f32.mrb[0].mxu0
        %v2502 = vadd.f32 %v2308, %v2501
        %v2503 = vpop.f32.mrb[0].mxu0
        %2504 = vmatprep.mubr.f32.mxu0 0.0
        %v2505 = vand.u32 %v490, 4294901760
        %v2506 = vsub.f32 %v490, %v2505
        %2507 = vmatmul.mubr.f32.gmra.mrb[0].mxu0 %v2506
        %v2508 = vpop.f32.mrb[0].mxu0
        %v2509 = vadd.f32 %v2314, %v2508
        %v2510 = vpop.f32.mrb[0].mxu0
        %2511 = vmatprep.mubr.f32.mxu0 0.0
        %v2512 = vand.u32 %v491, 4294901760
        %v2513 = vsub.f32 %v491, %v2512
        %2514 = vmatmul.mubr.f32.gmra.mrb[0].mxu0 %v2513
        %v2515 = vpop.f32.mrb[0].mxu0
        %v2516 = vadd.f32 %v2320, %v2515
        %v2517 = vpop.f32.mrb[0].mxu0
        %2518 = vmatprep.mubr.f32.mxu0 0.0
        %v2519 = vand.u32 %v492, 4294901760
        %v2520 = vsub.f32 %v492, %v2519
        %2521 = vmatmul.mubr.f32.gmra.mrb[0].mxu0 %v2520
        %v2522 = vpop.f32.mrb[0].mxu0
        %v2523 = vadd.f32 %v2326, %v2522
        %v2524 = vpop.f32.mrb[0].mxu0
        %2525 = vmatprep.mubr.f32.mxu0 0.0
        %v2526 = vand.u32 %v493, 4294901760
        %v2527 = vsub.f32 %v493, %v2526
        %2528 = vmatmul.mubr.f32.gmra.mrb[0].mxu0 %v2527
        %v2529 = vpop.f32.mrb[0].mxu0
        %v2530 = vadd.f32 %v2332, %v2529
        %v2531 = vpop.f32.mrb[0].mxu0
        %2532 = vmatprep.mubr.f32.mxu0 0.0
        %v2533 = vand.u32 %v494, 4294901760
        %v2534 = vsub.f32 %v494, %v2533
        %2535 = vmatmul.mubr.f32.gmra.mrb[0].mxu0 %v2534
        %v2536 = vpop.f32.mrb[0].mxu0
        %v2537 = vadd.f32 %v2338, %v2536
        %v2538 = vpop.f32.mrb[0].mxu0
        %2539 = vmatprep.mubr.f32.mxu0 0.0
        %v2540 = vand.u32 %v495, 4294901760
        %v2541 = vsub.f32 %v495, %v2540
        %2542 = vmatmul.mubr.f32.gmra.mrb[0].mxu0 %v2541
        %v2543 = vpop.f32.mrb[0].mxu0
        %v2544 = vadd.f32 %v2344, %v2543
        %v2545 = vpop.f32.mrb[0].mxu0
        %2546 = vmatprep.mubr.f32.mxu0 0.0
        %v2547 = vand.u32 %v496, 4294901760
        %v2548 = vsub.f32 %v496, %v2547
        %2549 = vmatmul.mubr.f32.gmra.mrb[0].mxu0 %v2548
        %v2550 = vpop.f32.mrb[0].mxu0
        %v2551 = vadd.f32 %v2350, %v2550
        %v2552 = vpop.f32.mrb[0].mxu0
        %2553 = vmatprep.mubr.f32.mxu0 0.0
        %v2554 = vand.u32 %v497, 4294901760
        %v2555 = vsub.f32 %v497, %v2554
        %2556 = vmatmul.mubr.f32.gmra.mrb[0].mxu0 %v2555
        %v2557 = vpop.f32.mrb[0].mxu0
        %v2558 = vadd.f32 %v2356, %v2557
        %v2559 = vpop.f32.mrb[0].mxu0
        %2560 = vmatprep.mubr.f32.mxu0 0.0
        %v2561 = vand.u32 %v498, 4294901760
        %v2562 = vsub.f32 %v498, %v2561
        %2563 = vmatmul.mubr.f32.gmra.mrb[0].mxu0 %v2562
        %v2564 = vpop.f32.mrb[0].mxu0
        %v2565 = vadd.f32 %v2362, %v2564
        %v2566 = vpop.f32.mrb[0].mxu0
        %2567 = vmatprep.mubr.f32.mxu0 0.0
        %v2568 = vand.u32 %v499, 4294901760
        %v2569 = vsub.f32 %v499, %v2568
        %2570 = vmatmul.mubr.f32.gmra.mrb[0].mxu0 %v2569
        %v2571 = vpop.f32.mrb[0].mxu0
        %v2572 = vadd.f32 %v2368, %v2571
        %v2573 = vpop.f32.mrb[0].mxu0
        %2574 = vmatprep.mubr.f32.mxu0 0.0
        %v2575 = vand.u32 %v500, 4294901760
        %v2576 = vsub.f32 %v500, %v2575
        %2577 = vmatmul.mubr.f32.gmra.mrb[0].mxu0 %v2576
        %v2578 = vpop.f32.mrb[0].mxu0
        %v2579 = vadd.f32 %v2374, %v2578
        %v2580 = vpop.f32.mrb[0].mxu0
        %2581 = vmatprep.mubr.f32.mxu0 0.0
        %v2582 = vand.u32 %v501, 4294901760
        %v2583 = vsub.f32 %v501, %v2582
        %2584 = vmatmul.mubr.f32.gmra.mrb[0].mxu0 %v2583
        %v2585 = vpop.f32.mrb[0].mxu0
        %v2586 = vadd.f32 %v2380, %v2585
        %v2587 = vpop.f32.mrb[0].mxu0
        %2588 = vmatprep.mubr.f32.mxu0 0.0
        %v2589 = vand.u32 %v502, 4294901760
        %v2590 = vsub.f32 %v502, %v2589
        %2591 = vmatmul.mubr.f32.gmra.mrb[0].mxu0 %v2590
        %v2592 = vpop.f32.mrb[0].mxu0
        %v2593 = vadd.f32 %v2386, %v2592
        %v2594 = vpop.f32.mrb[0].mxu0
        %2595 = vmatprep.mubr.f32.mxu0 0.0
        %v2596 = vand.u32 %v503, 4294901760
        %v2597 = vsub.f32 %v503, %v2596
        %2598 = vmatmul.mubr.f32.gmra.mrb[0].mxu0 %v2597
        %v2599 = vpop.f32.mrb[0].mxu0
        %v2600 = vadd.f32 %v2392, %v2599
        %v2601 = vpop.f32.mrb[0].mxu0
        %2602 = vmatprep.mubr.f32.mxu0 0.0
        %v2603 = vand.u32 %v504, 4294901760
        %v2604 = vsub.f32 %v504, %v2603
        %2605 = vmatmul.mubr.f32.gmra.mrb[0].mxu0 %v2604
        %v2606 = vpop.f32.mrb[0].mxu0
        %v2607 = vadd.f32 %v2398, %v2606
        %v2608 = vpop.f32.mrb[0].mxu0
        %2609 = vdwg.mxu0
        %2610 = vmatprep.subr.mxu0 0.0
        %v2611 = vand.u32 %v601, 4294901760
        %2612 = vmatpush1.msra.mxu0 %v2611
        %2613 = vmatprep.subr.mxu0 0.0
        %v2614 = vand.u32 %v602, 4294901760
        %2615 = vmatpush1.msra.mxu0 %v2614
        %2616 = vmatprep.subr.mxu0 0.0
        %v2617 = vand.u32 %v603, 4294901760
        %2618 = vmatpush1.msra.mxu0 %v2617
        %2619 = vmatprep.subr.mxu0 0.0
        %v2620 = vand.u32 %v604, 4294901760
        %2621 = vmatpush1.msra.mxu0 %v2620
        %2622 = vmatprep.subr.mxu0 0.0
        %v2623 = vand.u32 %v605, 4294901760
        %2624 = vmatpush1.msra.mxu0 %v2623
        %2625 = vmatprep.subr.mxu0 0.0
        %v2626 = vand.u32 %v606, 4294901760
        %2627 = vmatpush1.msra.mxu0 %v2626
        %2628 = vmatprep.subr.mxu0 0.0
        %v2629 = vand.u32 %v607, 4294901760
        %2630 = vmatpush1.msra.mxu0 %v2629
        %2631 = vmatprep.subr.mxu0 0.0
        %v2632 = vand.u32 %v608, 4294901760
        %2633 = vmatpush1.msra.mxu0 %v2632
        %2634 = vmatprep.subr.mxu0 0.0
        %v2635 = vand.u32 %v609, 4294901760
        %2636 = vmatpush1.msra.mxu0 %v2635
        %2637 = vmatprep.subr.mxu0 0.0
        %v2638 = vand.u32 %v610, 4294901760
        %2639 = vmatpush1.msra.mxu0 %v2638
        %2640 = vmatprep.subr.mxu0 0.0
        %v2641 = vand.u32 %v611, 4294901760
        %2642 = vmatpush1.msra.mxu0 %v2641
        %2643 = vmatprep.subr.mxu0 0.0
        %v2644 = vand.u32 %v612, 4294901760
        %2645 = vmatpush1.msra.mxu0 %v2644
        %2646 = vmatprep.subr.mxu0 0.0
        %v2647 = vand.u32 %v613, 4294901760
        %2648 = vmatpush1.msra.mxu0 %v2647
        %2649 = vmatprep.subr.mxu0 0.0
        %v2650 = vand.u32 %v614, 4294901760
        %2651 = vmatpush1.msra.mxu0 %v2650
        %2652 = vmatprep.subr.mxu0 0.0
        %v2653 = vand.u32 %v615, 4294901760
        %2654 = vmatpush1.msra.mxu0 %v2653
        %2655 = vmatprep.subr.mxu0 0.0
        %v2656 = vand.u32 %v616, 4294901760
        %2657 = vmatpush1.msra.mxu0 %v2656
        %2658 = vmatprep.subr.mxu0 0.0
        %2659 = vmatpush1.msra.mxu0 0.0
        %2660 = vmatprep.subr.mxu0 0.0
        %2661 = vmatpush1.msra.mxu0 0.0
        %2662 = vmatprep.subr.mxu0 0.0
        %2663 = vmatpush1.msra.mxu0 0.0
        %2664 = vmatprep.subr.mxu0 0.0
        %2665 = vmatpush1.msra.mxu0 0.0
        %2666 = vmatprep.subr.mxu0 0.0
        %2667 = vmatpush1.msra.mxu0 0.0
        %2668 = vmatprep.subr.mxu0 0.0
        %2669 = vmatpush1.msra.mxu0 0.0
        %2670 = vmatprep.subr.mxu0 0.0
        %2671 = vmatpush1.msra.mxu0 0.0
        %2672 = vmatprep.subr.mxu0 0.0
        %2673 = vmatpush1.msra.mxu0 0.0
        %2674 = vmatprep.subr.mxu0 0.0
        %2675 = vmatpush1.msra.mxu0 0.0
        %2676 = vmatprep.subr.mxu0 0.0
        %2677 = vmatpush1.msra.mxu0 0.0
        %2678 = vmatprep.subr.mxu0 0.0
        %2679 = vmatpush1.msra.mxu0 0.0
        %2680 = vmatprep.subr.mxu0 0.0
        %2681 = vmatpush1.msra.mxu0 0.0
        %2682 = vmatprep.subr.mxu0 0.0
        %2683 = vmatpush1.msra.mxu0 0.0
        %2684 = vmatprep.subr.mxu0 0.0
        %2685 = vmatpush1.msra.mxu0 0.0
        %2686 = vmatprep.subr.mxu0 0.0
        %2687 = vmatpush1.msra.mxu0 0.0
        %2688 = vmatprep.subr.mxu0 0.0
        %2689 = vmatpush1.msra.mxu0 0.0
        %2690 = vmatprep.mubr.f32.mxu0 0.0
        %v2691 = vand.u32 %v489, 4294901760
        %v2692 = vsub.f32 %v489, %v2691
        %v2693 = vand.u32 %v2692, 4294901760
        %2694 = vmatmul.mubr.f32.gmra.mrb[0].mxu0 %v2693
        %v2695 = vpop.f32.mrb[0].mxu0
        %v2696 = vadd.f32 %v2502, %v2695
        %v2697 = vpop.f32.mrb[0].mxu0
        %2698 = vmatprep.mubr.f32.mxu0 0.0
        %v2699 = vand.u32 %v490, 4294901760
        %v2700 = vsub.f32 %v490, %v2699
        %v2701 = vand.u32 %v2700, 4294901760
        %2702 = vmatmul.mubr.f32.gmra.mrb[0].mxu0 %v2701
        %v2703 = vpop.f32.mrb[0].mxu0
        %v2704 = vadd.f32 %v2509, %v2703
        %v2705 = vpop.f32.mrb[0].mxu0
        %2706 = vmatprep.mubr.f32.mxu0 0.0
        %v2707 = vand.u32 %v491, 4294901760
        %v2708 = vsub.f32 %v491, %v2707
        %v2709 = vand.u32 %v2708, 4294901760
        %2710 = vmatmul.mubr.f32.gmra.mrb[0].mxu0 %v2709
        %v2711 = vpop.f32.mrb[0].mxu0
        %v2712 = vadd.f32 %v2516, %v2711
        %v2713 = vpop.f32.mrb[0].mxu0
        %2714 = vmatprep.mubr.f32.mxu0 0.0
        %v2715 = vand.u32 %v492, 4294901760
        %v2716 = vsub.f32 %v492, %v2715
        %v2717 = vand.u32 %v2716, 4294901760
        %2718 = vmatmul.mubr.f32.gmra.mrb[0].mxu0 %v2717
        %v2719 = vpop.f32.mrb[0].mxu0
        %v2720 = vadd.f32 %v2523, %v2719
        %v2721 = vpop.f32.mrb[0].mxu0
        %2722 = vmatprep.mubr.f32.mxu0 0.0
        %v2723 = vand.u32 %v493, 4294901760
        %v2724 = vsub.f32 %v493, %v2723
        %v2725 = vand.u32 %v2724, 4294901760
        %2726 = vmatmul.mubr.f32.gmra.mrb[0].mxu0 %v2725
        %v2727 = vpop.f32.mrb[0].mxu0
        %v2728 = vadd.f32 %v2530, %v2727
        %v2729 = vpop.f32.mrb[0].mxu0
        %2730 = vmatprep.mubr.f32.mxu0 0.0
        %v2731 = vand.u32 %v494, 4294901760
        %v2732 = vsub.f32 %v494, %v2731
        %v2733 = vand.u32 %v2732, 4294901760
        %2734 = vmatmul.mubr.f32.gmra.mrb[0].mxu0 %v2733
        %v2735 = vpop.f32.mrb[0].mxu0
        %v2736 = vadd.f32 %v2537, %v2735
        %v2737 = vpop.f32.mrb[0].mxu0
        %2738 = vmatprep.mubr.f32.mxu0 0.0
        %v2739 = vand.u32 %v495, 4294901760
        %v2740 = vsub.f32 %v495, %v2739
        %v2741 = vand.u32 %v2740, 4294901760
        %2742 = vmatmul.mubr.f32.gmra.mrb[0].mxu0 %v2741
        %v2743 = vpop.f32.mrb[0].mxu0
        %v2744 = vadd.f32 %v2544, %v2743
        %v2745 = vpop.f32.mrb[0].mxu0
        %2746 = vmatprep.mubr.f32.mxu0 0.0
        %v2747 = vand.u32 %v496, 4294901760
        %v2748 = vsub.f32 %v496, %v2747
        %v2749 = vand.u32 %v2748, 4294901760
        %2750 = vmatmul.mubr.f32.gmra.mrb[0].mxu0 %v2749
        %v2751 = vpop.f32.mrb[0].mxu0
        %v2752 = vadd.f32 %v2551, %v2751
        %v2753 = vpop.f32.mrb[0].mxu0
        %2754 = vmatprep.mubr.f32.mxu0 0.0
        %v2755 = vand.u32 %v497, 4294901760
        %v2756 = vsub.f32 %v497, %v2755
        %v2757 = vand.u32 %v2756, 4294901760
        %2758 = vmatmul.mubr.f32.gmra.mrb[0].mxu0 %v2757
        %v2759 = vpop.f32.mrb[0].mxu0
        %v2760 = vadd.f32 %v2558, %v2759
        %v2761 = vpop.f32.mrb[0].mxu0
        %2762 = vmatprep.mubr.f32.mxu0 0.0
        %v2763 = vand.u32 %v498, 4294901760
        %v2764 = vsub.f32 %v498, %v2763
        %v2765 = vand.u32 %v2764, 4294901760
        %2766 = vmatmul.mubr.f32.gmra.mrb[0].mxu0 %v2765
        %v2767 = vpop.f32.mrb[0].mxu0
        %v2768 = vadd.f32 %v2565, %v2767
        %v2769 = vpop.f32.mrb[0].mxu0
        %2770 = vmatprep.mubr.f32.mxu0 0.0
        %v2771 = vand.u32 %v499, 4294901760
        %v2772 = vsub.f32 %v499, %v2771
        %v2773 = vand.u32 %v2772, 4294901760
        %2774 = vmatmul.mubr.f32.gmra.mrb[0].mxu0 %v2773
        %v2775 = vpop.f32.mrb[0].mxu0
        %v2776 = vadd.f32 %v2572, %v2775
        %v2777 = vpop.f32.mrb[0].mxu0
        %2778 = vmatprep.mubr.f32.mxu0 0.0
        %v2779 = vand.u32 %v500, 4294901760
        %v2780 = vsub.f32 %v500, %v2779
        %v2781 = vand.u32 %v2780, 4294901760
        %2782 = vmatmul.mubr.f32.gmra.mrb[0].mxu0 %v2781
        %v2783 = vpop.f32.mrb[0].mxu0
        %v2784 = vadd.f32 %v2579, %v2783
        %v2785 = vpop.f32.mrb[0].mxu0
        %2786 = vmatprep.mubr.f32.mxu0 0.0
        %v2787 = vand.u32 %v501, 4294901760
        %v2788 = vsub.f32 %v501, %v2787
        %v2789 = vand.u32 %v2788, 4294901760
        %2790 = vmatmul.mubr.f32.gmra.mrb[0].mxu0 %v2789
        %v2791 = vpop.f32.mrb[0].mxu0
        %v2792 = vadd.f32 %v2586, %v2791
        %v2793 = vpop.f32.mrb[0].mxu0
        %2794 = vmatprep.mubr.f32.mxu0 0.0
        %v2795 = vand.u32 %v502, 4294901760
        %v2796 = vsub.f32 %v502, %v2795
        %v2797 = vand.u32 %v2796, 4294901760
        %2798 = vmatmul.mubr.f32.gmra.mrb[0].mxu0 %v2797
        %v2799 = vpop.f32.mrb[0].mxu0
        %v2800 = vadd.f32 %v2593, %v2799
        %v2801 = vpop.f32.mrb[0].mxu0
        %2802 = vmatprep.mubr.f32.mxu0 0.0
        %v2803 = vand.u32 %v503, 4294901760
        %v2804 = vsub.f32 %v503, %v2803
        %v2805 = vand.u32 %v2804, 4294901760
        %2806 = vmatmul.mubr.f32.gmra.mrb[0].mxu0 %v2805
        %v2807 = vpop.f32.mrb[0].mxu0
        %v2808 = vadd.f32 %v2600, %v2807
        %v2809 = vpop.f32.mrb[0].mxu0
        %2810 = vmatprep.mubr.f32.mxu0 0.0
        %v2811 = vand.u32 %v504, 4294901760
        %v2812 = vsub.f32 %v504, %v2811
        %v2813 = vand.u32 %v2812, 4294901760
        %2814 = vmatmul.mubr.f32.gmra.mrb[0].mxu0 %v2813
        %v2815 = vpop.f32.mrb[0].mxu0
        %v2816 = vadd.f32 %v2607, %v2815
        %v2817 = vpop.f32.mrb[0].mxu0
        %2818 = vdwg.mxu0
        %2819 = vmatprep.subr.mxu0 0.0
        %v2820 = vand.u32 %v601, 4294901760
        %v2821 = vsub.f32 %v601, %v2820
        %v2822 = vand.u32 %v2821, 4294901760
        %2823 = vmatpush1.msra.mxu0 %v2822
        %2824 = vmatprep.subr.mxu0 0.0
        %v2825 = vand.u32 %v602, 4294901760
        %v2826 = vsub.f32 %v602, %v2825
        %v2827 = vand.u32 %v2826, 4294901760
        %2828 = vmatpush1.msra.mxu0 %v2827
        %2829 = vmatprep.subr.mxu0 0.0
        %v2830 = vand.u32 %v603, 4294901760
        %v2831 = vsub.f32 %v603, %v2830
        %v2832 = vand.u32 %v2831, 4294901760
        %2833 = vmatpush1.msra.mxu0 %v2832
        %2834 = vmatprep.subr.mxu0 0.0
        %v2835 = vand.u32 %v604, 4294901760
        %v2836 = vsub.f32 %v604, %v2835
        %v2837 = vand.u32 %v2836, 4294901760
        %2838 = vmatpush1.msra.mxu0 %v2837
        %2839 = vmatprep.subr.mxu0 0.0
        %v2840 = vand.u32 %v605, 4294901760
        %v2841 = vsub.f32 %v605, %v2840
        %v2842 = vand.u32 %v2841, 4294901760
        %2843 = vmatpush1.msra.mxu0 %v2842
        %2844 = vmatprep.subr.mxu0 0.0
        %v2845 = vand.u32 %v606, 4294901760
        %v2846 = vsub.f32 %v606, %v2845
        %v2847 = vand.u32 %v2846, 4294901760
        %2848 = vmatpush1.msra.mxu0 %v2847
        %2849 = vmatprep.subr.mxu0 0.0
        %v2850 = vand.u32 %v607, 4294901760
        %v2851 = vsub.f32 %v607, %v2850
        %v2852 = vand.u32 %v2851, 4294901760
        %2853 = vmatpush1.msra.mxu0 %v2852
        %2854 = vmatprep.subr.mxu0 0.0
        %v2855 = vand.u32 %v608, 4294901760
        %v2856 = vsub.f32 %v608, %v2855
        %v2857 = vand.u32 %v2856, 4294901760
        %2858 = vmatpush1.msra.mxu0 %v2857
        %2859 = vmatprep.subr.mxu0 0.0
        %v2860 = vand.u32 %v609, 4294901760
        %v2861 = vsub.f32 %v609, %v2860
        %v2862 = vand.u32 %v2861, 4294901760
        %2863 = vmatpush1.msra.mxu0 %v2862
        %2864 = vmatprep.subr.mxu0 0.0
        %v2865 = vand.u32 %v610, 4294901760
        %v2866 = vsub.f32 %v610, %v2865
        %v2867 = vand.u32 %v2866, 4294901760
        %2868 = vmatpush1.msra.mxu0 %v2867
        %2869 = vmatprep.subr.mxu0 0.0
        %v2870 = vand.u32 %v611, 4294901760
        %v2871 = vsub.f32 %v611, %v2870
        %v2872 = vand.u32 %v2871, 4294901760
        %2873 = vmatpush1.msra.mxu0 %v2872
        %2874 = vmatprep.subr.mxu0 0.0
        %v2875 = vand.u32 %v612, 4294901760
        %v2876 = vsub.f32 %v612, %v2875
        %v2877 = vand.u32 %v2876, 4294901760
        %2878 = vmatpush1.msra.mxu0 %v2877
        %2879 = vmatprep.subr.mxu0 0.0
        %v2880 = vand.u32 %v613, 4294901760
        %v2881 = vsub.f32 %v613, %v2880
        %v2882 = vand.u32 %v2881, 4294901760
        %2883 = vmatpush1.msra.mxu0 %v2882
        %2884 = vmatprep.subr.mxu0 0.0
        %v2885 = vand.u32 %v614, 4294901760
        %v2886 = vsub.f32 %v614, %v2885
        %v2887 = vand.u32 %v2886, 4294901760
        %2888 = vmatpush1.msra.mxu0 %v2887
        %2889 = vmatprep.subr.mxu0 0.0
        %v2890 = vand.u32 %v615, 4294901760
        %v2891 = vsub.f32 %v615, %v2890
        %v2892 = vand.u32 %v2891, 4294901760
        %2893 = vmatpush1.msra.mxu0 %v2892
        %2894 = vmatprep.subr.mxu0 0.0
        %v2895 = vand.u32 %v616, 4294901760
        %v2896 = vsub.f32 %v616, %v2895
        %v2897 = vand.u32 %v2896, 4294901760
        %2898 = vmatpush1.msra.mxu0 %v2897
        %2899 = vmatprep.subr.mxu0 0.0
        %2900 = vmatpush1.msra.mxu0 0.0
        %2901 = vmatprep.subr.mxu0 0.0
        %2902 = vmatpush1.msra.mxu0 0.0
        %2903 = vmatprep.subr.mxu0 0.0
        %2904 = vmatpush1.msra.mxu0 0.0
        %2905 = vmatprep.subr.mxu0 0.0
        %2906 = vmatpush1.msra.mxu0 0.0
        %2907 = vmatprep.subr.mxu0 0.0
        %2908 = vmatpush1.msra.mxu0 0.0
        %2909 = vmatprep.subr.mxu0 0.0
        %2910 = vmatpush1.msra.mxu0 0.0
        %2911 = vmatprep.subr.mxu0 0.0
        %2912 = vmatpush1.msra.mxu0 0.0
        %2913 = vmatprep.subr.mxu0 0.0
        %2914 = vmatpush1.msra.mxu0 0.0
        %2915 = vmatprep.subr.mxu0 0.0
        %2916 = vmatpush1.msra.mxu0 0.0
        %2917 = vmatprep.subr.mxu0 0.0
        %2918 = vmatpush1.msra.mxu0 0.0
        %2919 = vmatprep.subr.mxu0 0.0
        %2920 = vmatpush1.msra.mxu0 0.0
        %2921 = vmatprep.subr.mxu0 0.0
        %2922 = vmatpush1.msra.mxu0 0.0
        %2923 = vmatprep.subr.mxu0 0.0
        %2924 = vmatpush1.msra.mxu0 0.0
        %2925 = vmatprep.subr.mxu0 0.0
        %2926 = vmatpush1.msra.mxu0 0.0
        %2927 = vmatprep.subr.mxu0 0.0
        %2928 = vmatpush1.msra.mxu0 0.0
        %2929 = vmatprep.subr.mxu0 0.0
        %2930 = vmatpush1.msra.mxu0 0.0
        %2931 = vmatprep.mubr.f32.mxu0 0.0
        %v2932 = vand.u32 %v489, 4294901760
        %2933 = vmatmul.mubr.f32.gmra.mrb[0].mxu0 %v2932
        %v2934 = vpop.f32.mrb[0].mxu0
        %v2935 = vadd.f32 %v2696, %v2934
        %v2936 = vpop.f32.mrb[0].mxu0
        %2937 = vmatprep.mubr.f32.mxu0 0.0
        %v2938 = vand.u32 %v490, 4294901760
        %2939 = vmatmul.mubr.f32.gmra.mrb[0].mxu0 %v2938
        %v2940 = vpop.f32.mrb[0].mxu0
        %v2941 = vadd.f32 %v2704, %v2940
        %v2942 = vpop.f32.mrb[0].mxu0
        %2943 = vmatprep.mubr.f32.mxu0 0.0
        %v2944 = vand.u32 %v491, 4294901760
        %2945 = vmatmul.mubr.f32.gmra.mrb[0].mxu0 %v2944
        %v2946 = vpop.f32.mrb[0].mxu0
        %v2947 = vadd.f32 %v2712, %v2946
        %v2948 = vpop.f32.mrb[0].mxu0
        %2949 = vmatprep.mubr.f32.mxu0 0.0
        %v2950 = vand.u32 %v492, 4294901760
        %2951 = vmatmul.mubr.f32.gmra.mrb[0].mxu0 %v2950
        %v2952 = vpop.f32.mrb[0].mxu0
        %v2953 = vadd.f32 %v2720, %v2952
        %v2954 = vpop.f32.mrb[0].mxu0
        %2955 = vmatprep.mubr.f32.mxu0 0.0
        %v2956 = vand.u32 %v493, 4294901760
        %2957 = vmatmul.mubr.f32.gmra.mrb[0].mxu0 %v2956
        %v2958 = vpop.f32.mrb[0].mxu0
        %v2959 = vadd.f32 %v2728, %v2958
        %v2960 = vpop.f32.mrb[0].mxu0
        %2961 = vmatprep.mubr.f32.mxu0 0.0
        %v2962 = vand.u32 %v494, 4294901760
        %2963 = vmatmul.mubr.f32.gmra.mrb[0].mxu0 %v2962
        %v2964 = vpop.f32.mrb[0].mxu0
        %v2965 = vadd.f32 %v2736, %v2964
        %v2966 = vpop.f32.mrb[0].mxu0
        %2967 = vmatprep.mubr.f32.mxu0 0.0
        %v2968 = vand.u32 %v495, 4294901760
        %2969 = vmatmul.mubr.f32.gmra.mrb[0].mxu0 %v2968
        %v2970 = vpop.f32.mrb[0].mxu0
        %v2971 = vadd.f32 %v2744, %v2970
        %v2972 = vpop.f32.mrb[0].mxu0
        %2973 = vmatprep.mubr.f32.mxu0 0.0
        %v2974 = vand.u32 %v496, 4294901760
        %2975 = vmatmul.mubr.f32.gmra.mrb[0].mxu0 %v2974
        %v2976 = vpop.f32.mrb[0].mxu0
        %v2977 = vadd.f32 %v2752, %v2976
        %v2978 = vpop.f32.mrb[0].mxu0
        %2979 = vmatprep.mubr.f32.mxu0 0.0
        %v2980 = vand.u32 %v497, 4294901760
        %2981 = vmatmul.mubr.f32.gmra.mrb[0].mxu0 %v2980
        %v2982 = vpop.f32.mrb[0].mxu0
        %v2983 = vadd.f32 %v2760, %v2982
        %v2984 = vpop.f32.mrb[0].mxu0
        %2985 = vmatprep.mubr.f32.mxu0 0.0
        %v2986 = vand.u32 %v498, 4294901760
        %2987 = vmatmul.mubr.f32.gmra.mrb[0].mxu0 %v2986
        %v2988 = vpop.f32.mrb[0].mxu0
        %v2989 = vadd.f32 %v2768, %v2988
        %v2990 = vpop.f32.mrb[0].mxu0
        %2991 = vmatprep.mubr.f32.mxu0 0.0
        %v2992 = vand.u32 %v499, 4294901760
        %2993 = vmatmul.mubr.f32.gmra.mrb[0].mxu0 %v2992
        %v2994 = vpop.f32.mrb[0].mxu0
        %v2995 = vadd.f32 %v2776, %v2994
        %v2996 = vpop.f32.mrb[0].mxu0
        %2997 = vmatprep.mubr.f32.mxu0 0.0
        %v2998 = vand.u32 %v500, 4294901760
        %2999 = vmatmul.mubr.f32.gmra.mrb[0].mxu0 %v2998
        %v3000 = vpop.f32.mrb[0].mxu0
        %v3001 = vadd.f32 %v2784, %v3000
        %v3002 = vpop.f32.mrb[0].mxu0
        %3003 = vmatprep.mubr.f32.mxu0 0.0
        %v3004 = vand.u32 %v501, 4294901760
        %3005 = vmatmul.mubr.f32.gmra.mrb[0].mxu0 %v3004
        %v3006 = vpop.f32.mrb[0].mxu0
        %v3007 = vadd.f32 %v2792, %v3006
        %v3008 = vpop.f32.mrb[0].mxu0
        %3009 = vmatprep.mubr.f32.mxu0 0.0
        %v3010 = vand.u32 %v502, 4294901760
        %3011 = vmatmul.mubr.f32.gmra.mrb[0].mxu0 %v3010
        %v3012 = vpop.f32.mrb[0].mxu0
        %v3013 = vadd.f32 %v2800, %v3012
        %v3014 = vpop.f32.mrb[0].mxu0
        %3015 = vmatprep.mubr.f32.mxu0 0.0
        %v3016 = vand.u32 %v503, 4294901760
        %3017 = vmatmul.mubr.f32.gmra.mrb[0].mxu0 %v3016
        %v3018 = vpop.f32.mrb[0].mxu0
        %v3019 = vadd.f32 %v2808, %v3018
        %v3020 = vpop.f32.mrb[0].mxu0
        %3021 = vmatprep.mubr.f32.mxu0 0.0
        %v3022 = vand.u32 %v504, 4294901760
        %3023 = vmatmul.mubr.f32.gmra.mrb[0].mxu0 %v3022
        %v3024 = vpop.f32.mrb[0].mxu0
        %v3025 = vadd.f32 %v2816, %v3024
        %v3026 = vpop.f32.mrb[0].mxu0
        %3027 = vdwg.mxu0
        %3028 = vmatprep.subr.mxu0 0.0
        %v3029 = vand.u32 %v601, 4294901760
        %3030 = vmatpush1.msra.mxu0 %v3029
        %3031 = vmatprep.subr.mxu0 0.0
        %v3032 = vand.u32 %v602, 4294901760
        %3033 = vmatpush1.msra.mxu0 %v3032
        %3034 = vmatprep.subr.mxu0 0.0
        %v3035 = vand.u32 %v603, 4294901760
        %3036 = vmatpush1.msra.mxu0 %v3035
        %3037 = vmatprep.subr.mxu0 0.0
        %v3038 = vand.u32 %v604, 4294901760
        %3039 = vmatpush1.msra.mxu0 %v3038
        %3040 = vmatprep.subr.mxu0 0.0
        %v3041 = vand.u32 %v605, 4294901760
        %3042 = vmatpush1.msra.mxu0 %v3041
        %3043 = vmatprep.subr.mxu0 0.0
        %v3044 = vand.u32 %v606, 4294901760
        %3045 = vmatpush1.msra.mxu0 %v3044
        %3046 = vmatprep.subr.mxu0 0.0
        %v3047 = vand.u32 %v607, 4294901760
        %3048 = vmatpush1.msra.mxu0 %v3047
        %3049 = vmatprep.subr.mxu0 0.0
        %v3050 = vand.u32 %v608, 4294901760
        %3051 = vmatpush1.msra.mxu0 %v3050
        %3052 = vmatprep.subr.mxu0 0.0
        %v3053 = vand.u32 %v609, 4294901760
        %3054 = vmatpush1.msra.mxu0 %v3053
        %3055 = vmatprep.subr.mxu0 0.0
        %v3056 = vand.u32 %v610, 4294901760
        %3057 = vmatpush1.msra.mxu0 %v3056
        %3058 = vmatprep.subr.mxu0 0.0
        %v3059 = vand.u32 %v611, 4294901760
        %3060 = vmatpush1.msra.mxu0 %v3059
        %3061 = vmatprep.subr.mxu0 0.0
        %v3062 = vand.u32 %v612, 4294901760
        %3063 = vmatpush1.msra.mxu0 %v3062
        %3064 = vmatprep.subr.mxu0 0.0
        %v3065 = vand.u32 %v613, 4294901760
        %3066 = vmatpush1.msra.mxu0 %v3065
        %3067 = vmatprep.subr.mxu0 0.0
        %v3068 = vand.u32 %v614, 4294901760
        %3069 = vmatpush1.msra.mxu0 %v3068
        %3070 = vmatprep.subr.mxu0 0.0
        %v3071 = vand.u32 %v615, 4294901760
        %3072 = vmatpush1.msra.mxu0 %v3071
        %3073 = vmatprep.subr.mxu0 0.0
        %v3074 = vand.u32 %v616, 4294901760
        %3075 = vmatpush1.msra.mxu0 %v3074
        %3076 = vmatprep.subr.mxu0 0.0
        %3077 = vmatpush1.msra.mxu0 0.0
        %3078 = vmatprep.subr.mxu0 0.0
        %3079 = vmatpush1.msra.mxu0 0.0
        %3080 = vmatprep.subr.mxu0 0.0
        %3081 = vmatpush1.msra.mxu0 0.0
        %3082 = vmatprep.subr.mxu0 0.0
        %3083 = vmatpush1.msra.mxu0 0.0
        %3084 = vmatprep.subr.mxu0 0.0
        %3085 = vmatpush1.msra.mxu0 0.0
        %3086 = vmatprep.subr.mxu0 0.0
        %3087 = vmatpush1.msra.mxu0 0.0
        %3088 = vmatprep.subr.mxu0 0.0
        %3089 = vmatpush1.msra.mxu0 0.0
        %3090 = vmatprep.subr.mxu0 0.0
        %3091 = vmatpush1.msra.mxu0 0.0
        %3092 = vmatprep.subr.mxu0 0.0
        %3093 = vmatpush1.msra.mxu0 0.0
        %3094 = vmatprep.subr.mxu0 0.0
        %3095 = vmatpush1.msra.mxu0 0.0
        %3096 = vmatprep.subr.mxu0 0.0
        %3097 = vmatpush1.msra.mxu0 0.0
        %3098 = vmatprep.subr.mxu0 0.0
        %3099 = vmatpush1.msra.mxu0 0.0
        %3100 = vmatprep.subr.mxu0 0.0
        %3101 = vmatpush1.msra.mxu0 0.0
        %3102 = vmatprep.subr.mxu0 0.0
        %3103 = vmatpush1.msra.mxu0 0.0
        %3104 = vmatprep.subr.mxu0 0.0
        %3105 = vmatpush1.msra.mxu0 0.0
        %3106 = vmatprep.subr.mxu0 0.0
        %3107 = vmatpush1.msra.mxu0 0.0
        %3108 = vmatprep.mubr.f32.mxu0 0.0
        %v3109 = vand.u32 %v489, 4294901760
        %3110 = vmatmul.mubr.f32.gmra.mrb[0].mxu0 %v3109
        %v3111 = vpop.f32.mrb[0].mxu0
        %v3112 = vadd.f32 %v2935, %v3111
        %v3113 = vpop.f32.mrb[0].mxu0
        %3114 = vmatprep.mubr.f32.mxu0 0.0
        %v3115 = vand.u32 %v490, 4294901760
        %3116 = vmatmul.mubr.f32.gmra.mrb[0].mxu0 %v3115
        %v3117 = vpop.f32.mrb[0].mxu0
        %v3118 = vadd.f32 %v2941, %v3117
        %v3119 = vpop.f32.mrb[0].mxu0
        %3120 = vmatprep.mubr.f32.mxu0 0.0
        %v3121 = vand.u32 %v491, 4294901760
        %3122 = vmatmul.mubr.f32.gmra.mrb[0].mxu0 %v3121
        %v3123 = vpop.f32.mrb[0].mxu0
        %v3124 = vadd.f32 %v2947, %v3123
        %v3125 = vpop.f32.mrb[0].mxu0
        %3126 = vmatprep.mubr.f32.mxu0 0.0
        %v3127 = vand.u32 %v492, 4294901760
        %3128 = vmatmul.mubr.f32.gmra.mrb[0].mxu0 %v3127
        %v3129 = vpop.f32.mrb[0].mxu0
        %v3130 = vadd.f32 %v2953, %v3129
        %v3131 = vpop.f32.mrb[0].mxu0
        %3132 = vmatprep.mubr.f32.mxu0 0.0
        %v3133 = vand.u32 %v493, 4294901760
        %3134 = vmatmul.mubr.f32.gmra.mrb[0].mxu0 %v3133
        %v3135 = vpop.f32.mrb[0].mxu0
        %v3136 = vadd.f32 %v2959, %v3135
        %v3137 = vpop.f32.mrb[0].mxu0
        %3138 = vmatprep.mubr.f32.mxu0 0.0
        %v3139 = vand.u32 %v494, 4294901760
        %3140 = vmatmul.mubr.f32.gmra.mrb[0].mxu0 %v3139
        %v3141 = vpop.f32.mrb[0].mxu0
        %v3142 = vadd.f32 %v2965, %v3141
        %v3143 = vpop.f32.mrb[0].mxu0
        %3144 = vmatprep.mubr.f32.mxu0 0.0
        %v3145 = vand.u32 %v495, 4294901760
        %3146 = vmatmul.mubr.f32.gmra.mrb[0].mxu0 %v3145
        %v3147 = vpop.f32.mrb[0].mxu0
        %v3148 = vadd.f32 %v2971, %v3147
        %v3149 = vpop.f32.mrb[0].mxu0
        %3150 = vmatprep.mubr.f32.mxu0 0.0
        %v3151 = vand.u32 %v496, 4294901760
        %3152 = vmatmul.mubr.f32.gmra.mrb[0].mxu0 %v3151
        %v3153 = vpop.f32.mrb[0].mxu0
        %v3154 = vadd.f32 %v2977, %v3153
        %v3155 = vpop.f32.mrb[0].mxu0
        %3156 = vmatprep.mubr.f32.mxu0 0.0
        %v3157 = vand.u32 %v497, 4294901760
        %3158 = vmatmul.mubr.f32.gmra.mrb[0].mxu0 %v3157
        %v3159 = vpop.f32.mrb[0].mxu0
        %v3160 = vadd.f32 %v2983, %v3159
        %v3161 = vpop.f32.mrb[0].mxu0
        %3162 = vmatprep.mubr.f32.mxu0 0.0
        %v3163 = vand.u32 %v498, 4294901760
        %3164 = vmatmul.mubr.f32.gmra.mrb[0].mxu0 %v3163
        %v3165 = vpop.f32.mrb[0].mxu0
        %v3166 = vadd.f32 %v2989, %v3165
        %v3167 = vpop.f32.mrb[0].mxu0
        %3168 = vmatprep.mubr.f32.mxu0 0.0
        %v3169 = vand.u32 %v499, 4294901760
        %3170 = vmatmul.mubr.f32.gmra.mrb[0].mxu0 %v3169
        %v3171 = vpop.f32.mrb[0].mxu0
        %v3172 = vadd.f32 %v2995, %v3171
        %v3173 = vpop.f32.mrb[0].mxu0
        %3174 = vmatprep.mubr.f32.mxu0 0.0
        %v3175 = vand.u32 %v500, 4294901760
        %3176 = vmatmul.mubr.f32.gmra.mrb[0].mxu0 %v3175
        %v3177 = vpop.f32.mrb[0].mxu0
        %v3178 = vadd.f32 %v3001, %v3177
        %v3179 = vpop.f32.mrb[0].mxu0
        %3180 = vmatprep.mubr.f32.mxu0 0.0
        %v3181 = vand.u32 %v501, 4294901760
        %3182 = vmatmul.mubr.f32.gmra.mrb[0].mxu0 %v3181
        %v3183 = vpop.f32.mrb[0].mxu0
        %v3184 = vadd.f32 %v3007, %v3183
        %v3185 = vpop.f32.mrb[0].mxu0
        %3186 = vmatprep.mubr.f32.mxu0 0.0
        %v3187 = vand.u32 %v502, 4294901760
        %3188 = vmatmul.mubr.f32.gmra.mrb[0].mxu0 %v3187
        %v3189 = vpop.f32.mrb[0].mxu0
        %v3190 = vadd.f32 %v3013, %v3189
        %v3191 = vpop.f32.mrb[0].mxu0
        %3192 = vmatprep.mubr.f32.mxu0 0.0
        %v3193 = vand.u32 %v503, 4294901760
        %3194 = vmatmul.mubr.f32.gmra.mrb[0].mxu0 %v3193
        %v3195 = vpop.f32.mrb[0].mxu0
        %v3196 = vadd.f32 %v3019, %v3195
        %v3197 = vpop.f32.mrb[0].mxu0
        %3198 = vmatprep.mubr.f32.mxu0 0.0
        %v3199 = vand.u32 %v504, 4294901760
        %3200 = vmatmul.mubr.f32.gmra.mrb[0].mxu0 %v3199
        %v3201 = vpop.f32.mrb[0].mxu0
        %v3202 = vadd.f32 %v3025, %v3201
        %v3203 = vpop.f32.mrb[0].mxu0
        %3204 = vdwg.mxu0
        %v3205 = vld [vmem:[%s4] sm:$0x1]
        %3207 = vset.pattern.permute.xlu0 2
        %3208 = vperm.xlu0 %3207, %v375
        %v3209 = vpop.permute.xlu0 %3208
        %3212 = vset.pattern.permute.xlu0 2
        %3213 = vperm.xlu0 %3212, %v376
        %v3214 = vpop.permute.xlu0 %3213
        %3217 = vset.pattern.permute.xlu0 2
        %3218 = vperm.xlu0 %3217, %v377
        %v3219 = vpop.permute.xlu0 %3218
        %3222 = vset.pattern.permute.xlu0 2
        %3223 = vperm.xlu0 %3222, %v378
        %v3224 = vpop.permute.xlu0 %3223
        %3227 = vset.pattern.permute.xlu0 2
        %3228 = vperm.xlu0 %3227, %v379
        %v3229 = vpop.permute.xlu0 %3228
        %3232 = vset.pattern.permute.xlu0 2
        %3233 = vperm.xlu0 %3232, %v380
        %v3234 = vpop.permute.xlu0 %3233
        %3237 = vset.pattern.permute.xlu0 2
        %3238 = vperm.xlu0 %3237, %v381
        %v3239 = vpop.permute.xlu0 %3238
        %3242 = vset.pattern.permute.xlu0 2
        %3243 = vperm.xlu0 %3242, %v382
        %v3244 = vpop.permute.xlu0 %3243
        %3247 = vset.pattern.permute.xlu0 2
        %3248 = vperm.xlu0 %3247, %v383
        %v3249 = vpop.permute.xlu0 %3248
        %3252 = vset.pattern.permute.xlu0 2
        %3253 = vperm.xlu0 %3252, %v384
        %v3254 = vpop.permute.xlu0 %3253
        %3257 = vset.pattern.permute.xlu0 2
        %3258 = vperm.xlu0 %3257, %v385
        %v3259 = vpop.permute.xlu0 %3258
        %3262 = vset.pattern.permute.xlu0 2
        %3263 = vperm.xlu0 %3262, %v386
        %v3264 = vpop.permute.xlu0 %3263
        %3267 = vset.pattern.permute.xlu0 2
        %3268 = vperm.xlu0 %3267, %v387
        %v3269 = vpop.permute.xlu0 %3268
        %3272 = vset.pattern.permute.xlu0 2
        %3273 = vperm.xlu0 %3272, %v388
        %v3274 = vpop.permute.xlu0 %3273
        %3277 = vset.pattern.permute.xlu0 2
        %3278 = vperm.xlu0 %3277, %v389
        %v3279 = vpop.permute.xlu0 %3278
        %3282 = vset.pattern.permute.xlu0 2
        %3283 = vperm.xlu0 %3282, %v390
        %v3284 = vpop.permute.xlu0 %3283
        %v3287 = vlaneseq
        %v3288 = vshrl.u32 %v3287, 7
        %v3289 = vsub.s32 0, %v3288
        %v3290 = vrot.slane %v3205, %v3289
        %v3292 = vmul.f32 %v3209, %v3290
        %v3293 = vmul.f32 %v3214, %v3290
        %v3294 = vmul.f32 %v3219, %v3290
        %v3295 = vmul.f32 %v3224, %v3290
        %v3296 = vmul.f32 %v3229, %v3290
        %v3297 = vmul.f32 %v3234, %v3290
        %v3298 = vmul.f32 %v3239, %v3290
        %v3299 = vmul.f32 %v3244, %v3290
        %v3300 = vmul.f32 %v3249, %v3290
        %v3301 = vmul.f32 %v3254, %v3290
        %v3302 = vmul.f32 %v3259, %v3290
        %v3303 = vmul.f32 %v3264, %v3290
        %v3304 = vmul.f32 %v3269, %v3290
        %v3305 = vmul.f32 %v3274, %v3290
        %v3306 = vmul.f32 %v3279, %v3290
        %v3307 = vmul.f32 %v3284, %v3290
        %v3308 = vadd.f32 %v3112, %v3292
        %v3309 = vadd.f32 %v3118, %v3293
        %v3310 = vadd.f32 %v3124, %v3294
        %v3311 = vadd.f32 %v3130, %v3295
        %v3312 = vadd.f32 %v3136, %v3296
        %v3313 = vadd.f32 %v3142, %v3297
        %v3314 = vadd.f32 %v3148, %v3298
        %v3315 = vadd.f32 %v3154, %v3299
        %v3316 = vadd.f32 %v3160, %v3300
        %v3317 = vadd.f32 %v3166, %v3301
        %v3318 = vadd.f32 %v3172, %v3302
        %v3319 = vadd.f32 %v3178, %v3303
        %v3320 = vadd.f32 %v3184, %v3304
        %v3321 = vadd.f32 %v3190, %v3305
        %v3322 = vadd.f32 %v3196, %v3306
        %v3323 = vadd.f32 %v3202, %v3307
        %v3324 = vld [vmem:[%s5] sm:$0x1]
        %v3326 = vlaneseq
        %v3327 = vshrl.u32 %v3326, 7
        %v3328 = vsub.s32 0, %v3327
        %v3329 = vrot.slane %v3324, %v3328
        %v3331 = vadd.f32 %v3308, %v3329
        %v3332 = vadd.f32 %v3309, %v3329
        %v3333 = vadd.f32 %v3310, %v3329
        %v3334 = vadd.f32 %v3311, %v3329
        %v3335 = vadd.f32 %v3312, %v3329
        %v3336 = vadd.f32 %v3313, %v3329
        %v3337 = vadd.f32 %v3314, %v3329
        %v3338 = vadd.f32 %v3315, %v3329
        %v3339 = vadd.f32 %v3316, %v3329
        %v3340 = vadd.f32 %v3317, %v3329
        %v3341 = vadd.f32 %v3318, %v3329
        %v3342 = vadd.f32 %v3319, %v3329
        %v3343 = vadd.f32 %v3320, %v3329
        %v3344 = vadd.f32 %v3321, %v3329
        %v3345 = vadd.f32 %v3322, %v3329
        %v3346 = vadd.f32 %v3323, %v3329
        %v3347 = vmax.f32 %v3331, 0.0
        %v3348 = vmax.f32 %v3332, 0.0
        %v3349 = vmax.f32 %v3333, 0.0
        %v3350 = vmax.f32 %v3334, 0.0
        %v3351 = vmax.f32 %v3335, 0.0
        %v3352 = vmax.f32 %v3336, 0.0
        %v3353 = vmax.f32 %v3337, 0.0
        %v3354 = vmax.f32 %v3338, 0.0
        %v3355 = vmax.f32 %v3339, 0.0
        %v3356 = vmax.f32 %v3340, 0.0
        %v3357 = vmax.f32 %v3341, 0.0
        %v3358 = vmax.f32 %v3342, 0.0
        %v3359 = vmax.f32 %v3343, 0.0
        %v3360 = vmax.f32 %v3344, 0.0
        %v3361 = vmax.f32 %v3345, 0.0
        %v3362 = vmax.f32 %v3346, 0.0
        %v3363 = vld [vmem:[#allocation2] sm:$0xff]
        %v3364 = vld [vmem:[#allocation2 + $0x8] sm:$0xff]
        %v3365 = vld [vmem:[#allocation2 + $0x10] sm:$0xff]
        %v3366 = vld [vmem:[#allocation2 + $0x18] sm:$0xff]
        %v3367 = vld [vmem:[#allocation2 + $0x20] sm:$0xff]
        %v3368 = vld [vmem:[#allocation2 + $0x28] sm:$0xff]
        %v3369 = vld [vmem:[#allocation2 + $0x30] sm:$0xff]
        %v3370 = vld [vmem:[#allocation2 + $0x38] sm:$0xff]
        %v3371 = vld [vmem:[#allocation2 + $0x40] sm:$0xff]
        %v3372 = vld [vmem:[#allocation2 + $0x48] sm:$0xff]
        %v3373 = vld [vmem:[#allocation2 + $0x50] sm:$0xff]
        %v3374 = vld [vmem:[#allocation2 + $0x58] sm:$0xff]
        %v3375 = vld [vmem:[#allocation2 + $0x60] sm:$0xff]
        %v3376 = vld [vmem:[#allocation2 + $0x68] sm:$0xff]
        %v3377 = vld [vmem:[#allocation2 + $0x70] sm:$0xff]
        %v3378 = vld [vmem:[#allocation2 + $0x78] sm:$0xff]
        %v3379 = vld [vmem:[%s7] sm:$0x1]
        %v3381 = vlaneseq
        %v3382 = vshrl.u32 %v3381, 7
        %v3383 = vsub.s32 0, %v3382
        %v3384 = vrot.slane %v3379, %v3383
        %3386 = vmatprep.subr.mxu0 0.0
        %v3387 = vand.u32 %v3363, 4294901760
        %3388 = vmatpush1.msra.mxu0 %v3387
        %3389 = vmatprep.subr.mxu0 0.0
        %v3390 = vand.u32 %v3364, 4294901760
        %3391 = vmatpush1.msra.mxu0 %v3390
        %3392 = vmatprep.subr.mxu0 0.0
        %v3393 = vand.u32 %v3365, 4294901760
        %3394 = vmatpush1.msra.mxu0 %v3393
        %3395 = vmatprep.subr.mxu0 0.0
        %v3396 = vand.u32 %v3366, 4294901760
        %3397 = vmatpush1.msra.mxu0 %v3396
        %3398 = vmatprep.subr.mxu0 0.0
        %v3399 = vand.u32 %v3367, 4294901760
        %3400 = vmatpush1.msra.mxu0 %v3399
        %3401 = vmatprep.subr.mxu0 0.0
        %v3402 = vand.u32 %v3368, 4294901760
        %3403 = vmatpush1.msra.mxu0 %v3402
        %3404 = vmatprep.subr.mxu0 0.0
        %v3405 = vand.u32 %v3369, 4294901760
        %3406 = vmatpush1.msra.mxu0 %v3405
        %3407 = vmatprep.subr.mxu0 0.0
        %v3408 = vand.u32 %v3370, 4294901760
        %3409 = vmatpush1.msra.mxu0 %v3408
        %3410 = vmatprep.subr.mxu0 0.0
        %v3411 = vand.u32 %v3371, 4294901760
        %3412 = vmatpush1.msra.mxu0 %v3411
        %3413 = vmatprep.subr.mxu0 0.0
        %v3414 = vand.u32 %v3372, 4294901760
        %3415 = vmatpush1.msra.mxu0 %v3414
        %3416 = vmatprep.subr.mxu0 0.0
        %v3417 = vand.u32 %v3373, 4294901760
        %3418 = vmatpush1.msra.mxu0 %v3417
        %3419 = vmatprep.subr.mxu0 0.0
        %v3420 = vand.u32 %v3374, 4294901760
        %3421 = vmatpush1.msra.mxu0 %v3420
        %3422 = vmatprep.subr.mxu0 0.0
        %v3423 = vand.u32 %v3375, 4294901760
        %3424 = vmatpush1.msra.mxu0 %v3423
        %3425 = vmatprep.subr.mxu0 0.0
        %v3426 = vand.u32 %v3376, 4294901760
        %3427 = vmatpush1.msra.mxu0 %v3426
        %3428 = vmatprep.subr.mxu0 0.0
        %v3429 = vand.u32 %v3377, 4294901760
        %3430 = vmatpush1.msra.mxu0 %v3429
        %3431 = vmatprep.subr.mxu0 0.0
        %v3432 = vand.u32 %v3378, 4294901760
        %3433 = vmatpush1.msra.mxu0 %v3432
        %3434 = vmatprep.subr.mxu0 0.0
        %3435 = vmatpush1.msra.mxu0 0.0
        %3436 = vmatprep.subr.mxu0 0.0
        %3437 = vmatpush1.msra.mxu0 0.0
        %3438 = vmatprep.subr.mxu0 0.0
        %3439 = vmatpush1.msra.mxu0 0.0
        %3440 = vmatprep.subr.mxu0 0.0
        %3441 = vmatpush1.msra.mxu0 0.0
        %3442 = vmatprep.subr.mxu0 0.0
        %3443 = vmatpush1.msra.mxu0 0.0
        %3444 = vmatprep.subr.mxu0 0.0
        %3445 = vmatpush1.msra.mxu0 0.0
        %3446 = vmatprep.subr.mxu0 0.0
        %3447 = vmatpush1.msra.mxu0 0.0
        %3448 = vmatprep.subr.mxu0 0.0
        %3449 = vmatpush1.msra.mxu0 0.0
        %3450 = vmatprep.subr.mxu0 0.0
        %3451 = vmatpush1.msra.mxu0 0.0
        %3452 = vmatprep.subr.mxu0 0.0
        %3453 = vmatpush1.msra.mxu0 0.0
        %3454 = vmatprep.subr.mxu0 0.0
        %3455 = vmatpush1.msra.mxu0 0.0
        %3456 = vmatprep.subr.mxu0 0.0
        %3457 = vmatpush1.msra.mxu0 0.0
        %3458 = vmatprep.subr.mxu0 0.0
        %3459 = vmatpush1.msra.mxu0 0.0
        %3460 = vmatprep.subr.mxu0 0.0
        %3461 = vmatpush1.msra.mxu0 0.0
        %3462 = vmatprep.subr.mxu0 0.0
        %3463 = vmatpush1.msra.mxu0 0.0
        %3464 = vmatprep.subr.mxu0 0.0
        %3465 = vmatpush1.msra.mxu0 0.0
        %3466 = vmatprep.mubr.f32.mxu0 0.0
        %v3467 = vand.u32 %v3347, 4294901760
        %v3468 = vsub.f32 %v3347, %v3467
        %v3469 = vand.u32 %v3468, 4294901760
        %v3470 = vsub.f32 %v3468, %v3469
        %v3471 = vand.u32 %v3470, 4294901760
        %3472 = vmatmul.mubr.f32.gmra.mrb[0].mxu0 %v3471
        %v3473 = vpop.f32.mrb[0].mxu0
        %v3474 = vadd.f32 %v3384, %v3473
        %v3475 = vpop.f32.mrb[0].mxu0
        %3476 = vmatprep.mubr.f32.mxu0 0.0
        %v3477 = vand.u32 %v3348, 4294901760
        %v3478 = vsub.f32 %v3348, %v3477
        %v3479 = vand.u32 %v3478, 4294901760
        %v3480 = vsub.f32 %v3478, %v3479
        %v3481 = vand.u32 %v3480, 4294901760
        %3482 = vmatmul.mubr.f32.gmra.mrb[0].mxu0 %v3481
        %v3483 = vpop.f32.mrb[0].mxu0
        %v3484 = vadd.f32 %v3384, %v3483
        %v3485 = vpop.f32.mrb[0].mxu0
        %3486 = vmatprep.mubr.f32.mxu0 0.0
        %v3487 = vand.u32 %v3349, 4294901760
        %v3488 = vsub.f32 %v3349, %v3487
        %v3489 = vand.u32 %v3488, 4294901760
        %v3490 = vsub.f32 %v3488, %v3489
        %v3491 = vand.u32 %v3490, 4294901760
        %3492 = vmatmul.mubr.f32.gmra.mrb[0].mxu0 %v3491
        %v3493 = vpop.f32.mrb[0].mxu0
        %v3494 = vadd.f32 %v3384, %v3493
        %v3495 = vpop.f32.mrb[0].mxu0
        %3496 = vmatprep.mubr.f32.mxu0 0.0
        %v3497 = vand.u32 %v3350, 4294901760
        %v3498 = vsub.f32 %v3350, %v3497
        %v3499 = vand.u32 %v3498, 4294901760
        %v3500 = vsub.f32 %v3498, %v3499
        %v3501 = vand.u32 %v3500, 4294901760
        %3502 = vmatmul.mubr.f32.gmra.mrb[0].mxu0 %v3501
        %v3503 = vpop.f32.mrb[0].mxu0
        %v3504 = vadd.f32 %v3384, %v3503
        %v3505 = vpop.f32.mrb[0].mxu0
        %3506 = vmatprep.mubr.f32.mxu0 0.0
        %v3507 = vand.u32 %v3351, 4294901760
        %v3508 = vsub.f32 %v3351, %v3507
        %v3509 = vand.u32 %v3508, 4294901760
        %v3510 = vsub.f32 %v3508, %v3509
        %v3511 = vand.u32 %v3510, 4294901760
        %3512 = vmatmul.mubr.f32.gmra.mrb[0].mxu0 %v3511
        %v3513 = vpop.f32.mrb[0].mxu0
        %v3514 = vadd.f32 %v3384, %v3513
        %v3515 = vpop.f32.mrb[0].mxu0
        %3516 = vmatprep.mubr.f32.mxu0 0.0
        %v3517 = vand.u32 %v3352, 4294901760
        %v3518 = vsub.f32 %v3352, %v3517
        %v3519 = vand.u32 %v3518, 4294901760
        %v3520 = vsub.f32 %v3518, %v3519
        %v3521 = vand.u32 %v3520, 4294901760
        %3522 = vmatmul.mubr.f32.gmra.mrb[0].mxu0 %v3521
        %v3523 = vpop.f32.mrb[0].mxu0
        %v3524 = vadd.f32 %v3384, %v3523
        %v3525 = vpop.f32.mrb[0].mxu0
        %3526 = vmatprep.mubr.f32.mxu0 0.0
        %v3527 = vand.u32 %v3353, 4294901760
        %v3528 = vsub.f32 %v3353, %v3527
        %v3529 = vand.u32 %v3528, 4294901760
        %v3530 = vsub.f32 %v3528, %v3529
        %v3531 = vand.u32 %v3530, 4294901760
        %3532 = vmatmul.mubr.f32.gmra.mrb[0].mxu0 %v3531
        %v3533 = vpop.f32.mrb[0].mxu0
        %v3534 = vadd.f32 %v3384, %v3533
        %v3535 = vpop.f32.mrb[0].mxu0
        %3536 = vmatprep.mubr.f32.mxu0 0.0
        %v3537 = vand.u32 %v3354, 4294901760
        %v3538 = vsub.f32 %v3354, %v3537
        %v3539 = vand.u32 %v3538, 4294901760
        %v3540 = vsub.f32 %v3538, %v3539
        %v3541 = vand.u32 %v3540, 4294901760
        %3542 = vmatmul.mubr.f32.gmra.mrb[0].mxu0 %v3541
        %v3543 = vpop.f32.mrb[0].mxu0
        %v3544 = vadd.f32 %v3384, %v3543
        %v3545 = vpop.f32.mrb[0].mxu0
        %3546 = vmatprep.mubr.f32.mxu0 0.0
        %v3547 = vand.u32 %v3355, 4294901760
        %v3548 = vsub.f32 %v3355, %v3547
        %v3549 = vand.u32 %v3548, 4294901760
        %v3550 = vsub.f32 %v3548, %v3549
        %v3551 = vand.u32 %v3550, 4294901760
        %3552 = vmatmul.mubr.f32.gmra.mrb[0].mxu0 %v3551
        %v3553 = vpop.f32.mrb[0].mxu0
        %v3554 = vadd.f32 %v3384, %v3553
        %v3555 = vpop.f32.mrb[0].mxu0
        %3556 = vmatprep.mubr.f32.mxu0 0.0
        %v3557 = vand.u32 %v3356, 4294901760
        %v3558 = vsub.f32 %v3356, %v3557
        %v3559 = vand.u32 %v3558, 4294901760
        %v3560 = vsub.f32 %v3558, %v3559
        %v3561 = vand.u32 %v3560, 4294901760
        %3562 = vmatmul.mubr.f32.gmra.mrb[0].mxu0 %v3561
        %v3563 = vpop.f32.mrb[0].mxu0
        %v3564 = vadd.f32 %v3384, %v3563
        %v3565 = vpop.f32.mrb[0].mxu0
        %3566 = vmatprep.mubr.f32.mxu0 0.0
        %v3567 = vand.u32 %v3357, 4294901760
        %v3568 = vsub.f32 %v3357, %v3567
        %v3569 = vand.u32 %v3568, 4294901760
        %v3570 = vsub.f32 %v3568, %v3569
        %v3571 = vand.u32 %v3570, 4294901760
        %3572 = vmatmul.mubr.f32.gmra.mrb[0].mxu0 %v3571
        %v3573 = vpop.f32.mrb[0].mxu0
        %v3574 = vadd.f32 %v3384, %v3573
        %v3575 = vpop.f32.mrb[0].mxu0
        %3576 = vmatprep.mubr.f32.mxu0 0.0
        %v3577 = vand.u32 %v3358, 4294901760
        %v3578 = vsub.f32 %v3358, %v3577
        %v3579 = vand.u32 %v3578, 4294901760
        %v3580 = vsub.f32 %v3578, %v3579
        %v3581 = vand.u32 %v3580, 4294901760
        %3582 = vmatmul.mubr.f32.gmra.mrb[0].mxu0 %v3581
        %v3583 = vpop.f32.mrb[0].mxu0
        %v3584 = vadd.f32 %v3384, %v3583
        %v3585 = vpop.f32.mrb[0].mxu0
        %3586 = vmatprep.mubr.f32.mxu0 0.0
        %v3587 = vand.u32 %v3359, 4294901760
        %v3588 = vsub.f32 %v3359, %v3587
        %v3589 = vand.u32 %v3588, 4294901760
        %v3590 = vsub.f32 %v3588, %v3589
        %v3591 = vand.u32 %v3590, 4294901760
        %3592 = vmatmul.mubr.f32.gmra.mrb[0].mxu0 %v3591
        %v3593 = vpop.f32.mrb[0].mxu0
        %v3594 = vadd.f32 %v3384, %v3593
        %v3595 = vpop.f32.mrb[0].mxu0
        %3596 = vmatprep.mubr.f32.mxu0 0.0
        %v3597 = vand.u32 %v3360, 4294901760
        %v3598 = vsub.f32 %v3360, %v3597
        %v3599 = vand.u32 %v3598, 4294901760
        %v3600 = vsub.f32 %v3598, %v3599
        %v3601 = vand.u32 %v3600, 4294901760
        %3602 = vmatmul.mubr.f32.gmra.mrb[0].mxu0 %v3601
        %v3603 = vpop.f32.mrb[0].mxu0
        %v3604 = vadd.f32 %v3384, %v3603
        %v3605 = vpop.f32.mrb[0].mxu0
        %3606 = vmatprep.mubr.f32.mxu0 0.0
        %v3607 = vand.u32 %v3361, 4294901760
        %v3608 = vsub.f32 %v3361, %v3607
        %v3609 = vand.u32 %v3608, 4294901760
        %v3610 = vsub.f32 %v3608, %v3609
        %v3611 = vand.u32 %v3610, 4294901760
        %3612 = vmatmul.mubr.f32.gmra.mrb[0].mxu0 %v3611
        %v3613 = vpop.f32.mrb[0].mxu0
        %v3614 = vadd.f32 %v3384, %v3613
        %v3615 = vpop.f32.mrb[0].mxu0
        %3616 = vmatprep.mubr.f32.mxu0 0.0
        %v3617 = vand.u32 %v3362, 4294901760
        %v3618 = vsub.f32 %v3362, %v3617
        %v3619 = vand.u32 %v3618, 4294901760
        %v3620 = vsub.f32 %v3618, %v3619
        %v3621 = vand.u32 %v3620, 4294901760
        %3622 = vmatmul.mubr.f32.gmra.mrb[0].mxu0 %v3621
        %v3623 = vpop.f32.mrb[0].mxu0
        %v3624 = vadd.f32 %v3384, %v3623
        %v3625 = vpop.f32.mrb[0].mxu0
        %3626 = vdwg.mxu0
        %3627 = vmatprep.subr.mxu0 0.0
        %v3628 = vand.u32 %v3363, 4294901760
        %v3629 = vsub.f32 %v3363, %v3628
        %v3630 = vand.u32 %v3629, 4294901760
        %v3631 = vsub.f32 %v3629, %v3630
        %v3632 = vand.u32 %v3631, 4294901760
        %3633 = vmatpush1.msra.mxu0 %v3632
        %3634 = vmatprep.subr.mxu0 0.0
        %v3635 = vand.u32 %v3364, 4294901760
        %v3636 = vsub.f32 %v3364, %v3635
        %v3637 = vand.u32 %v3636, 4294901760
        %v3638 = vsub.f32 %v3636, %v3637
        %v3639 = vand.u32 %v3638, 4294901760
        %3640 = vmatpush1.msra.mxu0 %v3639
        %3641 = vmatprep.subr.mxu0 0.0
        %v3642 = vand.u32 %v3365, 4294901760
        %v3643 = vsub.f32 %v3365, %v3642
        %v3644 = vand.u32 %v3643, 4294901760
        %v3645 = vsub.f32 %v3643, %v3644
        %v3646 = vand.u32 %v3645, 4294901760
        %3647 = vmatpush1.msra.mxu0 %v3646
        %3648 = vmatprep.subr.mxu0 0.0
        %v3649 = vand.u32 %v3366, 4294901760
        %v3650 = vsub.f32 %v3366, %v3649
        %v3651 = vand.u32 %v3650, 4294901760
        %v3652 = vsub.f32 %v3650, %v3651
        %v3653 = vand.u32 %v3652, 4294901760
        %3654 = vmatpush1.msra.mxu0 %v3653
        %3655 = vmatprep.subr.mxu0 0.0
        %v3656 = vand.u32 %v3367, 4294901760
        %v3657 = vsub.f32 %v3367, %v3656
        %v3658 = vand.u32 %v3657, 4294901760
        %v3659 = vsub.f32 %v3657, %v3658
        %v3660 = vand.u32 %v3659, 4294901760
        %3661 = vmatpush1.msra.mxu0 %v3660
        %3662 = vmatprep.subr.mxu0 0.0
        %v3663 = vand.u32 %v3368, 4294901760
        %v3664 = vsub.f32 %v3368, %v3663
        %v3665 = vand.u32 %v3664, 4294901760
        %v3666 = vsub.f32 %v3664, %v3665
        %v3667 = vand.u32 %v3666, 4294901760
        %3668 = vmatpush1.msra.mxu0 %v3667
        %3669 = vmatprep.subr.mxu0 0.0
        %v3670 = vand.u32 %v3369, 4294901760
        %v3671 = vsub.f32 %v3369, %v3670
        %v3672 = vand.u32 %v3671, 4294901760
        %v3673 = vsub.f32 %v3671, %v3672
        %v3674 = vand.u32 %v3673, 4294901760
        %3675 = vmatpush1.msra.mxu0 %v3674
        %3676 = vmatprep.subr.mxu0 0.0
        %v3677 = vand.u32 %v3370, 4294901760
        %v3678 = vsub.f32 %v3370, %v3677
        %v3679 = vand.u32 %v3678, 4294901760
        %v3680 = vsub.f32 %v3678, %v3679
        %v3681 = vand.u32 %v3680, 4294901760
        %3682 = vmatpush1.msra.mxu0 %v3681
        %3683 = vmatprep.subr.mxu0 0.0
        %v3684 = vand.u32 %v3371, 4294901760
        %v3685 = vsub.f32 %v3371, %v3684
        %v3686 = vand.u32 %v3685, 4294901760
        %v3687 = vsub.f32 %v3685, %v3686
        %v3688 = vand.u32 %v3687, 4294901760
        %3689 = vmatpush1.msra.mxu0 %v3688
        %3690 = vmatprep.subr.mxu0 0.0
        %v3691 = vand.u32 %v3372, 4294901760
        %v3692 = vsub.f32 %v3372, %v3691
        %v3693 = vand.u32 %v3692, 4294901760
        %v3694 = vsub.f32 %v3692, %v3693
        %v3695 = vand.u32 %v3694, 4294901760
        %3696 = vmatpush1.msra.mxu0 %v3695
        %3697 = vmatprep.subr.mxu0 0.0
        %v3698 = vand.u32 %v3373, 4294901760
        %v3699 = vsub.f32 %v3373, %v3698
        %v3700 = vand.u32 %v3699, 4294901760
        %v3701 = vsub.f32 %v3699, %v3700
        %v3702 = vand.u32 %v3701, 4294901760
        %3703 = vmatpush1.msra.mxu0 %v3702
        %3704 = vmatprep.subr.mxu0 0.0
        %v3705 = vand.u32 %v3374, 4294901760
        %v3706 = vsub.f32 %v3374, %v3705
        %v3707 = vand.u32 %v3706, 4294901760
        %v3708 = vsub.f32 %v3706, %v3707
        %v3709 = vand.u32 %v3708, 4294901760
        %3710 = vmatpush1.msra.mxu0 %v3709
        %3711 = vmatprep.subr.mxu0 0.0
        %v3712 = vand.u32 %v3375, 4294901760
        %v3713 = vsub.f32 %v3375, %v3712
        %v3714 = vand.u32 %v3713, 4294901760
        %v3715 = vsub.f32 %v3713, %v3714
        %v3716 = vand.u32 %v3715, 4294901760
        %3717 = vmatpush1.msra.mxu0 %v3716
        %3718 = vmatprep.subr.mxu0 0.0
        %v3719 = vand.u32 %v3376, 4294901760
        %v3720 = vsub.f32 %v3376, %v3719
        %v3721 = vand.u32 %v3720, 4294901760
        %v3722 = vsub.f32 %v3720, %v3721
        %v3723 = vand.u32 %v3722, 4294901760
        %3724 = vmatpush1.msra.mxu0 %v3723
        %3725 = vmatprep.subr.mxu0 0.0
        %v3726 = vand.u32 %v3377, 4294901760
        %v3727 = vsub.f32 %v3377, %v3726
        %v3728 = vand.u32 %v3727, 4294901760
        %v3729 = vsub.f32 %v3727, %v3728
        %v3730 = vand.u32 %v3729, 4294901760
        %3731 = vmatpush1.msra.mxu0 %v3730
        %3732 = vmatprep.subr.mxu0 0.0
        %v3733 = vand.u32 %v3378, 4294901760
        %v3734 = vsub.f32 %v3378, %v3733
        %v3735 = vand.u32 %v3734, 4294901760
        %v3736 = vsub.f32 %v3734, %v3735
        %v3737 = vand.u32 %v3736, 4294901760
        %3738 = vmatpush1.msra.mxu0 %v3737
        %3739 = vmatprep.subr.mxu0 0.0
        %3740 = vmatpush1.msra.mxu0 0.0
        %3741 = vmatprep.subr.mxu0 0.0
        %3742 = vmatpush1.msra.mxu0 0.0
        %3743 = vmatprep.subr.mxu0 0.0
        %3744 = vmatpush1.msra.mxu0 0.0
        %3745 = vmatprep.subr.mxu0 0.0
        %3746 = vmatpush1.msra.mxu0 0.0
        %3747 = vmatprep.subr.mxu0 0.0
        %3748 = vmatpush1.msra.mxu0 0.0
        %3749 = vmatprep.subr.mxu0 0.0
        %3750 = vmatpush1.msra.mxu0 0.0
        %3751 = vmatprep.subr.mxu0 0.0
        %3752 = vmatpush1.msra.mxu0 0.0
        %3753 = vmatprep.subr.mxu0 0.0
        %3754 = vmatpush1.msra.mxu0 0.0
        %3755 = vmatprep.subr.mxu0 0.0
        %3756 = vmatpush1.msra.mxu0 0.0
        %3757 = vmatprep.subr.mxu0 0.0
        %3758 = vmatpush1.msra.mxu0 0.0
        %3759 = vmatprep.subr.mxu0 0.0
        %3760 = vmatpush1.msra.mxu0 0.0
        %3761 = vmatprep.subr.mxu0 0.0
        %3762 = vmatpush1.msra.mxu0 0.0
        %3763 = vmatprep.subr.mxu0 0.0
        %3764 = vmatpush1.msra.mxu0 0.0
        %3765 = vmatprep.subr.mxu0 0.0
        %3766 = vmatpush1.msra.mxu0 0.0
        %3767 = vmatprep.subr.mxu0 0.0
        %3768 = vmatpush1.msra.mxu0 0.0
        %3769 = vmatprep.subr.mxu0 0.0
        %3770 = vmatpush1.msra.mxu0 0.0
        %3771 = vmatprep.mubr.f32.mxu0 0.0
        %v3772 = vand.u32 %v3347, 4294901760
        %3773 = vmatmul.mubr.f32.gmra.mrb[0].mxu0 %v3772
        %v3774 = vpop.f32.mrb[0].mxu0
        %v3775 = vadd.f32 %v3474, %v3774
        %v3776 = vpop.f32.mrb[0].mxu0
        %3777 = vmatprep.mubr.f32.mxu0 0.0
        %v3778 = vand.u32 %v3348, 4294901760
        %3779 = vmatmul.mubr.f32.gmra.mrb[0].mxu0 %v3778
        %v3780 = vpop.f32.mrb[0].mxu0
        %v3781 = vadd.f32 %v3484, %v3780
        %v3782 = vpop.f32.mrb[0].mxu0
        %3783 = vmatprep.mubr.f32.mxu0 0.0
        %v3784 = vand.u32 %v3349, 4294901760
        %3785 = vmatmul.mubr.f32.gmra.mrb[0].mxu0 %v3784
        %v3786 = vpop.f32.mrb[0].mxu0
        %v3787 = vadd.f32 %v3494, %v3786
        %v3788 = vpop.f32.mrb[0].mxu0
        %3789 = vmatprep.mubr.f32.mxu0 0.0
        %v3790 = vand.u32 %v3350, 4294901760
        %3791 = vmatmul.mubr.f32.gmra.mrb[0].mxu0 %v3790
        %v3792 = vpop.f32.mrb[0].mxu0
        %v3793 = vadd.f32 %v3504, %v3792
        %v3794 = vpop.f32.mrb[0].mxu0
        %3795 = vmatprep.mubr.f32.mxu0 0.0
        %v3796 = vand.u32 %v3351, 4294901760
        %3797 = vmatmul.mubr.f32.gmra.mrb[0].mxu0 %v3796
        %v3798 = vpop.f32.mrb[0].mxu0
        %v3799 = vadd.f32 %v3514, %v3798
        %v3800 = vpop.f32.mrb[0].mxu0
        %3801 = vmatprep.mubr.f32.mxu0 0.0
        %v3802 = vand.u32 %v3352, 4294901760
        %3803 = vmatmul.mubr.f32.gmra.mrb[0].mxu0 %v3802
        %v3804 = vpop.f32.mrb[0].mxu0
        %v3805 = vadd.f32 %v3524, %v3804
        %v3806 = vpop.f32.mrb[0].mxu0
        %3807 = vmatprep.mubr.f32.mxu0 0.0
        %v3808 = vand.u32 %v3353, 4294901760
        %3809 = vmatmul.mubr.f32.gmra.mrb[0].mxu0 %v3808
        %v3810 = vpop.f32.mrb[0].mxu0
        %v3811 = vadd.f32 %v3534, %v3810
        %v3812 = vpop.f32.mrb[0].mxu0
        %3813 = vmatprep.mubr.f32.mxu0 0.0
        %v3814 = vand.u32 %v3354, 4294901760
        %3815 = vmatmul.mubr.f32.gmra.mrb[0].mxu0 %v3814
        %v3816 = vpop.f32.mrb[0].mxu0
        %v3817 = vadd.f32 %v3544, %v3816
        %v3818 = vpop.f32.mrb[0].mxu0
        %3819 = vmatprep.mubr.f32.mxu0 0.0
        %v3820 = vand.u32 %v3355, 4294901760
        %3821 = vmatmul.mubr.f32.gmra.mrb[0].mxu0 %v3820
        %v3822 = vpop.f32.mrb[0].mxu0
        %v3823 = vadd.f32 %v3554, %v3822
        %v3824 = vpop.f32.mrb[0].mxu0
        %3825 = vmatprep.mubr.f32.mxu0 0.0
        %v3826 = vand.u32 %v3356, 4294901760
        %3827 = vmatmul.mubr.f32.gmra.mrb[0].mxu0 %v3826
        %v3828 = vpop.f32.mrb[0].mxu0
        %v3829 = vadd.f32 %v3564, %v3828
        %v3830 = vpop.f32.mrb[0].mxu0
        %3831 = vmatprep.mubr.f32.mxu0 0.0
        %v3832 = vand.u32 %v3357, 4294901760
        %3833 = vmatmul.mubr.f32.gmra.mrb[0].mxu0 %v3832
        %v3834 = vpop.f32.mrb[0].mxu0
        %v3835 = vadd.f32 %v3574, %v3834
        %v3836 = vpop.f32.mrb[0].mxu0
        %3837 = vmatprep.mubr.f32.mxu0 0.0
        %v3838 = vand.u32 %v3358, 4294901760
        %3839 = vmatmul.mubr.f32.gmra.mrb[0].mxu0 %v3838
        %v3840 = vpop.f32.mrb[0].mxu0
        %v3841 = vadd.f32 %v3584, %v3840
        %v3842 = vpop.f32.mrb[0].mxu0
        %3843 = vmatprep.mubr.f32.mxu0 0.0
        %v3844 = vand.u32 %v3359, 4294901760
        %3845 = vmatmul.mubr.f32.gmra.mrb[0].mxu0 %v3844
        %v3846 = vpop.f32.mrb[0].mxu0
        %v3847 = vadd.f32 %v3594, %v3846
        %v3848 = vpop.f32.mrb[0].mxu0
        %3849 = vmatprep.mubr.f32.mxu0 0.0
        %v3850 = vand.u32 %v3360, 4294901760
        %3851 = vmatmul.mubr.f32.gmra.mrb[0].mxu0 %v3850
        %v3852 = vpop.f32.mrb[0].mxu0
        %v3853 = vadd.f32 %v3604, %v3852
        %v3854 = vpop.f32.mrb[0].mxu0
        %3855 = vmatprep.mubr.f32.mxu0 0.0
        %v3856 = vand.u32 %v3361, 4294901760
        %3857 = vmatmul.mubr.f32.gmra.mrb[0].mxu0 %v3856
        %v3858 = vpop.f32.mrb[0].mxu0
        %v3859 = vadd.f32 %v3614, %v3858
        %v3860 = vpop.f32.mrb[0].mxu0
        %3861 = vmatprep.mubr.f32.mxu0 0.0
        %v3862 = vand.u32 %v3362, 4294901760
        %3863 = vmatmul.mubr.f32.gmra.mrb[0].mxu0 %v3862
        %v3864 = vpop.f32.mrb[0].mxu0
        %v3865 = vadd.f32 %v3624, %v3864
        %v3866 = vpop.f32.mrb[0].mxu0
        %3867 = vdwg.mxu0
        %3868 = vmatprep.subr.mxu0 0.0
        %v3869 = vand.u32 %v3363, 4294901760
        %v3870 = vsub.f32 %v3363, %v3869
        %3871 = vmatpush1.msra.mxu0 %v3870
        %3872 = vmatprep.subr.mxu0 0.0
        %v3873 = vand.u32 %v3364, 4294901760
        %v3874 = vsub.f32 %v3364, %v3873
        %3875 = vmatpush1.msra.mxu0 %v3874
        %3876 = vmatprep.subr.mxu0 0.0
        %v3877 = vand.u32 %v3365, 4294901760
        %v3878 = vsub.f32 %v3365, %v3877
        %3879 = vmatpush1.msra.mxu0 %v3878
        %3880 = vmatprep.subr.mxu0 0.0
        %v3881 = vand.u32 %v3366, 4294901760
        %v3882 = vsub.f32 %v3366, %v3881
        %3883 = vmatpush1.msra.mxu0 %v3882
        %3884 = vmatprep.subr.mxu0 0.0
        %v3885 = vand.u32 %v3367, 4294901760
        %v3886 = vsub.f32 %v3367, %v3885
        %3887 = vmatpush1.msra.mxu0 %v3886
        %3888 = vmatprep.subr.mxu0 0.0
        %v3889 = vand.u32 %v3368, 4294901760
        %v3890 = vsub.f32 %v3368, %v3889
        %3891 = vmatpush1.msra.mxu0 %v3890
        %3892 = vmatprep.subr.mxu0 0.0
        %v3893 = vand.u32 %v3369, 4294901760
        %v3894 = vsub.f32 %v3369, %v3893
        %3895 = vmatpush1.msra.mxu0 %v3894
        %3896 = vmatprep.subr.mxu0 0.0
        %v3897 = vand.u32 %v3370, 4294901760
        %v3898 = vsub.f32 %v3370, %v3897
        %3899 = vmatpush1.msra.mxu0 %v3898
        %3900 = vmatprep.subr.mxu0 0.0
        %v3901 = vand.u32 %v3371, 4294901760
        %v3902 = vsub.f32 %v3371, %v3901
        %3903 = vmatpush1.msra.mxu0 %v3902
        %3904 = vmatprep.subr.mxu0 0.0
        %v3905 = vand.u32 %v3372, 4294901760
        %v3906 = vsub.f32 %v3372, %v3905
        %3907 = vmatpush1.msra.mxu0 %v3906
        %3908 = vmatprep.subr.mxu0 0.0
        %v3909 = vand.u32 %v3373, 4294901760
        %v3910 = vsub.f32 %v3373, %v3909
        %3911 = vmatpush1.msra.mxu0 %v3910
        %3912 = vmatprep.subr.mxu0 0.0
        %v3913 = vand.u32 %v3374, 4294901760
        %v3914 = vsub.f32 %v3374, %v3913
        %3915 = vmatpush1.msra.mxu0 %v3914
        %3916 = vmatprep.subr.mxu0 0.0
        %v3917 = vand.u32 %v3375, 4294901760
        %v3918 = vsub.f32 %v3375, %v3917
        %3919 = vmatpush1.msra.mxu0 %v3918
        %3920 = vmatprep.subr.mxu0 0.0
        %v3921 = vand.u32 %v3376, 4294901760
        %v3922 = vsub.f32 %v3376, %v3921
        %3923 = vmatpush1.msra.mxu0 %v3922
        %3924 = vmatprep.subr.mxu0 0.0
        %v3925 = vand.u32 %v3377, 4294901760
        %v3926 = vsub.f32 %v3377, %v3925
        %3927 = vmatpush1.msra.mxu0 %v3926
        %3928 = vmatprep.subr.mxu0 0.0
        %v3929 = vand.u32 %v3378, 4294901760
        %v3930 = vsub.f32 %v3378, %v3929
        %3931 = vmatpush1.msra.mxu0 %v3930
        %3932 = vmatprep.subr.mxu0 0.0
        %3933 = vmatpush1.msra.mxu0 0.0
        %3934 = vmatprep.subr.mxu0 0.0
        %3935 = vmatpush1.msra.mxu0 0.0
        %3936 = vmatprep.subr.mxu0 0.0
        %3937 = vmatpush1.msra.mxu0 0.0
        %3938 = vmatprep.subr.mxu0 0.0
        %3939 = vmatpush1.msra.mxu0 0.0
        %3940 = vmatprep.subr.mxu0 0.0
        %3941 = vmatpush1.msra.mxu0 0.0
        %3942 = vmatprep.subr.mxu0 0.0
        %3943 = vmatpush1.msra.mxu0 0.0
        %3944 = vmatprep.subr.mxu0 0.0
        %3945 = vmatpush1.msra.mxu0 0.0
        %3946 = vmatprep.subr.mxu0 0.0
        %3947 = vmatpush1.msra.mxu0 0.0
        %3948 = vmatprep.subr.mxu0 0.0
        %3949 = vmatpush1.msra.mxu0 0.0
        %3950 = vmatprep.subr.mxu0 0.0
        %3951 = vmatpush1.msra.mxu0 0.0
        %3952 = vmatprep.subr.mxu0 0.0
        %3953 = vmatpush1.msra.mxu0 0.0
        %3954 = vmatprep.subr.mxu0 0.0
        %3955 = vmatpush1.msra.mxu0 0.0
        %3956 = vmatprep.subr.mxu0 0.0
        %3957 = vmatpush1.msra.mxu0 0.0
        %3958 = vmatprep.subr.mxu0 0.0
        %3959 = vmatpush1.msra.mxu0 0.0
        %3960 = vmatprep.subr.mxu0 0.0
        %3961 = vmatpush1.msra.mxu0 0.0
        %3962 = vmatprep.subr.mxu0 0.0
        %3963 = vmatpush1.msra.mxu0 0.0
        %3964 = vmatprep.mubr.f32.mxu0 0.0
        %v3965 = vand.u32 %v3347, 4294901760
        %v3966 = vsub.f32 %v3347, %v3965
        %3967 = vmatmul.mubr.f32.gmra.mrb[0].mxu0 %v3966
        %v3968 = vpop.f32.mrb[0].mxu0
        %v3969 = vadd.f32 %v3775, %v3968
        %v3970 = vpop.f32.mrb[0].mxu0
        %3971 = vmatprep.mubr.f32.mxu0 0.0
        %v3972 = vand.u32 %v3348, 4294901760
        %v3973 = vsub.f32 %v3348, %v3972
        %3974 = vmatmul.mubr.f32.gmra.mrb[0].mxu0 %v3973
        %v3975 = vpop.f32.mrb[0].mxu0
        %v3976 = vadd.f32 %v3781, %v3975
        %v3977 = vpop.f32.mrb[0].mxu0
        %3978 = vmatprep.mubr.f32.mxu0 0.0
        %v3979 = vand.u32 %v3349, 4294901760
        %v3980 = vsub.f32 %v3349, %v3979
        %3981 = vmatmul.mubr.f32.gmra.mrb[0].mxu0 %v3980
        %v3982 = vpop.f32.mrb[0].mxu0
        %v3983 = vadd.f32 %v3787, %v3982
        %v3984 = vpop.f32.mrb[0].mxu0
        %3985 = vmatprep.mubr.f32.mxu0 0.0
        %v3986 = vand.u32 %v3350, 4294901760
        %v3987 = vsub.f32 %v3350, %v3986
        %3988 = vmatmul.mubr.f32.gmra.mrb[0].mxu0 %v3987
        %v3989 = vpop.f32.mrb[0].mxu0
        %v3990 = vadd.f32 %v3793, %v3989
        %v3991 = vpop.f32.mrb[0].mxu0
        %3992 = vmatprep.mubr.f32.mxu0 0.0
        %v3993 = vand.u32 %v3351, 4294901760
        %v3994 = vsub.f32 %v3351, %v3993
        %3995 = vmatmul.mubr.f32.gmra.mrb[0].mxu0 %v3994
        %v3996 = vpop.f32.mrb[0].mxu0
        %v3997 = vadd.f32 %v3799, %v3996
        %v3998 = vpop.f32.mrb[0].mxu0
        %3999 = vmatprep.mubr.f32.mxu0 0.0
        %v4000 = vand.u32 %v3352, 4294901760
        %v4001 = vsub.f32 %v3352, %v4000
        %4002 = vmatmul.mubr.f32.gmra.mrb[0].mxu0 %v4001
        %v4003 = vpop.f32.mrb[0].mxu0
        %v4004 = vadd.f32 %v3805, %v4003
        %v4005 = vpop.f32.mrb[0].mxu0
        %4006 = vmatprep.mubr.f32.mxu0 0.0
        %v4007 = vand.u32 %v3353, 4294901760
        %v4008 = vsub.f32 %v3353, %v4007
        %4009 = vmatmul.mubr.f32.gmra.mrb[0].mxu0 %v4008
        %v4010 = vpop.f32.mrb[0].mxu0
        %v4011 = vadd.f32 %v3811, %v4010
        %v4012 = vpop.f32.mrb[0].mxu0
        %4013 = vmatprep.mubr.f32.mxu0 0.0
        %v4014 = vand.u32 %v3354, 4294901760
        %v4015 = vsub.f32 %v3354, %v4014
        %4016 = vmatmul.mubr.f32.gmra.mrb[0].mxu0 %v4015
        %v4017 = vpop.f32.mrb[0].mxu0
        %v4018 = vadd.f32 %v3817, %v4017
        %v4019 = vpop.f32.mrb[0].mxu0
        %4020 = vmatprep.mubr.f32.mxu0 0.0
        %v4021 = vand.u32 %v3355, 4294901760
        %v4022 = vsub.f32 %v3355, %v4021
        %4023 = vmatmul.mubr.f32.gmra.mrb[0].mxu0 %v4022
        %v4024 = vpop.f32.mrb[0].mxu0
        %v4025 = vadd.f32 %v3823, %v4024
        %v4026 = vpop.f32.mrb[0].mxu0
        %4027 = vmatprep.mubr.f32.mxu0 0.0
        %v4028 = vand.u32 %v3356, 4294901760
        %v4029 = vsub.f32 %v3356, %v4028
        %4030 = vmatmul.mubr.f32.gmra.mrb[0].mxu0 %v4029
        %v4031 = vpop.f32.mrb[0].mxu0
        %v4032 = vadd.f32 %v3829, %v4031
        %v4033 = vpop.f32.mrb[0].mxu0
        %4034 = vmatprep.mubr.f32.mxu0 0.0
        %v4035 = vand.u32 %v3357, 4294901760
        %v4036 = vsub.f32 %v3357, %v4035
        %4037 = vmatmul.mubr.f32.gmra.mrb[0].mxu0 %v4036
        %v4038 = vpop.f32.mrb[0].mxu0
        %v4039 = vadd.f32 %v3835, %v4038
        %v4040 = vpop.f32.mrb[0].mxu0
        %4041 = vmatprep.mubr.f32.mxu0 0.0
        %v4042 = vand.u32 %v3358, 4294901760
        %v4043 = vsub.f32 %v3358, %v4042
        %4044 = vmatmul.mubr.f32.gmra.mrb[0].mxu0 %v4043
        %v4045 = vpop.f32.mrb[0].mxu0
        %v4046 = vadd.f32 %v3841, %v4045
        %v4047 = vpop.f32.mrb[0].mxu0
        %4048 = vmatprep.mubr.f32.mxu0 0.0
        %v4049 = vand.u32 %v3359, 4294901760
        %v4050 = vsub.f32 %v3359, %v4049
        %4051 = vmatmul.mubr.f32.gmra.mrb[0].mxu0 %v4050
        %v4052 = vpop.f32.mrb[0].mxu0
        %v4053 = vadd.f32 %v3847, %v4052
        %v4054 = vpop.f32.mrb[0].mxu0
        %4055 = vmatprep.mubr.f32.mxu0 0.0
        %v4056 = vand.u32 %v3360, 4294901760
        %v4057 = vsub.f32 %v3360, %v4056
        %4058 = vmatmul.mubr.f32.gmra.mrb[0].mxu0 %v4057
        %v4059 = vpop.f32.mrb[0].mxu0
        %v4060 = vadd.f32 %v3853, %v4059
        %v4061 = vpop.f32.mrb[0].mxu0
        %4062 = vmatprep.mubr.f32.mxu0 0.0
        %v4063 = vand.u32 %v3361, 4294901760
        %v4064 = vsub.f32 %v3361, %v4063
        %4065 = vmatmul.mubr.f32.gmra.mrb[0].mxu0 %v4064
        %v4066 = vpop.f32.mrb[0].mxu0
        %v4067 = vadd.f32 %v3859, %v4066
        %v4068 = vpop.f32.mrb[0].mxu0
        %4069 = vmatprep.mubr.f32.mxu0 0.0
        %v4070 = vand.u32 %v3362, 4294901760
        %v4071 = vsub.f32 %v3362, %v4070
        %4072 = vmatmul.mubr.f32.gmra.mrb[0].mxu0 %v4071
        %v4073 = vpop.f32.mrb[0].mxu0
        %v4074 = vadd.f32 %v3865, %v4073
        %v4075 = vpop.f32.mrb[0].mxu0
        %4076 = vdwg.mxu0
        %4077 = vmatprep.subr.mxu0 0.0
        %v4078 = vand.u32 %v3363, 4294901760
        %4079 = vmatpush1.msra.mxu0 %v4078
        %4080 = vmatprep.subr.mxu0 0.0
        %v4081 = vand.u32 %v3364, 4294901760
        %4082 = vmatpush1.msra.mxu0 %v4081
        %4083 = vmatprep.subr.mxu0 0.0
        %v4084 = vand.u32 %v3365, 4294901760
        %4085 = vmatpush1.msra.mxu0 %v4084
        %4086 = vmatprep.subr.mxu0 0.0
        %v4087 = vand.u32 %v3366, 4294901760
        %4088 = vmatpush1.msra.mxu0 %v4087
        %4089 = vmatprep.subr.mxu0 0.0
        %v4090 = vand.u32 %v3367, 4294901760
        %4091 = vmatpush1.msra.mxu0 %v4090
        %4092 = vmatprep.subr.mxu0 0.0
        %v4093 = vand.u32 %v3368, 4294901760
        %4094 = vmatpush1.msra.mxu0 %v4093
        %4095 = vmatprep.subr.mxu0 0.0
        %v4096 = vand.u32 %v3369, 4294901760
        %4097 = vmatpush1.msra.mxu0 %v4096
        %4098 = vmatprep.subr.mxu0 0.0
        %v4099 = vand.u32 %v3370, 4294901760
        %4100 = vmatpush1.msra.mxu0 %v4099
        %4101 = vmatprep.subr.mxu0 0.0
        %v4102 = vand.u32 %v3371, 4294901760
        %4103 = vmatpush1.msra.mxu0 %v4102
        %4104 = vmatprep.subr.mxu0 0.0
        %v4105 = vand.u32 %v3372, 4294901760
        %4106 = vmatpush1.msra.mxu0 %v4105
        %4107 = vmatprep.subr.mxu0 0.0
        %v4108 = vand.u32 %v3373, 4294901760
        %4109 = vmatpush1.msra.mxu0 %v4108
        %4110 = vmatprep.subr.mxu0 0.0
        %v4111 = vand.u32 %v3374, 4294901760
        %4112 = vmatpush1.msra.mxu0 %v4111
        %4113 = vmatprep.subr.mxu0 0.0
        %v4114 = vand.u32 %v3375, 4294901760
        %4115 = vmatpush1.msra.mxu0 %v4114
        %4116 = vmatprep.subr.mxu0 0.0
        %v4117 = vand.u32 %v3376, 4294901760
        %4118 = vmatpush1.msra.mxu0 %v4117
        %4119 = vmatprep.subr.mxu0 0.0
        %v4120 = vand.u32 %v3377, 4294901760
        %4121 = vmatpush1.msra.mxu0 %v4120
        %4122 = vmatprep.subr.mxu0 0.0
        %v4123 = vand.u32 %v3378, 4294901760
        %4124 = vmatpush1.msra.mxu0 %v4123
        %4125 = vmatprep.subr.mxu0 0.0
        %4126 = vmatpush1.msra.mxu0 0.0
        %4127 = vmatprep.subr.mxu0 0.0
        %4128 = vmatpush1.msra.mxu0 0.0
        %4129 = vmatprep.subr.mxu0 0.0
        %4130 = vmatpush1.msra.mxu0 0.0
        %4131 = vmatprep.subr.mxu0 0.0
        %4132 = vmatpush1.msra.mxu0 0.0
        %4133 = vmatprep.subr.mxu0 0.0
        %4134 = vmatpush1.msra.mxu0 0.0
        %4135 = vmatprep.subr.mxu0 0.0
        %4136 = vmatpush1.msra.mxu0 0.0
        %4137 = vmatprep.subr.mxu0 0.0
        %4138 = vmatpush1.msra.mxu0 0.0
        %4139 = vmatprep.subr.mxu0 0.0
        %4140 = vmatpush1.msra.mxu0 0.0
        %4141 = vmatprep.subr.mxu0 0.0
        %4142 = vmatpush1.msra.mxu0 0.0
        %4143 = vmatprep.subr.mxu0 0.0
        %4144 = vmatpush1.msra.mxu0 0.0
        %4145 = vmatprep.subr.mxu0 0.0
        %4146 = vmatpush1.msra.mxu0 0.0
        %4147 = vmatprep.subr.mxu0 0.0
        %4148 = vmatpush1.msra.mxu0 0.0
        %4149 = vmatprep.subr.mxu0 0.0
        %4150 = vmatpush1.msra.mxu0 0.0
        %4151 = vmatprep.subr.mxu0 0.0
        %4152 = vmatpush1.msra.mxu0 0.0
        %4153 = vmatprep.subr.mxu0 0.0
        %4154 = vmatpush1.msra.mxu0 0.0
        %4155 = vmatprep.subr.mxu0 0.0
        %4156 = vmatpush1.msra.mxu0 0.0
        %4157 = vmatprep.mubr.f32.mxu0 0.0
        %v4158 = vand.u32 %v3347, 4294901760
        %v4159 = vsub.f32 %v3347, %v4158
        %v4160 = vand.u32 %v4159, 4294901760
        %4161 = vmatmul.mubr.f32.gmra.mrb[0].mxu0 %v4160
        %v4162 = vpop.f32.mrb[0].mxu0
        %v4163 = vadd.f32 %v3969, %v4162
        %v4164 = vpop.f32.mrb[0].mxu0
        %4165 = vmatprep.mubr.f32.mxu0 0.0
        %v4166 = vand.u32 %v3348, 4294901760
        %v4167 = vsub.f32 %v3348, %v4166
        %v4168 = vand.u32 %v4167, 4294901760
        %4169 = vmatmul.mubr.f32.gmra.mrb[0].mxu0 %v4168
        %v4170 = vpop.f32.mrb[0].mxu0
        %v4171 = vadd.f32 %v3976, %v4170
        %v4172 = vpop.f32.mrb[0].mxu0
        %4173 = vmatprep.mubr.f32.mxu0 0.0
        %v4174 = vand.u32 %v3349, 4294901760
        %v4175 = vsub.f32 %v3349, %v4174
        %v4176 = vand.u32 %v4175, 4294901760
        %4177 = vmatmul.mubr.f32.gmra.mrb[0].mxu0 %v4176
        %v4178 = vpop.f32.mrb[0].mxu0
        %v4179 = vadd.f32 %v3983, %v4178
        %v4180 = vpop.f32.mrb[0].mxu0
        %4181 = vmatprep.mubr.f32.mxu0 0.0
        %v4182 = vand.u32 %v3350, 4294901760
        %v4183 = vsub.f32 %v3350, %v4182
        %v4184 = vand.u32 %v4183, 4294901760
        %4185 = vmatmul.mubr.f32.gmra.mrb[0].mxu0 %v4184
        %v4186 = vpop.f32.mrb[0].mxu0
        %v4187 = vadd.f32 %v3990, %v4186
        %v4188 = vpop.f32.mrb[0].mxu0
        %4189 = vmatprep.mubr.f32.mxu0 0.0
        %v4190 = vand.u32 %v3351, 4294901760
        %v4191 = vsub.f32 %v3351, %v4190
        %v4192 = vand.u32 %v4191, 4294901760
        %4193 = vmatmul.mubr.f32.gmra.mrb[0].mxu0 %v4192
        %v4194 = vpop.f32.mrb[0].mxu0
        %v4195 = vadd.f32 %v3997, %v4194
        %v4196 = vpop.f32.mrb[0].mxu0
        %4197 = vmatprep.mubr.f32.mxu0 0.0
        %v4198 = vand.u32 %v3352, 4294901760
        %v4199 = vsub.f32 %v3352, %v4198
        %v4200 = vand.u32 %v4199, 4294901760
        %4201 = vmatmul.mubr.f32.gmra.mrb[0].mxu0 %v4200
        %v4202 = vpop.f32.mrb[0].mxu0
        %v4203 = vadd.f32 %v4004, %v4202
        %v4204 = vpop.f32.mrb[0].mxu0
        %4205 = vmatprep.mubr.f32.mxu0 0.0
        %v4206 = vand.u32 %v3353, 4294901760
        %v4207 = vsub.f32 %v3353, %v4206
        %v4208 = vand.u32 %v4207, 4294901760
        %4209 = vmatmul.mubr.f32.gmra.mrb[0].mxu0 %v4208
        %v4210 = vpop.f32.mrb[0].mxu0
        %v4211 = vadd.f32 %v4011, %v4210
        %v4212 = vpop.f32.mrb[0].mxu0
        %4213 = vmatprep.mubr.f32.mxu0 0.0
        %v4214 = vand.u32 %v3354, 4294901760
        %v4215 = vsub.f32 %v3354, %v4214
        %v4216 = vand.u32 %v4215, 4294901760
        %4217 = vmatmul.mubr.f32.gmra.mrb[0].mxu0 %v4216
        %v4218 = vpop.f32.mrb[0].mxu0
        %v4219 = vadd.f32 %v4018, %v4218
        %v4220 = vpop.f32.mrb[0].mxu0
        %4221 = vmatprep.mubr.f32.mxu0 0.0
        %v4222 = vand.u32 %v3355, 4294901760
        %v4223 = vsub.f32 %v3355, %v4222
        %v4224 = vand.u32 %v4223, 4294901760
        %4225 = vmatmul.mubr.f32.gmra.mrb[0].mxu0 %v4224
        %v4226 = vpop.f32.mrb[0].mxu0
        %v4227 = vadd.f32 %v4025, %v4226
        %v4228 = vpop.f32.mrb[0].mxu0
        %4229 = vmatprep.mubr.f32.mxu0 0.0
        %v4230 = vand.u32 %v3356, 4294901760
        %v4231 = vsub.f32 %v3356, %v4230
        %v4232 = vand.u32 %v4231, 4294901760
        %4233 = vmatmul.mubr.f32.gmra.mrb[0].mxu0 %v4232
        %v4234 = vpop.f32.mrb[0].mxu0
        %v4235 = vadd.f32 %v4032, %v4234
        %v4236 = vpop.f32.mrb[0].mxu0
        %4237 = vmatprep.mubr.f32.mxu0 0.0
        %v4238 = vand.u32 %v3357, 4294901760
        %v4239 = vsub.f32 %v3357, %v4238
        %v4240 = vand.u32 %v4239, 4294901760
        %4241 = vmatmul.mubr.f32.gmra.mrb[0].mxu0 %v4240
        %v4242 = vpop.f32.mrb[0].mxu0
        %v4243 = vadd.f32 %v4039, %v4242
        %v4244 = vpop.f32.mrb[0].mxu0
        %4245 = vmatprep.mubr.f32.mxu0 0.0
        %v4246 = vand.u32 %v3358, 4294901760
        %v4247 = vsub.f32 %v3358, %v4246
        %v4248 = vand.u32 %v4247, 4294901760
        %4249 = vmatmul.mubr.f32.gmra.mrb[0].mxu0 %v4248
        %v4250 = vpop.f32.mrb[0].mxu0
        %v4251 = vadd.f32 %v4046, %v4250
        %v4252 = vpop.f32.mrb[0].mxu0
        %4253 = vmatprep.mubr.f32.mxu0 0.0
        %v4254 = vand.u32 %v3359, 4294901760
        %v4255 = vsub.f32 %v3359, %v4254
        %v4256 = vand.u32 %v4255, 4294901760
        %4257 = vmatmul.mubr.f32.gmra.mrb[0].mxu0 %v4256
        %v4258 = vpop.f32.mrb[0].mxu0
        %v4259 = vadd.f32 %v4053, %v4258
        %v4260 = vpop.f32.mrb[0].mxu0
        %4261 = vmatprep.mubr.f32.mxu0 0.0
        %v4262 = vand.u32 %v3360, 4294901760
        %v4263 = vsub.f32 %v3360, %v4262
        %v4264 = vand.u32 %v4263, 4294901760
        %4265 = vmatmul.mubr.f32.gmra.mrb[0].mxu0 %v4264
        %v4266 = vpop.f32.mrb[0].mxu0
        %v4267 = vadd.f32 %v4060, %v4266
        %v4268 = vpop.f32.mrb[0].mxu0
        %4269 = vmatprep.mubr.f32.mxu0 0.0
        %v4270 = vand.u32 %v3361, 4294901760
        %v4271 = vsub.f32 %v3361, %v4270
        %v4272 = vand.u32 %v4271, 4294901760
        %4273 = vmatmul.mubr.f32.gmra.mrb[0].mxu0 %v4272
        %v4274 = vpop.f32.mrb[0].mxu0
        %v4275 = vadd.f32 %v4067, %v4274
        %v4276 = vpop.f32.mrb[0].mxu0
        %4277 = vmatprep.mubr.f32.mxu0 0.0
        %v4278 = vand.u32 %v3362, 4294901760
        %v4279 = vsub.f32 %v3362, %v4278
        %v4280 = vand.u32 %v4279, 4294901760
        %4281 = vmatmul.mubr.f32.gmra.mrb[0].mxu0 %v4280
        %v4282 = vpop.f32.mrb[0].mxu0
        %v4283 = vadd.f32 %v4074, %v4282
        %v4284 = vpop.f32.mrb[0].mxu0
        %4285 = vdwg.mxu0
        %4286 = vmatprep.subr.mxu0 0.0
        %v4287 = vand.u32 %v3363, 4294901760
        %v4288 = vsub.f32 %v3363, %v4287
        %v4289 = vand.u32 %v4288, 4294901760
        %4290 = vmatpush1.msra.mxu0 %v4289
        %4291 = vmatprep.subr.mxu0 0.0
        %v4292 = vand.u32 %v3364, 4294901760
        %v4293 = vsub.f32 %v3364, %v4292
        %v4294 = vand.u32 %v4293, 4294901760
        %4295 = vmatpush1.msra.mxu0 %v4294
        %4296 = vmatprep.subr.mxu0 0.0
        %v4297 = vand.u32 %v3365, 4294901760
        %v4298 = vsub.f32 %v3365, %v4297
        %v4299 = vand.u32 %v4298, 4294901760
        %4300 = vmatpush1.msra.mxu0 %v4299
        %4301 = vmatprep.subr.mxu0 0.0
        %v4302 = vand.u32 %v3366, 4294901760
        %v4303 = vsub.f32 %v3366, %v4302
        %v4304 = vand.u32 %v4303, 4294901760
        %4305 = vmatpush1.msra.mxu0 %v4304
        %4306 = vmatprep.subr.mxu0 0.0
        %v4307 = vand.u32 %v3367, 4294901760
        %v4308 = vsub.f32 %v3367, %v4307
        %v4309 = vand.u32 %v4308, 4294901760
        %4310 = vmatpush1.msra.mxu0 %v4309
        %4311 = vmatprep.subr.mxu0 0.0
        %v4312 = vand.u32 %v3368, 4294901760
        %v4313 = vsub.f32 %v3368, %v4312
        %v4314 = vand.u32 %v4313, 4294901760
        %4315 = vmatpush1.msra.mxu0 %v4314
        %4316 = vmatprep.subr.mxu0 0.0
        %v4317 = vand.u32 %v3369, 4294901760
        %v4318 = vsub.f32 %v3369, %v4317
        %v4319 = vand.u32 %v4318, 4294901760
        %4320 = vmatpush1.msra.mxu0 %v4319
        %4321 = vmatprep.subr.mxu0 0.0
        %v4322 = vand.u32 %v3370, 4294901760
        %v4323 = vsub.f32 %v3370, %v4322
        %v4324 = vand.u32 %v4323, 4294901760
        %4325 = vmatpush1.msra.mxu0 %v4324
        %4326 = vmatprep.subr.mxu0 0.0
        %v4327 = vand.u32 %v3371, 4294901760
        %v4328 = vsub.f32 %v3371, %v4327
        %v4329 = vand.u32 %v4328, 4294901760
        %4330 = vmatpush1.msra.mxu0 %v4329
        %4331 = vmatprep.subr.mxu0 0.0
        %v4332 = vand.u32 %v3372, 4294901760
        %v4333 = vsub.f32 %v3372, %v4332
        %v4334 = vand.u32 %v4333, 4294901760
        %4335 = vmatpush1.msra.mxu0 %v4334
        %4336 = vmatprep.subr.mxu0 0.0
        %v4337 = vand.u32 %v3373, 4294901760
        %v4338 = vsub.f32 %v3373, %v4337
        %v4339 = vand.u32 %v4338, 4294901760
        %4340 = vmatpush1.msra.mxu0 %v4339
        %4341 = vmatprep.subr.mxu0 0.0
        %v4342 = vand.u32 %v3374, 4294901760
        %v4343 = vsub.f32 %v3374, %v4342
        %v4344 = vand.u32 %v4343, 4294901760
        %4345 = vmatpush1.msra.mxu0 %v4344
        %4346 = vmatprep.subr.mxu0 0.0
        %v4347 = vand.u32 %v3375, 4294901760
        %v4348 = vsub.f32 %v3375, %v4347
        %v4349 = vand.u32 %v4348, 4294901760
        %4350 = vmatpush1.msra.mxu0 %v4349
        %4351 = vmatprep.subr.mxu0 0.0
        %v4352 = vand.u32 %v3376, 4294901760
        %v4353 = vsub.f32 %v3376, %v4352
        %v4354 = vand.u32 %v4353, 4294901760
        %4355 = vmatpush1.msra.mxu0 %v4354
        %4356 = vmatprep.subr.mxu0 0.0
        %v4357 = vand.u32 %v3377, 4294901760
        %v4358 = vsub.f32 %v3377, %v4357
        %v4359 = vand.u32 %v4358, 4294901760
        %4360 = vmatpush1.msra.mxu0 %v4359
        %4361 = vmatprep.subr.mxu0 0.0
        %v4362 = vand.u32 %v3378, 4294901760
        %v4363 = vsub.f32 %v3378, %v4362
        %v4364 = vand.u32 %v4363, 4294901760
        %4365 = vmatpush1.msra.mxu0 %v4364
        %4366 = vmatprep.subr.mxu0 0.0
        %4367 = vmatpush1.msra.mxu0 0.0
        %4368 = vmatprep.subr.mxu0 0.0
        %4369 = vmatpush1.msra.mxu0 0.0
        %4370 = vmatprep.subr.mxu0 0.0
        %4371 = vmatpush1.msra.mxu0 0.0
        %4372 = vmatprep.subr.mxu0 0.0
        %4373 = vmatpush1.msra.mxu0 0.0
        %4374 = vmatprep.subr.mxu0 0.0
        %4375 = vmatpush1.msra.mxu0 0.0
        %4376 = vmatprep.subr.mxu0 0.0
        %4377 = vmatpush1.msra.mxu0 0.0
        %4378 = vmatprep.subr.mxu0 0.0
        %4379 = vmatpush1.msra.mxu0 0.0
        %4380 = vmatprep.subr.mxu0 0.0
        %4381 = vmatpush1.msra.mxu0 0.0
        %4382 = vmatprep.subr.mxu0 0.0
        %4383 = vmatpush1.msra.mxu0 0.0
        %4384 = vmatprep.subr.mxu0 0.0
        %4385 = vmatpush1.msra.mxu0 0.0
        %4386 = vmatprep.subr.mxu0 0.0
        %4387 = vmatpush1.msra.mxu0 0.0
        %4388 = vmatprep.subr.mxu0 0.0
        %4389 = vmatpush1.msra.mxu0 0.0
        %4390 = vmatprep.subr.mxu0 0.0
        %4391 = vmatpush1.msra.mxu0 0.0
        %4392 = vmatprep.subr.mxu0 0.0
        %4393 = vmatpush1.msra.mxu0 0.0
        %4394 = vmatprep.subr.mxu0 0.0
        %4395 = vmatpush1.msra.mxu0 0.0
        %4396 = vmatprep.subr.mxu0 0.0
        %4397 = vmatpush1.msra.mxu0 0.0
        %4398 = vmatprep.mubr.f32.mxu0 0.0
        %v4399 = vand.u32 %v3347, 4294901760
        %4400 = vmatmul.mubr.f32.gmra.mrb[0].mxu0 %v4399
        %v4401 = vpop.f32.mrb[0].mxu0
        %v4402 = vadd.f32 %v4163, %v4401
        %v4403 = vpop.f32.mrb[0].mxu0
        %4404 = vmatprep.mubr.f32.mxu0 0.0
        %v4405 = vand.u32 %v3348, 4294901760
        %4406 = vmatmul.mubr.f32.gmra.mrb[0].mxu0 %v4405
        %v4407 = vpop.f32.mrb[0].mxu0
        %v4408 = vadd.f32 %v4171, %v4407
        %v4409 = vpop.f32.mrb[0].mxu0
        %4410 = vmatprep.mubr.f32.mxu0 0.0
        %v4411 = vand.u32 %v3349, 4294901760
        %4412 = vmatmul.mubr.f32.gmra.mrb[0].mxu0 %v4411
        %v4413 = vpop.f32.mrb[0].mxu0
        %v4414 = vadd.f32 %v4179, %v4413
        %v4415 = vpop.f32.mrb[0].mxu0
        %4416 = vmatprep.mubr.f32.mxu0 0.0
        %v4417 = vand.u32 %v3350, 4294901760
        %4418 = vmatmul.mubr.f32.gmra.mrb[0].mxu0 %v4417
        %v4419 = vpop.f32.mrb[0].mxu0
        %v4420 = vadd.f32 %v4187, %v4419
        %v4421 = vpop.f32.mrb[0].mxu0
        %4422 = vmatprep.mubr.f32.mxu0 0.0
        %v4423 = vand.u32 %v3351, 4294901760
        %4424 = vmatmul.mubr.f32.gmra.mrb[0].mxu0 %v4423
        %v4425 = vpop.f32.mrb[0].mxu0
        %v4426 = vadd.f32 %v4195, %v4425
        %v4427 = vpop.f32.mrb[0].mxu0
        %4428 = vmatprep.mubr.f32.mxu0 0.0
        %v4429 = vand.u32 %v3352, 4294901760
        %4430 = vmatmul.mubr.f32.gmra.mrb[0].mxu0 %v4429
        %v4431 = vpop.f32.mrb[0].mxu0
        %v4432 = vadd.f32 %v4203, %v4431
        %v4433 = vpop.f32.mrb[0].mxu0
        %4434 = vmatprep.mubr.f32.mxu0 0.0
        %v4435 = vand.u32 %v3353, 4294901760
        %4436 = vmatmul.mubr.f32.gmra.mrb[0].mxu0 %v4435
        %v4437 = vpop.f32.mrb[0].mxu0
        %v4438 = vadd.f32 %v4211, %v4437
        %v4439 = vpop.f32.mrb[0].mxu0
        %4440 = vmatprep.mubr.f32.mxu0 0.0
        %v4441 = vand.u32 %v3354, 4294901760
        %4442 = vmatmul.mubr.f32.gmra.mrb[0].mxu0 %v4441
        %v4443 = vpop.f32.mrb[0].mxu0
        %v4444 = vadd.f32 %v4219, %v4443
        %v4445 = vpop.f32.mrb[0].mxu0
        %4446 = vmatprep.mubr.f32.mxu0 0.0
        %v4447 = vand.u32 %v3355, 4294901760
        %4448 = vmatmul.mubr.f32.gmra.mrb[0].mxu0 %v4447
        %v4449 = vpop.f32.mrb[0].mxu0
        %v4450 = vadd.f32 %v4227, %v4449
        %v4451 = vpop.f32.mrb[0].mxu0
        %4452 = vmatprep.mubr.f32.mxu0 0.0
        %v4453 = vand.u32 %v3356, 4294901760
        %4454 = vmatmul.mubr.f32.gmra.mrb[0].mxu0 %v4453
        %v4455 = vpop.f32.mrb[0].mxu0
        %v4456 = vadd.f32 %v4235, %v4455
        %v4457 = vpop.f32.mrb[0].mxu0
        %4458 = vmatprep.mubr.f32.mxu0 0.0
        %v4459 = vand.u32 %v3357, 4294901760
        %4460 = vmatmul.mubr.f32.gmra.mrb[0].mxu0 %v4459
        %v4461 = vpop.f32.mrb[0].mxu0
        %v4462 = vadd.f32 %v4243, %v4461
        %v4463 = vpop.f32.mrb[0].mxu0
        %4464 = vmatprep.mubr.f32.mxu0 0.0
        %v4465 = vand.u32 %v3358, 4294901760
        %4466 = vmatmul.mubr.f32.gmra.mrb[0].mxu0 %v4465
        %v4467 = vpop.f32.mrb[0].mxu0
        %v4468 = vadd.f32 %v4251, %v4467
        %v4469 = vpop.f32.mrb[0].mxu0
        %4470 = vmatprep.mubr.f32.mxu0 0.0
        %v4471 = vand.u32 %v3359, 4294901760
        %4472 = vmatmul.mubr.f32.gmra.mrb[0].mxu0 %v4471
        %v4473 = vpop.f32.mrb[0].mxu0
        %v4474 = vadd.f32 %v4259, %v4473
        %v4475 = vpop.f32.mrb[0].mxu0
        %4476 = vmatprep.mubr.f32.mxu0 0.0
        %v4477 = vand.u32 %v3360, 4294901760
        %4478 = vmatmul.mubr.f32.gmra.mrb[0].mxu0 %v4477
        %v4479 = vpop.f32.mrb[0].mxu0
        %v4480 = vadd.f32 %v4267, %v4479
        %v4481 = vpop.f32.mrb[0].mxu0
        %4482 = vmatprep.mubr.f32.mxu0 0.0
        %v4483 = vand.u32 %v3361, 4294901760
        %4484 = vmatmul.mubr.f32.gmra.mrb[0].mxu0 %v4483
        %v4485 = vpop.f32.mrb[0].mxu0
        %v4486 = vadd.f32 %v4275, %v4485
        %v4487 = vpop.f32.mrb[0].mxu0
        %4488 = vmatprep.mubr.f32.mxu0 0.0
        %v4489 = vand.u32 %v3362, 4294901760
        %4490 = vmatmul.mubr.f32.gmra.mrb[0].mxu0 %v4489
        %v4491 = vpop.f32.mrb[0].mxu0
        %v4492 = vadd.f32 %v4283, %v4491
        %v4493 = vpop.f32.mrb[0].mxu0
        %4494 = vdwg.mxu0
        %4495 = vmatprep.subr.mxu0 0.0
        %v4496 = vand.u32 %v3363, 4294901760
        %4497 = vmatpush1.msra.mxu0 %v4496
        %4498 = vmatprep.subr.mxu0 0.0
        %v4499 = vand.u32 %v3364, 4294901760
        %4500 = vmatpush1.msra.mxu0 %v4499
        %4501 = vmatprep.subr.mxu0 0.0
        %v4502 = vand.u32 %v3365, 4294901760
        %4503 = vmatpush1.msra.mxu0 %v4502
        %4504 = vmatprep.subr.mxu0 0.0
        %v4505 = vand.u32 %v3366, 4294901760
        %4506 = vmatpush1.msra.mxu0 %v4505
        %4507 = vmatprep.subr.mxu0 0.0
        %v4508 = vand.u32 %v3367, 4294901760
        %4509 = vmatpush1.msra.mxu0 %v4508
        %4510 = vmatprep.subr.mxu0 0.0
        %v4511 = vand.u32 %v3368, 4294901760
        %4512 = vmatpush1.msra.mxu0 %v4511
        %4513 = vmatprep.subr.mxu0 0.0
        %v4514 = vand.u32 %v3369, 4294901760
        %4515 = vmatpush1.msra.mxu0 %v4514
        %4516 = vmatprep.subr.mxu0 0.0
        %v4517 = vand.u32 %v3370, 4294901760
        %4518 = vmatpush1.msra.mxu0 %v4517
        %4519 = vmatprep.subr.mxu0 0.0
        %v4520 = vand.u32 %v3371, 4294901760
        %4521 = vmatpush1.msra.mxu0 %v4520
        %4522 = vmatprep.subr.mxu0 0.0
        %v4523 = vand.u32 %v3372, 4294901760
        %4524 = vmatpush1.msra.mxu0 %v4523
        %4525 = vmatprep.subr.mxu0 0.0
        %v4526 = vand.u32 %v3373, 4294901760
        %4527 = vmatpush1.msra.mxu0 %v4526
        %4528 = vmatprep.subr.mxu0 0.0
        %v4529 = vand.u32 %v3374, 4294901760
        %4530 = vmatpush1.msra.mxu0 %v4529
        %4531 = vmatprep.subr.mxu0 0.0
        %v4532 = vand.u32 %v3375, 4294901760
        %4533 = vmatpush1.msra.mxu0 %v4532
        %4534 = vmatprep.subr.mxu0 0.0
        %v4535 = vand.u32 %v3376, 4294901760
        %4536 = vmatpush1.msra.mxu0 %v4535
        %4537 = vmatprep.subr.mxu0 0.0
        %v4538 = vand.u32 %v3377, 4294901760
        %4539 = vmatpush1.msra.mxu0 %v4538
        %4540 = vmatprep.subr.mxu0 0.0
        %v4541 = vand.u32 %v3378, 4294901760
        %4542 = vmatpush1.msra.mxu0 %v4541
        %4543 = vmatprep.subr.mxu0 0.0
        %4544 = vmatpush1.msra.mxu0 0.0
        %4545 = vmatprep.subr.mxu0 0.0
        %4546 = vmatpush1.msra.mxu0 0.0
        %4547 = vmatprep.subr.mxu0 0.0
        %4548 = vmatpush1.msra.mxu0 0.0
        %4549 = vmatprep.subr.mxu0 0.0
        %4550 = vmatpush1.msra.mxu0 0.0
        %4551 = vmatprep.subr.mxu0 0.0
        %4552 = vmatpush1.msra.mxu0 0.0
        %4553 = vmatprep.subr.mxu0 0.0
        %4554 = vmatpush1.msra.mxu0 0.0
        %4555 = vmatprep.subr.mxu0 0.0
        %4556 = vmatpush1.msra.mxu0 0.0
        %4557 = vmatprep.subr.mxu0 0.0
        %4558 = vmatpush1.msra.mxu0 0.0
        %4559 = vmatprep.subr.mxu0 0.0
        %4560 = vmatpush1.msra.mxu0 0.0
        %4561 = vmatprep.subr.mxu0 0.0
        %4562 = vmatpush1.msra.mxu0 0.0
        %4563 = vmatprep.subr.mxu0 0.0
        %4564 = vmatpush1.msra.mxu0 0.0
        %4565 = vmatprep.subr.mxu0 0.0
        %4566 = vmatpush1.msra.mxu0 0.0
        %4567 = vmatprep.subr.mxu0 0.0
        %4568 = vmatpush1.msra.mxu0 0.0
        %4569 = vmatprep.subr.mxu0 0.0
        %4570 = vmatpush1.msra.mxu0 0.0
        %4571 = vmatprep.subr.mxu0 0.0
        %4572 = vmatpush1.msra.mxu0 0.0
        %4573 = vmatprep.subr.mxu0 0.0
        %4574 = vmatpush1.msra.mxu0 0.0
        %4575 = vmatprep.mubr.f32.mxu0 0.0
        %v4576 = vand.u32 %v3347, 4294901760
        %4577 = vmatmul.mubr.f32.gmra.mrb[0].mxu0 %v4576
        %v4578 = vpop.f32.mrb[0].mxu0
        %v4579 = vadd.f32 %v4402, %v4578
        %v4580 = vpop.f32.mrb[0].mxu0
        %4581 = vmatprep.mubr.f32.mxu0 0.0
        %v4582 = vand.u32 %v3348, 4294901760
        %4583 = vmatmul.mubr.f32.gmra.mrb[0].mxu0 %v4582
        %v4584 = vpop.f32.mrb[0].mxu0
        %v4585 = vadd.f32 %v4408, %v4584
        %v4586 = vpop.f32.mrb[0].mxu0
        %4587 = vmatprep.mubr.f32.mxu0 0.0
        %v4588 = vand.u32 %v3349, 4294901760
        %4589 = vmatmul.mubr.f32.gmra.mrb[0].mxu0 %v4588
        %v4590 = vpop.f32.mrb[0].mxu0
        %v4591 = vadd.f32 %v4414, %v4590
        %v4592 = vpop.f32.mrb[0].mxu0
        %4593 = vmatprep.mubr.f32.mxu0 0.0
        %v4594 = vand.u32 %v3350, 4294901760
        %4595 = vmatmul.mubr.f32.gmra.mrb[0].mxu0 %v4594
        %v4596 = vpop.f32.mrb[0].mxu0
        %v4597 = vadd.f32 %v4420, %v4596
        %v4598 = vpop.f32.mrb[0].mxu0
        %4599 = vmatprep.mubr.f32.mxu0 0.0
        %v4600 = vand.u32 %v3351, 4294901760
        %4601 = vmatmul.mubr.f32.gmra.mrb[0].mxu0 %v4600
        %v4602 = vpop.f32.mrb[0].mxu0
        %v4603 = vadd.f32 %v4426, %v4602
        %v4604 = vpop.f32.mrb[0].mxu0
        %4605 = vmatprep.mubr.f32.mxu0 0.0
        %v4606 = vand.u32 %v3352, 4294901760
        %4607 = vmatmul.mubr.f32.gmra.mrb[0].mxu0 %v4606
        %v4608 = vpop.f32.mrb[0].mxu0
        %v4609 = vadd.f32 %v4432, %v4608
        %v4610 = vpop.f32.mrb[0].mxu0
        %4611 = vmatprep.mubr.f32.mxu0 0.0
        %v4612 = vand.u32 %v3353, 4294901760
        %4613 = vmatmul.mubr.f32.gmra.mrb[0].mxu0 %v4612
        %v4614 = vpop.f32.mrb[0].mxu0
        %v4615 = vadd.f32 %v4438, %v4614
        %v4616 = vpop.f32.mrb[0].mxu0
        %4617 = vmatprep.mubr.f32.mxu0 0.0
        %v4618 = vand.u32 %v3354, 4294901760
        %4619 = vmatmul.mubr.f32.gmra.mrb[0].mxu0 %v4618
        %v4620 = vpop.f32.mrb[0].mxu0
        %v4621 = vadd.f32 %v4444, %v4620
        %v4622 = vpop.f32.mrb[0].mxu0
        %4623 = vmatprep.mubr.f32.mxu0 0.0
        %v4624 = vand.u32 %v3355, 4294901760
        %4625 = vmatmul.mubr.f32.gmra.mrb[0].mxu0 %v4624
        %v4626 = vpop.f32.mrb[0].mxu0
        %v4627 = vadd.f32 %v4450, %v4626
        %v4628 = vpop.f32.mrb[0].mxu0
        %4629 = vmatprep.mubr.f32.mxu0 0.0
        %v4630 = vand.u32 %v3356, 4294901760
        %4631 = vmatmul.mubr.f32.gmra.mrb[0].mxu0 %v4630
        %v4632 = vpop.f32.mrb[0].mxu0
        %v4633 = vadd.f32 %v4456, %v4632
        %v4634 = vpop.f32.mrb[0].mxu0
        %4635 = vmatprep.mubr.f32.mxu0 0.0
        %v4636 = vand.u32 %v3357, 4294901760
        %4637 = vmatmul.mubr.f32.gmra.mrb[0].mxu0 %v4636
        %v4638 = vpop.f32.mrb[0].mxu0
        %v4639 = vadd.f32 %v4462, %v4638
        %v4640 = vpop.f32.mrb[0].mxu0
        %4641 = vmatprep.mubr.f32.mxu0 0.0
        %v4642 = vand.u32 %v3358, 4294901760
        %4643 = vmatmul.mubr.f32.gmra.mrb[0].mxu0 %v4642
        %v4644 = vpop.f32.mrb[0].mxu0
        %v4645 = vadd.f32 %v4468, %v4644
        %v4646 = vpop.f32.mrb[0].mxu0
        %4647 = vmatprep.mubr.f32.mxu0 0.0
        %v4648 = vand.u32 %v3359, 4294901760
        %4649 = vmatmul.mubr.f32.gmra.mrb[0].mxu0 %v4648
        %v4650 = vpop.f32.mrb[0].mxu0
        %v4651 = vadd.f32 %v4474, %v4650
        %v4652 = vpop.f32.mrb[0].mxu0
        %4653 = vmatprep.mubr.f32.mxu0 0.0
        %v4654 = vand.u32 %v3360, 4294901760
        %4655 = vmatmul.mubr.f32.gmra.mrb[0].mxu0 %v4654
        %v4656 = vpop.f32.mrb[0].mxu0
        %v4657 = vadd.f32 %v4480, %v4656
        %v4658 = vpop.f32.mrb[0].mxu0
        %4659 = vmatprep.mubr.f32.mxu0 0.0
        %v4660 = vand.u32 %v3361, 4294901760
        %4661 = vmatmul.mubr.f32.gmra.mrb[0].mxu0 %v4660
        %v4662 = vpop.f32.mrb[0].mxu0
        %v4663 = vadd.f32 %v4486, %v4662
        %v4664 = vpop.f32.mrb[0].mxu0
        %4665 = vmatprep.mubr.f32.mxu0 0.0
        %v4666 = vand.u32 %v3362, 4294901760
        %4667 = vmatmul.mubr.f32.gmra.mrb[0].mxu0 %v4666
        %v4668 = vpop.f32.mrb[0].mxu0
        %v4669 = vadd.f32 %v4492, %v4668
        %v4670 = vpop.f32.mrb[0].mxu0
        %4671 = vdwg.mxu0
        %v4672 = vmax.f32 %v4579, 0.0
        %v4673 = vmax.f32 %v4585, 0.0
        %v4674 = vmax.f32 %v4591, 0.0
        %v4675 = vmax.f32 %v4597, 0.0
        %v4676 = vmax.f32 %v4603, 0.0
        %v4677 = vmax.f32 %v4609, 0.0
        %v4678 = vmax.f32 %v4615, 0.0
        %v4679 = vmax.f32 %v4621, 0.0
        %v4680 = vmax.f32 %v4627, 0.0
        %v4681 = vmax.f32 %v4633, 0.0
        %v4682 = vmax.f32 %v4639, 0.0
        %v4683 = vmax.f32 %v4645, 0.0
        %v4684 = vmax.f32 %v4651, 0.0
        %v4685 = vmax.f32 %v4657, 0.0
        %v4686 = vmax.f32 %v4663, 0.0
        %v4687 = vmax.f32 %v4669, 0.0
        %v4688 = vlaneseq
        %v4689 = vshrl.u32 %v4688, 7
        %v4690 = vadd.s32 %v4689, 8
        %v4691 = vadd.s32 %v4689, 16
        %v4692 = vadd.s32 %v4689, 24
        %v4693 = vadd.s32 %v4689, 32
        %v4694 = vadd.s32 %v4689, 40
        %v4695 = vadd.s32 %v4689, 48
        %v4696 = vadd.s32 %v4689, 56
        %v4697 = vadd.s32 %v4689, 64
        %v4698 = vadd.s32 %v4689, 72
        %v4699 = vadd.s32 %v4689, 80
        %v4700 = vadd.s32 %v4689, 88
        %v4701 = vadd.s32 %v4689, 96
        %v4702 = vadd.s32 %v4689, 104
        %v4703 = vadd.s32 %v4689, 112
        %v4704 = vadd.s32 %v4689, 120
        %v4705 = vld [vmem:[%s352] sm:$0x1]
        %v4706 = vlaneseq
        %v4707 = vshrl.u32 %v4706, 7
        %v4708 = vsub.s32 0, %v4707
        %v4709 = vrot.slane %v4705, %v4708
        %vm4710 = vcmp.eq.s32.totalorder %v4709, %v4689
        %vm4711 = vcmp.eq.s32.totalorder %v4709, %v4690
        %vm4712 = vcmp.eq.s32.totalorder %v4709, %v4691
        %vm4713 = vcmp.eq.s32.totalorder %v4709, %v4692
        %vm4714 = vcmp.eq.s32.totalorder %v4709, %v4693
        %vm4715 = vcmp.eq.s32.totalorder %v4709, %v4694
        %vm4716 = vcmp.eq.s32.totalorder %v4709, %v4695
        %vm4717 = vcmp.eq.s32.totalorder %v4709, %v4696
        %vm4718 = vcmp.eq.s32.totalorder %v4709, %v4697
        %vm4719 = vcmp.eq.s32.totalorder %v4709, %v4698
        %vm4720 = vcmp.eq.s32.totalorder %v4709, %v4699
        %vm4721 = vcmp.eq.s32.totalorder %v4709, %v4700
        %vm4722 = vcmp.eq.s32.totalorder %v4709, %v4701
        %vm4723 = vcmp.eq.s32.totalorder %v4709, %v4702
        %vm4724 = vcmp.eq.s32.totalorder %v4709, %v4703
        %vm4725 = vcmp.eq.s32.totalorder %v4709, %v4704
        %v4726 = vsel %vm4710, 1, 0
        %v4727 = vsel %vm4711, 1, 0
        %v4728 = vsel %vm4712, 1, 0
        %v4729 = vsel %vm4713, 1, 0
        %v4730 = vsel %vm4714, 1, 0
        %v4731 = vsel %vm4715, 1, 0
        %v4732 = vsel %vm4716, 1, 0
        %v4733 = vsel %vm4717, 1, 0
        %v4734 = vsel %vm4718, 1, 0
        %v4735 = vsel %vm4719, 1, 0
        %v4736 = vsel %vm4720, 1, 0
        %v4737 = vsel %vm4721, 1, 0
        %v4738 = vsel %vm4722, 1, 0
        %v4739 = vsel %vm4723, 1, 0
        %v4740 = vsel %vm4724, 1, 0
        %v4741 = vsel %vm4725, 1, 0
        %v4742 = vcvt.s32.f32 %v4726
        %v4743 = vcvt.s32.f32 %v4727
        %v4744 = vcvt.s32.f32 %v4728
        %v4745 = vcvt.s32.f32 %v4729
        %v4746 = vcvt.s32.f32 %v4730
        %v4747 = vcvt.s32.f32 %v4731
        %v4748 = vcvt.s32.f32 %v4732
        %v4749 = vcvt.s32.f32 %v4733
        %v4750 = vcvt.s32.f32 %v4734
        %v4751 = vcvt.s32.f32 %v4735
        %v4752 = vcvt.s32.f32 %v4736
        %v4753 = vcvt.s32.f32 %v4737
        %v4754 = vcvt.s32.f32 %v4738
        %v4755 = vcvt.s32.f32 %v4739
        %v4756 = vcvt.s32.f32 %v4740
        %v4757 = vcvt.s32.f32 %v4741
        %v4758 = vld [vmem:[#allocation5] sm:$0xff]
        %v4759 = vld [vmem:[#allocation5 + $0x8] sm:$0xff]
        %v4760 = vld [vmem:[#allocation5 + $0x10] sm:$0xff]
        %v4761 = vld [vmem:[#allocation5 + $0x18] sm:$0xff]
        %v4762 = vld [vmem:[#allocation5 + $0x20] sm:$0xff]
        %v4763 = vld [vmem:[#allocation5 + $0x28] sm:$0xff]
        %v4764 = vld [vmem:[#allocation5 + $0x30] sm:$0xff]
        %v4765 = vld [vmem:[#allocation5 + $0x38] sm:$0xff]
        %v4766 = vld [vmem:[#allocation5 + $0x40] sm:$0xff]
        %v4767 = vld [vmem:[#allocation5 + $0x48] sm:$0xff]
        %v4768 = vld [vmem:[#allocation5 + $0x50] sm:$0xff]
        %v4769 = vld [vmem:[#allocation5 + $0x58] sm:$0xff]
        %v4770 = vld [vmem:[#allocation5 + $0x60] sm:$0xff]
        %v4771 = vld [vmem:[#allocation5 + $0x68] sm:$0xff]
        %v4772 = vld [vmem:[#allocation5 + $0x70] sm:$0xff]
        %v4773 = vld [vmem:[#allocation5 + $0x78] sm:$0xff]
        %4774 = vmatprep.subr.mxu0 0.0
        %v4775 = vand.u32 %v4672, 4294901760
        %4776 = vmatpush1.msra.mxu0 %v4775
        %4777 = vmatprep.subr.mxu0 0.0
        %v4778 = vand.u32 %v4673, 4294901760
        %4779 = vmatpush1.msra.mxu0 %v4778
        %4780 = vmatprep.subr.mxu0 0.0
        %v4781 = vand.u32 %v4674, 4294901760
        %4782 = vmatpush1.msra.mxu0 %v4781
        %4783 = vmatprep.subr.mxu0 0.0
        %v4784 = vand.u32 %v4675, 4294901760
        %4785 = vmatpush1.msra.mxu0 %v4784
        %4786 = vmatprep.subr.mxu0 0.0
        %v4787 = vand.u32 %v4676, 4294901760
        %4788 = vmatpush1.msra.mxu0 %v4787
        %4789 = vmatprep.subr.mxu0 0.0
        %v4790 = vand.u32 %v4677, 4294901760
        %4791 = vmatpush1.msra.mxu0 %v4790
        %4792 = vmatprep.subr.mxu0 0.0
        %v4793 = vand.u32 %v4678, 4294901760
        %4794 = vmatpush1.msra.mxu0 %v4793
        %4795 = vmatprep.subr.mxu0 0.0
        %v4796 = vand.u32 %v4679, 4294901760
        %4797 = vmatpush1.msra.mxu0 %v4796
        %4798 = vmatprep.subr.mxu0 0.0
        %v4799 = vand.u32 %v4680, 4294901760
        %4800 = vmatpush1.msra.mxu0 %v4799
        %4801 = vmatprep.subr.mxu0 0.0
        %v4802 = vand.u32 %v4681, 4294901760
        %4803 = vmatpush1.msra.mxu0 %v4802
        %4804 = vmatprep.subr.mxu0 0.0
        %v4805 = vand.u32 %v4682, 4294901760
        %4806 = vmatpush1.msra.mxu0 %v4805
        %4807 = vmatprep.subr.mxu0 0.0
        %v4808 = vand.u32 %v4683, 4294901760
        %4809 = vmatpush1.msra.mxu0 %v4808
        %4810 = vmatprep.subr.mxu0 0.0
        %v4811 = vand.u32 %v4684, 4294901760
        %4812 = vmatpush1.msra.mxu0 %v4811
        %4813 = vmatprep.subr.mxu0 0.0
        %v4814 = vand.u32 %v4685, 4294901760
        %4815 = vmatpush1.msra.mxu0 %v4814
        %4816 = vmatprep.subr.mxu0 0.0
        %v4817 = vand.u32 %v4686, 4294901760
        %4818 = vmatpush1.msra.mxu0 %v4817
        %4819 = vmatprep.subr.mxu0 0.0
        %v4820 = vand.u32 %v4687, 4294901760
        %4821 = vmatpush1.msra.mxu0 %v4820
        %4822 = vmatprep.subr.mxu0 0.0
        %4823 = vmatpush1.msra.mxu0 0.0
        %4824 = vmatprep.subr.mxu0 0.0
        %4825 = vmatpush1.msra.mxu0 0.0
        %4826 = vmatprep.subr.mxu0 0.0
        %4827 = vmatpush1.msra.mxu0 0.0
        %4828 = vmatprep.subr.mxu0 0.0
        %4829 = vmatpush1.msra.mxu0 0.0
        %4830 = vmatprep.subr.mxu0 0.0
        %4831 = vmatpush1.msra.mxu0 0.0
        %4832 = vmatprep.subr.mxu0 0.0
        %4833 = vmatpush1.msra.mxu0 0.0
        %4834 = vmatprep.subr.mxu0 0.0
        %4835 = vmatpush1.msra.mxu0 0.0
        %4836 = vmatprep.subr.mxu0 0.0
        %4837 = vmatpush1.msra.mxu0 0.0
        %4838 = vmatprep.subr.mxu0 0.0
        %4839 = vmatpush1.msra.mxu0 0.0
        %4840 = vmatprep.subr.mxu0 0.0
        %4841 = vmatpush1.msra.mxu0 0.0
        %4842 = vmatprep.subr.mxu0 0.0
        %4843 = vmatpush1.msra.mxu0 0.0
        %4844 = vmatprep.subr.mxu0 0.0
        %4845 = vmatpush1.msra.mxu0 0.0
        %4846 = vmatprep.subr.mxu0 0.0
        %4847 = vmatpush1.msra.mxu0 0.0
        %4848 = vmatprep.subr.mxu0 0.0
        %4849 = vmatpush1.msra.mxu0 0.0
        %4850 = vmatprep.subr.mxu0 0.0
        %4851 = vmatpush1.msra.mxu0 0.0
        %4852 = vmatprep.subr.mxu0 0.0
        %4853 = vmatpush1.msra.mxu0 0.0
        %4854 = vmatprep.mubr.f32.mxu0 0.0
        %v4855 = vand.u32 %v4742, 4294901760
        %v4856 = vsub.f32 %v4742, %v4855
        %v4857 = vand.u32 %v4856, 4294901760
        %v4858 = vsub.f32 %v4856, %v4857
        %v4859 = vand.u32 %v4858, 4294901760
        %4860 = vmatmul.mubr.f32.gmra.mrb[0].mxu0 %v4859
        %v4861 = vpop.f32.mrb[0].mxu0
        %v4862 = vadd.f32 0.0, %v4861
        %v4863 = vpop.f32.mrb[0].mxu0
        %4864 = vmatprep.mubr.f32.mxu0 0.0
        %v4865 = vand.u32 %v4743, 4294901760
        %v4866 = vsub.f32 %v4743, %v4865
        %v4867 = vand.u32 %v4866, 4294901760
        %v4868 = vsub.f32 %v4866, %v4867
        %v4869 = vand.u32 %v4868, 4294901760
        %4870 = vmatmul.mubr.f32.gmra.mrb[0].mxu0 %v4869
        %v4871 = vpop.f32.mrb[0].mxu0
        %v4872 = vadd.f32 0.0, %v4871
        %v4873 = vpop.f32.mrb[0].mxu0
        %4874 = vmatprep.mubr.f32.mxu0 0.0
        %v4875 = vand.u32 %v4744, 4294901760
        %v4876 = vsub.f32 %v4744, %v4875
        %v4877 = vand.u32 %v4876, 4294901760
        %v4878 = vsub.f32 %v4876, %v4877
        %v4879 = vand.u32 %v4878, 4294901760
        %4880 = vmatmul.mubr.f32.gmra.mrb[0].mxu0 %v4879
        %v4881 = vpop.f32.mrb[0].mxu0
        %v4882 = vadd.f32 0.0, %v4881
        %v4883 = vpop.f32.mrb[0].mxu0
        %4884 = vmatprep.mubr.f32.mxu0 0.0
        %v4885 = vand.u32 %v4745, 4294901760
        %v4886 = vsub.f32 %v4745, %v4885
        %v4887 = vand.u32 %v4886, 4294901760
        %v4888 = vsub.f32 %v4886, %v4887
        %v4889 = vand.u32 %v4888, 4294901760
        %4890 = vmatmul.mubr.f32.gmra.mrb[0].mxu0 %v4889
        %v4891 = vpop.f32.mrb[0].mxu0
        %v4892 = vadd.f32 0.0, %v4891
        %v4893 = vpop.f32.mrb[0].mxu0
        %4894 = vmatprep.mubr.f32.mxu0 0.0
        %v4895 = vand.u32 %v4746, 4294901760
        %v4896 = vsub.f32 %v4746, %v4895
        %v4897 = vand.u32 %v4896, 4294901760
        %v4898 = vsub.f32 %v4896, %v4897
        %v4899 = vand.u32 %v4898, 4294901760
        %4900 = vmatmul.mubr.f32.gmra.mrb[0].mxu0 %v4899
        %v4901 = vpop.f32.mrb[0].mxu0
        %v4902 = vadd.f32 0.0, %v4901
        %v4903 = vpop.f32.mrb[0].mxu0
        %4904 = vmatprep.mubr.f32.mxu0 0.0
        %v4905 = vand.u32 %v4747, 4294901760
        %v4906 = vsub.f32 %v4747, %v4905
        %v4907 = vand.u32 %v4906, 4294901760
        %v4908 = vsub.f32 %v4906, %v4907
        %v4909 = vand.u32 %v4908, 4294901760
        %4910 = vmatmul.mubr.f32.gmra.mrb[0].mxu0 %v4909
        %v4911 = vpop.f32.mrb[0].mxu0
        %v4912 = vadd.f32 0.0, %v4911
        %v4913 = vpop.f32.mrb[0].mxu0
        %4914 = vmatprep.mubr.f32.mxu0 0.0
        %v4915 = vand.u32 %v4748, 4294901760
        %v4916 = vsub.f32 %v4748, %v4915
        %v4917 = vand.u32 %v4916, 4294901760
        %v4918 = vsub.f32 %v4916, %v4917
        %v4919 = vand.u32 %v4918, 4294901760
        %4920 = vmatmul.mubr.f32.gmra.mrb[0].mxu0 %v4919
        %v4921 = vpop.f32.mrb[0].mxu0
        %v4922 = vadd.f32 0.0, %v4921
        %v4923 = vpop.f32.mrb[0].mxu0
        %4924 = vmatprep.mubr.f32.mxu0 0.0
        %v4925 = vand.u32 %v4749, 4294901760
        %v4926 = vsub.f32 %v4749, %v4925
        %v4927 = vand.u32 %v4926, 4294901760
        %v4928 = vsub.f32 %v4926, %v4927
        %v4929 = vand.u32 %v4928, 4294901760
        %4930 = vmatmul.mubr.f32.gmra.mrb[0].mxu0 %v4929
        %v4931 = vpop.f32.mrb[0].mxu0
        %v4932 = vadd.f32 0.0, %v4931
        %v4933 = vpop.f32.mrb[0].mxu0
        %4934 = vmatprep.mubr.f32.mxu0 0.0
        %v4935 = vand.u32 %v4750, 4294901760
        %v4936 = vsub.f32 %v4750, %v4935
        %v4937 = vand.u32 %v4936, 4294901760
        %v4938 = vsub.f32 %v4936, %v4937
        %v4939 = vand.u32 %v4938, 4294901760
        %4940 = vmatmul.mubr.f32.gmra.mrb[0].mxu0 %v4939
        %v4941 = vpop.f32.mrb[0].mxu0
        %v4942 = vadd.f32 0.0, %v4941
        %v4943 = vpop.f32.mrb[0].mxu0
        %4944 = vmatprep.mubr.f32.mxu0 0.0
        %v4945 = vand.u32 %v4751, 4294901760
        %v4946 = vsub.f32 %v4751, %v4945
        %v4947 = vand.u32 %v4946, 4294901760
        %v4948 = vsub.f32 %v4946, %v4947
        %v4949 = vand.u32 %v4948, 4294901760
        %4950 = vmatmul.mubr.f32.gmra.mrb[0].mxu0 %v4949
        %v4951 = vpop.f32.mrb[0].mxu0
        %v4952 = vadd.f32 0.0, %v4951
        %v4953 = vpop.f32.mrb[0].mxu0
        %4954 = vmatprep.mubr.f32.mxu0 0.0
        %v4955 = vand.u32 %v4752, 4294901760
        %v4956 = vsub.f32 %v4752, %v4955
        %v4957 = vand.u32 %v4956, 4294901760
        %v4958 = vsub.f32 %v4956, %v4957
        %v4959 = vand.u32 %v4958, 4294901760
        %4960 = vmatmul.mubr.f32.gmra.mrb[0].mxu0 %v4959
        %v4961 = vpop.f32.mrb[0].mxu0
        %v4962 = vadd.f32 0.0, %v4961
        %v4963 = vpop.f32.mrb[0].mxu0
        %4964 = vmatprep.mubr.f32.mxu0 0.0
        %v4965 = vand.u32 %v4753, 4294901760
        %v4966 = vsub.f32 %v4753, %v4965
        %v4967 = vand.u32 %v4966, 4294901760
        %v4968 = vsub.f32 %v4966, %v4967
        %v4969 = vand.u32 %v4968, 4294901760
        %4970 = vmatmul.mubr.f32.gmra.mrb[0].mxu0 %v4969
        %v4971 = vpop.f32.mrb[0].mxu0
        %v4972 = vadd.f32 0.0, %v4971
        %v4973 = vpop.f32.mrb[0].mxu0
        %4974 = vmatprep.mubr.f32.mxu0 0.0
        %v4975 = vand.u32 %v4754, 4294901760
        %v4976 = vsub.f32 %v4754, %v4975
        %v4977 = vand.u32 %v4976, 4294901760
        %v4978 = vsub.f32 %v4976, %v4977
        %v4979 = vand.u32 %v4978, 4294901760
        %4980 = vmatmul.mubr.f32.gmra.mrb[0].mxu0 %v4979
        %v4981 = vpop.f32.mrb[0].mxu0
        %v4982 = vadd.f32 0.0, %v4981
        %v4983 = vpop.f32.mrb[0].mxu0
        %4984 = vmatprep.mubr.f32.mxu0 0.0
        %v4985 = vand.u32 %v4755, 4294901760
        %v4986 = vsub.f32 %v4755, %v4985
        %v4987 = vand.u32 %v4986, 4294901760
        %v4988 = vsub.f32 %v4986, %v4987
        %v4989 = vand.u32 %v4988, 4294901760
        %4990 = vmatmul.mubr.f32.gmra.mrb[0].mxu0 %v4989
        %v4991 = vpop.f32.mrb[0].mxu0
        %v4992 = vadd.f32 0.0, %v4991
        %v4993 = vpop.f32.mrb[0].mxu0
        %4994 = vmatprep.mubr.f32.mxu0 0.0
        %v4995 = vand.u32 %v4756, 4294901760
        %v4996 = vsub.f32 %v4756, %v4995
        %v4997 = vand.u32 %v4996, 4294901760
        %v4998 = vsub.f32 %v4996, %v4997
        %v4999 = vand.u32 %v4998, 4294901760
        %5000 = vmatmul.mubr.f32.gmra.mrb[0].mxu0 %v4999
        %v5001 = vpop.f32.mrb[0].mxu0
        %v5002 = vadd.f32 0.0, %v5001
        %v5003 = vpop.f32.mrb[0].mxu0
        %5004 = vmatprep.mubr.f32.mxu0 0.0
        %v5005 = vand.u32 %v4757, 4294901760
        %v5006 = vsub.f32 %v4757, %v5005
        %v5007 = vand.u32 %v5006, 4294901760
        %v5008 = vsub.f32 %v5006, %v5007
        %v5009 = vand.u32 %v5008, 4294901760
        %5010 = vmatmul.mubr.f32.gmra.mrb[0].mxu0 %v5009
        %v5011 = vpop.f32.mrb[0].mxu0
        %v5012 = vadd.f32 0.0, %v5011
        %v5013 = vpop.f32.mrb[0].mxu0
        %5014 = vdwg.mxu0
        %5015 = vmatprep.subr.mxu0 0.0
        %v5016 = vand.u32 %v4672, 4294901760
        %v5017 = vsub.f32 %v4672, %v5016
        %v5018 = vand.u32 %v5017, 4294901760
        %v5019 = vsub.f32 %v5017, %v5018
        %v5020 = vand.u32 %v5019, 4294901760
        %5021 = vmatpush1.msra.mxu0 %v5020
        %5022 = vmatprep.subr.mxu0 0.0
        %v5023 = vand.u32 %v4673, 4294901760
        %v5024 = vsub.f32 %v4673, %v5023
        %v5025 = vand.u32 %v5024, 4294901760
        %v5026 = vsub.f32 %v5024, %v5025
        %v5027 = vand.u32 %v5026, 4294901760
        %5028 = vmatpush1.msra.mxu0 %v5027
        %5029 = vmatprep.subr.mxu0 0.0
        %v5030 = vand.u32 %v4674, 4294901760
        %v5031 = vsub.f32 %v4674, %v5030
        %v5032 = vand.u32 %v5031, 4294901760
        %v5033 = vsub.f32 %v5031, %v5032
        %v5034 = vand.u32 %v5033, 4294901760
        %5035 = vmatpush1.msra.mxu0 %v5034
        %5036 = vmatprep.subr.mxu0 0.0
        %v5037 = vand.u32 %v4675, 4294901760
        %v5038 = vsub.f32 %v4675, %v5037
        %v5039 = vand.u32 %v5038, 4294901760
        %v5040 = vsub.f32 %v5038, %v5039
        %v5041 = vand.u32 %v5040, 4294901760
        %5042 = vmatpush1.msra.mxu0 %v5041
        %5043 = vmatprep.subr.mxu0 0.0
        %v5044 = vand.u32 %v4676, 4294901760
        %v5045 = vsub.f32 %v4676, %v5044
        %v5046 = vand.u32 %v5045, 4294901760
        %v5047 = vsub.f32 %v5045, %v5046
        %v5048 = vand.u32 %v5047, 4294901760
        %5049 = vmatpush1.msra.mxu0 %v5048
        %5050 = vmatprep.subr.mxu0 0.0
        %v5051 = vand.u32 %v4677, 4294901760
        %v5052 = vsub.f32 %v4677, %v5051
        %v5053 = vand.u32 %v5052, 4294901760
        %v5054 = vsub.f32 %v5052, %v5053
        %v5055 = vand.u32 %v5054, 4294901760
        %5056 = vmatpush1.msra.mxu0 %v5055
        %5057 = vmatprep.subr.mxu0 0.0
        %v5058 = vand.u32 %v4678, 4294901760
        %v5059 = vsub.f32 %v4678, %v5058
        %v5060 = vand.u32 %v5059, 4294901760
        %v5061 = vsub.f32 %v5059, %v5060
        %v5062 = vand.u32 %v5061, 4294901760
        %5063 = vmatpush1.msra.mxu0 %v5062
        %5064 = vmatprep.subr.mxu0 0.0
        %v5065 = vand.u32 %v4679, 4294901760
        %v5066 = vsub.f32 %v4679, %v5065
        %v5067 = vand.u32 %v5066, 4294901760
        %v5068 = vsub.f32 %v5066, %v5067
        %v5069 = vand.u32 %v5068, 4294901760
        %5070 = vmatpush1.msra.mxu0 %v5069
        %5071 = vmatprep.subr.mxu0 0.0
        %v5072 = vand.u32 %v4680, 4294901760
        %v5073 = vsub.f32 %v4680, %v5072
        %v5074 = vand.u32 %v5073, 4294901760
        %v5075 = vsub.f32 %v5073, %v5074
        %v5076 = vand.u32 %v5075, 4294901760
        %5077 = vmatpush1.msra.mxu0 %v5076
        %5078 = vmatprep.subr.mxu0 0.0
        %v5079 = vand.u32 %v4681, 4294901760
        %v5080 = vsub.f32 %v4681, %v5079
        %v5081 = vand.u32 %v5080, 4294901760
        %v5082 = vsub.f32 %v5080, %v5081
        %v5083 = vand.u32 %v5082, 4294901760
        %5084 = vmatpush1.msra.mxu0 %v5083
        %5085 = vmatprep.subr.mxu0 0.0
        %v5086 = vand.u32 %v4682, 4294901760
        %v5087 = vsub.f32 %v4682, %v5086
        %v5088 = vand.u32 %v5087, 4294901760
        %v5089 = vsub.f32 %v5087, %v5088
        %v5090 = vand.u32 %v5089, 4294901760
        %5091 = vmatpush1.msra.mxu0 %v5090
        %5092 = vmatprep.subr.mxu0 0.0
        %v5093 = vand.u32 %v4683, 4294901760
        %v5094 = vsub.f32 %v4683, %v5093
        %v5095 = vand.u32 %v5094, 4294901760
        %v5096 = vsub.f32 %v5094, %v5095
        %v5097 = vand.u32 %v5096, 4294901760
        %5098 = vmatpush1.msra.mxu0 %v5097
        %5099 = vmatprep.subr.mxu0 0.0
        %v5100 = vand.u32 %v4684, 4294901760
        %v5101 = vsub.f32 %v4684, %v5100
        %v5102 = vand.u32 %v5101, 4294901760
        %v5103 = vsub.f32 %v5101, %v5102
        %v5104 = vand.u32 %v5103, 4294901760
        %5105 = vmatpush1.msra.mxu0 %v5104
        %5106 = vmatprep.subr.mxu0 0.0
        %v5107 = vand.u32 %v4685, 4294901760
        %v5108 = vsub.f32 %v4685, %v5107
        %v5109 = vand.u32 %v5108, 4294901760
        %v5110 = vsub.f32 %v5108, %v5109
        %v5111 = vand.u32 %v5110, 4294901760
        %5112 = vmatpush1.msra.mxu0 %v5111
        %5113 = vmatprep.subr.mxu0 0.0
        %v5114 = vand.u32 %v4686, 4294901760
        %v5115 = vsub.f32 %v4686, %v5114
        %v5116 = vand.u32 %v5115, 4294901760
        %v5117 = vsub.f32 %v5115, %v5116
        %v5118 = vand.u32 %v5117, 4294901760
        %5119 = vmatpush1.msra.mxu0 %v5118
        %5120 = vmatprep.subr.mxu0 0.0
        %v5121 = vand.u32 %v4687, 4294901760
        %v5122 = vsub.f32 %v4687, %v5121
        %v5123 = vand.u32 %v5122, 4294901760
        %v5124 = vsub.f32 %v5122, %v5123
        %v5125 = vand.u32 %v5124, 4294901760
        %5126 = vmatpush1.msra.mxu0 %v5125
        %5127 = vmatprep.subr.mxu0 0.0
        %5128 = vmatpush1.msra.mxu0 0.0
        %5129 = vmatprep.subr.mxu0 0.0
        %5130 = vmatpush1.msra.mxu0 0.0
        %5131 = vmatprep.subr.mxu0 0.0
        %5132 = vmatpush1.msra.mxu0 0.0
        %5133 = vmatprep.subr.mxu0 0.0
        %5134 = vmatpush1.msra.mxu0 0.0
        %5135 = vmatprep.subr.mxu0 0.0
        %5136 = vmatpush1.msra.mxu0 0.0
        %5137 = vmatprep.subr.mxu0 0.0
        %5138 = vmatpush1.msra.mxu0 0.0
        %5139 = vmatprep.subr.mxu0 0.0
        %5140 = vmatpush1.msra.mxu0 0.0
        %5141 = vmatprep.subr.mxu0 0.0
        %5142 = vmatpush1.msra.mxu0 0.0
        %5143 = vmatprep.subr.mxu0 0.0
        %5144 = vmatpush1.msra.mxu0 0.0
        %5145 = vmatprep.subr.mxu0 0.0
        %5146 = vmatpush1.msra.mxu0 0.0
        %5147 = vmatprep.subr.mxu0 0.0
        %5148 = vmatpush1.msra.mxu0 0.0
        %5149 = vmatprep.subr.mxu0 0.0
        %5150 = vmatpush1.msra.mxu0 0.0
        %5151 = vmatprep.subr.mxu0 0.0
        %5152 = vmatpush1.msra.mxu0 0.0
        %5153 = vmatprep.subr.mxu0 0.0
        %5154 = vmatpush1.msra.mxu0 0.0
        %5155 = vmatprep.subr.mxu0 0.0
        %5156 = vmatpush1.msra.mxu0 0.0
        %5157 = vmatprep.subr.mxu0 0.0
        %5158 = vmatpush1.msra.mxu0 0.0
        %5159 = vmatprep.mubr.f32.mxu0 0.0
        %v5160 = vand.u32 %v4742, 4294901760
        %5161 = vmatmul.mubr.f32.gmra.mrb[0].mxu0 %v5160
        %v5162 = vpop.f32.mrb[0].mxu0
        %v5163 = vadd.f32 %v4862, %v5162
        %v5164 = vpop.f32.mrb[0].mxu0
        %5165 = vmatprep.mubr.f32.mxu0 0.0
        %v5166 = vand.u32 %v4743, 4294901760
        %5167 = vmatmul.mubr.f32.gmra.mrb[0].mxu0 %v5166
        %v5168 = vpop.f32.mrb[0].mxu0
        %v5169 = vadd.f32 %v4872, %v5168
        %v5170 = vpop.f32.mrb[0].mxu0
        %5171 = vmatprep.mubr.f32.mxu0 0.0
        %v5172 = vand.u32 %v4744, 4294901760
        %5173 = vmatmul.mubr.f32.gmra.mrb[0].mxu0 %v5172
        %v5174 = vpop.f32.mrb[0].mxu0
        %v5175 = vadd.f32 %v4882, %v5174
        %v5176 = vpop.f32.mrb[0].mxu0
        %5177 = vmatprep.mubr.f32.mxu0 0.0
        %v5178 = vand.u32 %v4745, 4294901760
        %5179 = vmatmul.mubr.f32.gmra.mrb[0].mxu0 %v5178
        %v5180 = vpop.f32.mrb[0].mxu0
        %v5181 = vadd.f32 %v4892, %v5180
        %v5182 = vpop.f32.mrb[0].mxu0
        %5183 = vmatprep.mubr.f32.mxu0 0.0
        %v5184 = vand.u32 %v4746, 4294901760
        %5185 = vmatmul.mubr.f32.gmra.mrb[0].mxu0 %v5184
        %v5186 = vpop.f32.mrb[0].mxu0
        %v5187 = vadd.f32 %v4902, %v5186
        %v5188 = vpop.f32.mrb[0].mxu0
        %5189 = vmatprep.mubr.f32.mxu0 0.0
        %v5190 = vand.u32 %v4747, 4294901760
        %5191 = vmatmul.mubr.f32.gmra.mrb[0].mxu0 %v5190
        %v5192 = vpop.f32.mrb[0].mxu0
        %v5193 = vadd.f32 %v4912, %v5192
        %v5194 = vpop.f32.mrb[0].mxu0
        %5195 = vmatprep.mubr.f32.mxu0 0.0
        %v5196 = vand.u32 %v4748, 4294901760
        %5197 = vmatmul.mubr.f32.gmra.mrb[0].mxu0 %v5196
        %v5198 = vpop.f32.mrb[0].mxu0
        %v5199 = vadd.f32 %v4922, %v5198
        %v5200 = vpop.f32.mrb[0].mxu0
        %5201 = vmatprep.mubr.f32.mxu0 0.0
        %v5202 = vand.u32 %v4749, 4294901760
        %5203 = vmatmul.mubr.f32.gmra.mrb[0].mxu0 %v5202
        %v5204 = vpop.f32.mrb[0].mxu0
        %v5205 = vadd.f32 %v4932, %v5204
        %v5206 = vpop.f32.mrb[0].mxu0
        %5207 = vmatprep.mubr.f32.mxu0 0.0
        %v5208 = vand.u32 %v4750, 4294901760
        %5209 = vmatmul.mubr.f32.gmra.mrb[0].mxu0 %v5208
        %v5210 = vpop.f32.mrb[0].mxu0
        %v5211 = vadd.f32 %v4942, %v5210
        %v5212 = vpop.f32.mrb[0].mxu0
        %5213 = vmatprep.mubr.f32.mxu0 0.0
        %v5214 = vand.u32 %v4751, 4294901760
        %5215 = vmatmul.mubr.f32.gmra.mrb[0].mxu0 %v5214
        %v5216 = vpop.f32.mrb[0].mxu0
        %v5217 = vadd.f32 %v4952, %v5216
        %v5218 = vpop.f32.mrb[0].mxu0
        %5219 = vmatprep.mubr.f32.mxu0 0.0
        %v5220 = vand.u32 %v4752, 4294901760
        %5221 = vmatmul.mubr.f32.gmra.mrb[0].mxu0 %v5220
        %v5222 = vpop.f32.mrb[0].mxu0
        %v5223 = vadd.f32 %v4962, %v5222
        %v5224 = vpop.f32.mrb[0].mxu0
        %5225 = vmatprep.mubr.f32.mxu0 0.0
        %v5226 = vand.u32 %v4753, 4294901760
        %5227 = vmatmul.mubr.f32.gmra.mrb[0].mxu0 %v5226
        %v5228 = vpop.f32.mrb[0].mxu0
        %v5229 = vadd.f32 %v4972, %v5228
        %v5230 = vpop.f32.mrb[0].mxu0
        %5231 = vmatprep.mubr.f32.mxu0 0.0
        %v5232 = vand.u32 %v4754, 4294901760
        %5233 = vmatmul.mubr.f32.gmra.mrb[0].mxu0 %v5232
        %v5234 = vpop.f32.mrb[0].mxu0
        %v5235 = vadd.f32 %v4982, %v5234
        %v5236 = vpop.f32.mrb[0].mxu0
        %5237 = vmatprep.mubr.f32.mxu0 0.0
        %v5238 = vand.u32 %v4755, 4294901760
        %5239 = vmatmul.mubr.f32.gmra.mrb[0].mxu0 %v5238
        %v5240 = vpop.f32.mrb[0].mxu0
        %v5241 = vadd.f32 %v4992, %v5240
        %v5242 = vpop.f32.mrb[0].mxu0
        %5243 = vmatprep.mubr.f32.mxu0 0.0
        %v5244 = vand.u32 %v4756, 4294901760
        %5245 = vmatmul.mubr.f32.gmra.mrb[0].mxu0 %v5244
        %v5246 = vpop.f32.mrb[0].mxu0
        %v5247 = vadd.f32 %v5002, %v5246
        %v5248 = vpop.f32.mrb[0].mxu0
        %5249 = vmatprep.mubr.f32.mxu0 0.0
        %v5250 = vand.u32 %v4757, 4294901760
        %5251 = vmatmul.mubr.f32.gmra.mrb[0].mxu0 %v5250
        %v5252 = vpop.f32.mrb[0].mxu0
        %v5253 = vadd.f32 %v5012, %v5252
        %v5254 = vpop.f32.mrb[0].mxu0
        %5255 = vdwg.mxu0
        %5256 = vmatprep.subr.mxu0 0.0
        %v5257 = vand.u32 %v4672, 4294901760
        %v5258 = vsub.f32 %v4672, %v5257
        %5259 = vmatpush1.msra.mxu0 %v5258
        %5260 = vmatprep.subr.mxu0 0.0
        %v5261 = vand.u32 %v4673, 4294901760
        %v5262 = vsub.f32 %v4673, %v5261
        %5263 = vmatpush1.msra.mxu0 %v5262
        %5264 = vmatprep.subr.mxu0 0.0
        %v5265 = vand.u32 %v4674, 4294901760
        %v5266 = vsub.f32 %v4674, %v5265
        %5267 = vmatpush1.msra.mxu0 %v5266
        %5268 = vmatprep.subr.mxu0 0.0
        %v5269 = vand.u32 %v4675, 4294901760
        %v5270 = vsub.f32 %v4675, %v5269
        %5271 = vmatpush1.msra.mxu0 %v5270
        %5272 = vmatprep.subr.mxu0 0.0
        %v5273 = vand.u32 %v4676, 4294901760
        %v5274 = vsub.f32 %v4676, %v5273
        %5275 = vmatpush1.msra.mxu0 %v5274
        %5276 = vmatprep.subr.mxu0 0.0
        %v5277 = vand.u32 %v4677, 4294901760
        %v5278 = vsub.f32 %v4677, %v5277
        %5279 = vmatpush1.msra.mxu0 %v5278
        %5280 = vmatprep.subr.mxu0 0.0
        %v5281 = vand.u32 %v4678, 4294901760
        %v5282 = vsub.f32 %v4678, %v5281
        %5283 = vmatpush1.msra.mxu0 %v5282
        %5284 = vmatprep.subr.mxu0 0.0
        %v5285 = vand.u32 %v4679, 4294901760
        %v5286 = vsub.f32 %v4679, %v5285
        %5287 = vmatpush1.msra.mxu0 %v5286
        %5288 = vmatprep.subr.mxu0 0.0
        %v5289 = vand.u32 %v4680, 4294901760
        %v5290 = vsub.f32 %v4680, %v5289
        %5291 = vmatpush1.msra.mxu0 %v5290
        %5292 = vmatprep.subr.mxu0 0.0
        %v5293 = vand.u32 %v4681, 4294901760
        %v5294 = vsub.f32 %v4681, %v5293
        %5295 = vmatpush1.msra.mxu0 %v5294
        %5296 = vmatprep.subr.mxu0 0.0
        %v5297 = vand.u32 %v4682, 4294901760
        %v5298 = vsub.f32 %v4682, %v5297
        %5299 = vmatpush1.msra.mxu0 %v5298
        %5300 = vmatprep.subr.mxu0 0.0
        %v5301 = vand.u32 %v4683, 4294901760
        %v5302 = vsub.f32 %v4683, %v5301
        %5303 = vmatpush1.msra.mxu0 %v5302
        %5304 = vmatprep.subr.mxu0 0.0
        %v5305 = vand.u32 %v4684, 4294901760
        %v5306 = vsub.f32 %v4684, %v5305
        %5307 = vmatpush1.msra.mxu0 %v5306
        %5308 = vmatprep.subr.mxu0 0.0
        %v5309 = vand.u32 %v4685, 4294901760
        %v5310 = vsub.f32 %v4685, %v5309
        %5311 = vmatpush1.msra.mxu0 %v5310
        %5312 = vmatprep.subr.mxu0 0.0
        %v5313 = vand.u32 %v4686, 4294901760
        %v5314 = vsub.f32 %v4686, %v5313
        %5315 = vmatpush1.msra.mxu0 %v5314
        %5316 = vmatprep.subr.mxu0 0.0
        %v5317 = vand.u32 %v4687, 4294901760
        %v5318 = vsub.f32 %v4687, %v5317
        %5319 = vmatpush1.msra.mxu0 %v5318
        %5320 = vmatprep.subr.mxu0 0.0
        %5321 = vmatpush1.msra.mxu0 0.0
        %5322 = vmatprep.subr.mxu0 0.0
        %5323 = vmatpush1.msra.mxu0 0.0
        %5324 = vmatprep.subr.mxu0 0.0
        %5325 = vmatpush1.msra.mxu0 0.0
        %5326 = vmatprep.subr.mxu0 0.0
        %5327 = vmatpush1.msra.mxu0 0.0
        %5328 = vmatprep.subr.mxu0 0.0
        %5329 = vmatpush1.msra.mxu0 0.0
        %5330 = vmatprep.subr.mxu0 0.0
        %5331 = vmatpush1.msra.mxu0 0.0
        %5332 = vmatprep.subr.mxu0 0.0
        %5333 = vmatpush1.msra.mxu0 0.0
        %5334 = vmatprep.subr.mxu0 0.0
        %5335 = vmatpush1.msra.mxu0 0.0
        %5336 = vmatprep.subr.mxu0 0.0
        %5337 = vmatpush1.msra.mxu0 0.0
        %5338 = vmatprep.subr.mxu0 0.0
        %5339 = vmatpush1.msra.mxu0 0.0
        %5340 = vmatprep.subr.mxu0 0.0
        %5341 = vmatpush1.msra.mxu0 0.0
        %5342 = vmatprep.subr.mxu0 0.0
        %5343 = vmatpush1.msra.mxu0 0.0
        %5344 = vmatprep.subr.mxu0 0.0
        %5345 = vmatpush1.msra.mxu0 0.0
        %5346 = vmatprep.subr.mxu0 0.0
        %5347 = vmatpush1.msra.mxu0 0.0
        %5348 = vmatprep.subr.mxu0 0.0
        %5349 = vmatpush1.msra.mxu0 0.0
        %5350 = vmatprep.subr.mxu0 0.0
        %5351 = vmatpush1.msra.mxu0 0.0
        %5352 = vmatprep.mubr.f32.mxu0 0.0
        %v5353 = vand.u32 %v4742, 4294901760
        %v5354 = vsub.f32 %v4742, %v5353
        %5355 = vmatmul.mubr.f32.gmra.mrb[0].mxu0 %v5354
        %v5356 = vpop.f32.mrb[0].mxu0
        %v5357 = vadd.f32 %v5163, %v5356
        %v5358 = vpop.f32.mrb[0].mxu0
        %5359 = vmatprep.mubr.f32.mxu0 0.0
        %v5360 = vand.u32 %v4743, 4294901760
        %v5361 = vsub.f32 %v4743, %v5360
        %5362 = vmatmul.mubr.f32.gmra.mrb[0].mxu0 %v5361
        %v5363 = vpop.f32.mrb[0].mxu0
        %v5364 = vadd.f32 %v5169, %v5363
        %v5365 = vpop.f32.mrb[0].mxu0
        %5366 = vmatprep.mubr.f32.mxu0 0.0
        %v5367 = vand.u32 %v4744, 4294901760
        %v5368 = vsub.f32 %v4744, %v5367
        %5369 = vmatmul.mubr.f32.gmra.mrb[0].mxu0 %v5368
        %v5370 = vpop.f32.mrb[0].mxu0
        %v5371 = vadd.f32 %v5175, %v5370
        %v5372 = vpop.f32.mrb[0].mxu0
        %5373 = vmatprep.mubr.f32.mxu0 0.0
        %v5374 = vand.u32 %v4745, 4294901760
        %v5375 = vsub.f32 %v4745, %v5374
        %5376 = vmatmul.mubr.f32.gmra.mrb[0].mxu0 %v5375
        %v5377 = vpop.f32.mrb[0].mxu0
        %v5378 = vadd.f32 %v5181, %v5377
        %v5379 = vpop.f32.mrb[0].mxu0
        %5380 = vmatprep.mubr.f32.mxu0 0.0
        %v5381 = vand.u32 %v4746, 4294901760
        %v5382 = vsub.f32 %v4746, %v5381
        %5383 = vmatmul.mubr.f32.gmra.mrb[0].mxu0 %v5382
        %v5384 = vpop.f32.mrb[0].mxu0
        %v5385 = vadd.f32 %v5187, %v5384
        %v5386 = vpop.f32.mrb[0].mxu0
        %5387 = vmatprep.mubr.f32.mxu0 0.0
        %v5388 = vand.u32 %v4747, 4294901760
        %v5389 = vsub.f32 %v4747, %v5388
        %5390 = vmatmul.mubr.f32.gmra.mrb[0].mxu0 %v5389
        %v5391 = vpop.f32.mrb[0].mxu0
        %v5392 = vadd.f32 %v5193, %v5391
        %v5393 = vpop.f32.mrb[0].mxu0
        %5394 = vmatprep.mubr.f32.mxu0 0.0
        %v5395 = vand.u32 %v4748, 4294901760
        %v5396 = vsub.f32 %v4748, %v5395
        %5397 = vmatmul.mubr.f32.gmra.mrb[0].mxu0 %v5396
        %v5398 = vpop.f32.mrb[0].mxu0
        %v5399 = vadd.f32 %v5199, %v5398
        %v5400 = vpop.f32.mrb[0].mxu0
        %5401 = vmatprep.mubr.f32.mxu0 0.0
        %v5402 = vand.u32 %v4749, 4294901760
        %v5403 = vsub.f32 %v4749, %v5402
        %5404 = vmatmul.mubr.f32.gmra.mrb[0].mxu0 %v5403
        %v5405 = vpop.f32.mrb[0].mxu0
        %v5406 = vadd.f32 %v5205, %v5405
        %v5407 = vpop.f32.mrb[0].mxu0
        %5408 = vmatprep.mubr.f32.mxu0 0.0
        %v5409 = vand.u32 %v4750, 4294901760
        %v5410 = vsub.f32 %v4750, %v5409
        %5411 = vmatmul.mubr.f32.gmra.mrb[0].mxu0 %v5410
        %v5412 = vpop.f32.mrb[0].mxu0
        %v5413 = vadd.f32 %v5211, %v5412
        %v5414 = vpop.f32.mrb[0].mxu0
        %5415 = vmatprep.mubr.f32.mxu0 0.0
        %v5416 = vand.u32 %v4751, 4294901760
        %v5417 = vsub.f32 %v4751, %v5416
        %5418 = vmatmul.mubr.f32.gmra.mrb[0].mxu0 %v5417
        %v5419 = vpop.f32.mrb[0].mxu0
        %v5420 = vadd.f32 %v5217, %v5419
        %v5421 = vpop.f32.mrb[0].mxu0
        %5422 = vmatprep.mubr.f32.mxu0 0.0
        %v5423 = vand.u32 %v4752, 4294901760
        %v5424 = vsub.f32 %v4752, %v5423
        %5425 = vmatmul.mubr.f32.gmra.mrb[0].mxu0 %v5424
        %v5426 = vpop.f32.mrb[0].mxu0
        %v5427 = vadd.f32 %v5223, %v5426
        %v5428 = vpop.f32.mrb[0].mxu0
        %5429 = vmatprep.mubr.f32.mxu0 0.0
        %v5430 = vand.u32 %v4753, 4294901760
        %v5431 = vsub.f32 %v4753, %v5430
        %5432 = vmatmul.mubr.f32.gmra.mrb[0].mxu0 %v5431
        %v5433 = vpop.f32.mrb[0].mxu0
        %v5434 = vadd.f32 %v5229, %v5433
        %v5435 = vpop.f32.mrb[0].mxu0
        %5436 = vmatprep.mubr.f32.mxu0 0.0
        %v5437 = vand.u32 %v4754, 4294901760
        %v5438 = vsub.f32 %v4754, %v5437
        %5439 = vmatmul.mubr.f32.gmra.mrb[0].mxu0 %v5438
        %v5440 = vpop.f32.mrb[0].mxu0
        %v5441 = vadd.f32 %v5235, %v5440
        %v5442 = vpop.f32.mrb[0].mxu0
        %5443 = vmatprep.mubr.f32.mxu0 0.0
        %v5444 = vand.u32 %v4755, 4294901760
        %v5445 = vsub.f32 %v4755, %v5444
        %5446 = vmatmul.mubr.f32.gmra.mrb[0].mxu0 %v5445
        %v5447 = vpop.f32.mrb[0].mxu0
        %v5448 = vadd.f32 %v5241, %v5447
        %v5449 = vpop.f32.mrb[0].mxu0
        %5450 = vmatprep.mubr.f32.mxu0 0.0
        %v5451 = vand.u32 %v4756, 4294901760
        %v5452 = vsub.f32 %v4756, %v5451
        %5453 = vmatmul.mubr.f32.gmra.mrb[0].mxu0 %v5452
        %v5454 = vpop.f32.mrb[0].mxu0
        %v5455 = vadd.f32 %v5247, %v5454
        %v5456 = vpop.f32.mrb[0].mxu0
        %5457 = vmatprep.mubr.f32.mxu0 0.0
        %v5458 = vand.u32 %v4757, 4294901760
        %v5459 = vsub.f32 %v4757, %v5458
        %5460 = vmatmul.mubr.f32.gmra.mrb[0].mxu0 %v5459
        %v5461 = vpop.f32.mrb[0].mxu0
        %v5462 = vadd.f32 %v5253, %v5461
        %v5463 = vpop.f32.mrb[0].mxu0
        %5464 = vdwg.mxu0
        %5465 = vmatprep.subr.mxu0 0.0
        %v5466 = vand.u32 %v4672, 4294901760
        %5467 = vmatpush1.msra.mxu0 %v5466
        %5468 = vmatprep.subr.mxu0 0.0
        %v5469 = vand.u32 %v4673, 4294901760
        %5470 = vmatpush1.msra.mxu0 %v5469
        %5471 = vmatprep.subr.mxu0 0.0
        %v5472 = vand.u32 %v4674, 4294901760
        %5473 = vmatpush1.msra.mxu0 %v5472
        %5474 = vmatprep.subr.mxu0 0.0
        %v5475 = vand.u32 %v4675, 4294901760
        %5476 = vmatpush1.msra.mxu0 %v5475
        %5477 = vmatprep.subr.mxu0 0.0
        %v5478 = vand.u32 %v4676, 4294901760
        %5479 = vmatpush1.msra.mxu0 %v5478
        %5480 = vmatprep.subr.mxu0 0.0
        %v5481 = vand.u32 %v4677, 4294901760
        %5482 = vmatpush1.msra.mxu0 %v5481
        %5483 = vmatprep.subr.mxu0 0.0
        %v5484 = vand.u32 %v4678, 4294901760
        %5485 = vmatpush1.msra.mxu0 %v5484
        %5486 = vmatprep.subr.mxu0 0.0
        %v5487 = vand.u32 %v4679, 4294901760
        %5488 = vmatpush1.msra.mxu0 %v5487
        %5489 = vmatprep.subr.mxu0 0.0
        %v5490 = vand.u32 %v4680, 4294901760
        %5491 = vmatpush1.msra.mxu0 %v5490
        %5492 = vmatprep.subr.mxu0 0.0
        %v5493 = vand.u32 %v4681, 4294901760
        %5494 = vmatpush1.msra.mxu0 %v5493
        %5495 = vmatprep.subr.mxu0 0.0
        %v5496 = vand.u32 %v4682, 4294901760
        %5497 = vmatpush1.msra.mxu0 %v5496
        %5498 = vmatprep.subr.mxu0 0.0
        %v5499 = vand.u32 %v4683, 4294901760
        %5500 = vmatpush1.msra.mxu0 %v5499
        %5501 = vmatprep.subr.mxu0 0.0
        %v5502 = vand.u32 %v4684, 4294901760
        %5503 = vmatpush1.msra.mxu0 %v5502
        %5504 = vmatprep.subr.mxu0 0.0
        %v5505 = vand.u32 %v4685, 4294901760
        %5506 = vmatpush1.msra.mxu0 %v5505
        %5507 = vmatprep.subr.mxu0 0.0
        %v5508 = vand.u32 %v4686, 4294901760
        %5509 = vmatpush1.msra.mxu0 %v5508
        %5510 = vmatprep.subr.mxu0 0.0
        %v5511 = vand.u32 %v4687, 4294901760
        %5512 = vmatpush1.msra.mxu0 %v5511
        %5513 = vmatprep.subr.mxu0 0.0
        %5514 = vmatpush1.msra.mxu0 0.0
        %5515 = vmatprep.subr.mxu0 0.0
        %5516 = vmatpush1.msra.mxu0 0.0
        %5517 = vmatprep.subr.mxu0 0.0
        %5518 = vmatpush1.msra.mxu0 0.0
        %5519 = vmatprep.subr.mxu0 0.0
        %5520 = vmatpush1.msra.mxu0 0.0
        %5521 = vmatprep.subr.mxu0 0.0
        %5522 = vmatpush1.msra.mxu0 0.0
        %5523 = vmatprep.subr.mxu0 0.0
        %5524 = vmatpush1.msra.mxu0 0.0
        %5525 = vmatprep.subr.mxu0 0.0
        %5526 = vmatpush1.msra.mxu0 0.0
        %5527 = vmatprep.subr.mxu0 0.0
        %5528 = vmatpush1.msra.mxu0 0.0
        %5529 = vmatprep.subr.mxu0 0.0
        %5530 = vmatpush1.msra.mxu0 0.0
        %5531 = vmatprep.subr.mxu0 0.0
        %5532 = vmatpush1.msra.mxu0 0.0
        %5533 = vmatprep.subr.mxu0 0.0
        %5534 = vmatpush1.msra.mxu0 0.0
        %5535 = vmatprep.subr.mxu0 0.0
        %5536 = vmatpush1.msra.mxu0 0.0
        %5537 = vmatprep.subr.mxu0 0.0
        %5538 = vmatpush1.msra.mxu0 0.0
        %5539 = vmatprep.subr.mxu0 0.0
        %5540 = vmatpush1.msra.mxu0 0.0
        %5541 = vmatprep.subr.mxu0 0.0
        %5542 = vmatpush1.msra.mxu0 0.0
        %5543 = vmatprep.subr.mxu0 0.0
        %5544 = vmatpush1.msra.mxu0 0.0
        %5545 = vmatprep.mubr.f32.mxu0 0.0
        %v5546 = vand.u32 %v4742, 4294901760
        %v5547 = vsub.f32 %v4742, %v5546
        %v5548 = vand.u32 %v5547, 4294901760
        %5549 = vmatmul.mubr.f32.gmra.mrb[0].mxu0 %v5548
        %v5550 = vpop.f32.mrb[0].mxu0
        %v5551 = vadd.f32 %v5357, %v5550
        %v5552 = vpop.f32.mrb[0].mxu0
        %5553 = vmatprep.mubr.f32.mxu0 0.0
        %v5554 = vand.u32 %v4743, 4294901760
        %v5555 = vsub.f32 %v4743, %v5554
        %v5556 = vand.u32 %v5555, 4294901760
        %5557 = vmatmul.mubr.f32.gmra.mrb[0].mxu0 %v5556
        %v5558 = vpop.f32.mrb[0].mxu0
        %v5559 = vadd.f32 %v5364, %v5558
        %v5560 = vpop.f32.mrb[0].mxu0
        %5561 = vmatprep.mubr.f32.mxu0 0.0
        %v5562 = vand.u32 %v4744, 4294901760
        %v5563 = vsub.f32 %v4744, %v5562
        %v5564 = vand.u32 %v5563, 4294901760
        %5565 = vmatmul.mubr.f32.gmra.mrb[0].mxu0 %v5564
        %v5566 = vpop.f32.mrb[0].mxu0
        %v5567 = vadd.f32 %v5371, %v5566
        %v5568 = vpop.f32.mrb[0].mxu0
        %5569 = vmatprep.mubr.f32.mxu0 0.0
        %v5570 = vand.u32 %v4745, 4294901760
        %v5571 = vsub.f32 %v4745, %v5570
        %v5572 = vand.u32 %v5571, 4294901760
        %5573 = vmatmul.mubr.f32.gmra.mrb[0].mxu0 %v5572
        %v5574 = vpop.f32.mrb[0].mxu0
        %v5575 = vadd.f32 %v5378, %v5574
        %v5576 = vpop.f32.mrb[0].mxu0
        %5577 = vmatprep.mubr.f32.mxu0 0.0
        %v5578 = vand.u32 %v4746, 4294901760
        %v5579 = vsub.f32 %v4746, %v5578
        %v5580 = vand.u32 %v5579, 4294901760
        %5581 = vmatmul.mubr.f32.gmra.mrb[0].mxu0 %v5580
        %v5582 = vpop.f32.mrb[0].mxu0
        %v5583 = vadd.f32 %v5385, %v5582
        %v5584 = vpop.f32.mrb[0].mxu0
        %5585 = vmatprep.mubr.f32.mxu0 0.0
        %v5586 = vand.u32 %v4747, 4294901760
        %v5587 = vsub.f32 %v4747, %v5586
        %v5588 = vand.u32 %v5587, 4294901760
        %5589 = vmatmul.mubr.f32.gmra.mrb[0].mxu0 %v5588
        %v5590 = vpop.f32.mrb[0].mxu0
        %v5591 = vadd.f32 %v5392, %v5590
        %v5592 = vpop.f32.mrb[0].mxu0
        %5593 = vmatprep.mubr.f32.mxu0 0.0
        %v5594 = vand.u32 %v4748, 4294901760
        %v5595 = vsub.f32 %v4748, %v5594
        %v5596 = vand.u32 %v5595, 4294901760
        %5597 = vmatmul.mubr.f32.gmra.mrb[0].mxu0 %v5596
        %v5598 = vpop.f32.mrb[0].mxu0
        %v5599 = vadd.f32 %v5399, %v5598
        %v5600 = vpop.f32.mrb[0].mxu0
        %5601 = vmatprep.mubr.f32.mxu0 0.0
        %v5602 = vand.u32 %v4749, 4294901760
        %v5603 = vsub.f32 %v4749, %v5602
        %v5604 = vand.u32 %v5603, 4294901760
        %5605 = vmatmul.mubr.f32.gmra.mrb[0].mxu0 %v5604
        %v5606 = vpop.f32.mrb[0].mxu0
        %v5607 = vadd.f32 %v5406, %v5606
        %v5608 = vpop.f32.mrb[0].mxu0
        %5609 = vmatprep.mubr.f32.mxu0 0.0
        %v5610 = vand.u32 %v4750, 4294901760
        %v5611 = vsub.f32 %v4750, %v5610
        %v5612 = vand.u32 %v5611, 4294901760
        %5613 = vmatmul.mubr.f32.gmra.mrb[0].mxu0 %v5612
        %v5614 = vpop.f32.mrb[0].mxu0
        %v5615 = vadd.f32 %v5413, %v5614
        %v5616 = vpop.f32.mrb[0].mxu0
        %5617 = vmatprep.mubr.f32.mxu0 0.0
        %v5618 = vand.u32 %v4751, 4294901760
        %v5619 = vsub.f32 %v4751, %v5618
        %v5620 = vand.u32 %v5619, 4294901760
        %5621 = vmatmul.mubr.f32.gmra.mrb[0].mxu0 %v5620
        %v5622 = vpop.f32.mrb[0].mxu0
        %v5623 = vadd.f32 %v5420, %v5622
        %v5624 = vpop.f32.mrb[0].mxu0
        %5625 = vmatprep.mubr.f32.mxu0 0.0
        %v5626 = vand.u32 %v4752, 4294901760
        %v5627 = vsub.f32 %v4752, %v5626
        %v5628 = vand.u32 %v5627, 4294901760
        %5629 = vmatmul.mubr.f32.gmra.mrb[0].mxu0 %v5628
        %v5630 = vpop.f32.mrb[0].mxu0
        %v5631 = vadd.f32 %v5427, %v5630
        %v5632 = vpop.f32.mrb[0].mxu0
        %5633 = vmatprep.mubr.f32.mxu0 0.0
        %v5634 = vand.u32 %v4753, 4294901760
        %v5635 = vsub.f32 %v4753, %v5634
        %v5636 = vand.u32 %v5635, 4294901760
        %5637 = vmatmul.mubr.f32.gmra.mrb[0].mxu0 %v5636
        %v5638 = vpop.f32.mrb[0].mxu0
        %v5639 = vadd.f32 %v5434, %v5638
        %v5640 = vpop.f32.mrb[0].mxu0
        %5641 = vmatprep.mubr.f32.mxu0 0.0
        %v5642 = vand.u32 %v4754, 4294901760
        %v5643 = vsub.f32 %v4754, %v5642
        %v5644 = vand.u32 %v5643, 4294901760
        %5645 = vmatmul.mubr.f32.gmra.mrb[0].mxu0 %v5644
        %v5646 = vpop.f32.mrb[0].mxu0
        %v5647 = vadd.f32 %v5441, %v5646
        %v5648 = vpop.f32.mrb[0].mxu0
        %5649 = vmatprep.mubr.f32.mxu0 0.0
        %v5650 = vand.u32 %v4755, 4294901760
        %v5651 = vsub.f32 %v4755, %v5650
        %v5652 = vand.u32 %v5651, 4294901760
        %5653 = vmatmul.mubr.f32.gmra.mrb[0].mxu0 %v5652
        %v5654 = vpop.f32.mrb[0].mxu0
        %v5655 = vadd.f32 %v5448, %v5654
        %v5656 = vpop.f32.mrb[0].mxu0
        %5657 = vmatprep.mubr.f32.mxu0 0.0
        %v5658 = vand.u32 %v4756, 4294901760
        %v5659 = vsub.f32 %v4756, %v5658
        %v5660 = vand.u32 %v5659, 4294901760
        %5661 = vmatmul.mubr.f32.gmra.mrb[0].mxu0 %v5660
        %v5662 = vpop.f32.mrb[0].mxu0
        %v5663 = vadd.f32 %v5455, %v5662
        %v5664 = vpop.f32.mrb[0].mxu0
        %5665 = vmatprep.mubr.f32.mxu0 0.0
        %v5666 = vand.u32 %v4757, 4294901760
        %v5667 = vsub.f32 %v4757, %v5666
        %v5668 = vand.u32 %v5667, 4294901760
        %5669 = vmatmul.mubr.f32.gmra.mrb[0].mxu0 %v5668
        %v5670 = vpop.f32.mrb[0].mxu0
        %v5671 = vadd.f32 %v5462, %v5670
        %v5672 = vpop.f32.mrb[0].mxu0
        %5673 = vdwg.mxu0
        %5674 = vmatprep.subr.mxu0 0.0
        %v5675 = vand.u32 %v4672, 4294901760
        %v5676 = vsub.f32 %v4672, %v5675
        %v5677 = vand.u32 %v5676, 4294901760
        %5678 = vmatpush1.msra.mxu0 %v5677
        %5679 = vmatprep.subr.mxu0 0.0
        %v5680 = vand.u32 %v4673, 4294901760
        %v5681 = vsub.f32 %v4673, %v5680
        %v5682 = vand.u32 %v5681, 4294901760
        %5683 = vmatpush1.msra.mxu0 %v5682
        %5684 = vmatprep.subr.mxu0 0.0
        %v5685 = vand.u32 %v4674, 4294901760
        %v5686 = vsub.f32 %v4674, %v5685
        %v5687 = vand.u32 %v5686, 4294901760
        %5688 = vmatpush1.msra.mxu0 %v5687
        %5689 = vmatprep.subr.mxu0 0.0
        %v5690 = vand.u32 %v4675, 4294901760
        %v5691 = vsub.f32 %v4675, %v5690
        %v5692 = vand.u32 %v5691, 4294901760
        %5693 = vmatpush1.msra.mxu0 %v5692
        %5694 = vmatprep.subr.mxu0 0.0
        %v5695 = vand.u32 %v4676, 4294901760
        %v5696 = vsub.f32 %v4676, %v5695
        %v5697 = vand.u32 %v5696, 4294901760
        %5698 = vmatpush1.msra.mxu0 %v5697
        %5699 = vmatprep.subr.mxu0 0.0
        %v5700 = vand.u32 %v4677, 4294901760
        %v5701 = vsub.f32 %v4677, %v5700
        %v5702 = vand.u32 %v5701, 4294901760
        %5703 = vmatpush1.msra.mxu0 %v5702
        %5704 = vmatprep.subr.mxu0 0.0
        %v5705 = vand.u32 %v4678, 4294901760
        %v5706 = vsub.f32 %v4678, %v5705
        %v5707 = vand.u32 %v5706, 4294901760
        %5708 = vmatpush1.msra.mxu0 %v5707
        %5709 = vmatprep.subr.mxu0 0.0
        %v5710 = vand.u32 %v4679, 4294901760
        %v5711 = vsub.f32 %v4679, %v5710
        %v5712 = vand.u32 %v5711, 4294901760
        %5713 = vmatpush1.msra.mxu0 %v5712
        %5714 = vmatprep.subr.mxu0 0.0
        %v5715 = vand.u32 %v4680, 4294901760
        %v5716 = vsub.f32 %v4680, %v5715
        %v5717 = vand.u32 %v5716, 4294901760
        %5718 = vmatpush1.msra.mxu0 %v5717
        %5719 = vmatprep.subr.mxu0 0.0
        %v5720 = vand.u32 %v4681, 4294901760
        %v5721 = vsub.f32 %v4681, %v5720
        %v5722 = vand.u32 %v5721, 4294901760
        %5723 = vmatpush1.msra.mxu0 %v5722
        %5724 = vmatprep.subr.mxu0 0.0
        %v5725 = vand.u32 %v4682, 4294901760
        %v5726 = vsub.f32 %v4682, %v5725
        %v5727 = vand.u32 %v5726, 4294901760
        %5728 = vmatpush1.msra.mxu0 %v5727
        %5729 = vmatprep.subr.mxu0 0.0
        %v5730 = vand.u32 %v4683, 4294901760
        %v5731 = vsub.f32 %v4683, %v5730
        %v5732 = vand.u32 %v5731, 4294901760
        %5733 = vmatpush1.msra.mxu0 %v5732
        %5734 = vmatprep.subr.mxu0 0.0
        %v5735 = vand.u32 %v4684, 4294901760
        %v5736 = vsub.f32 %v4684, %v5735
        %v5737 = vand.u32 %v5736, 4294901760
        %5738 = vmatpush1.msra.mxu0 %v5737
        %5739 = vmatprep.subr.mxu0 0.0
        %v5740 = vand.u32 %v4685, 4294901760
        %v5741 = vsub.f32 %v4685, %v5740
        %v5742 = vand.u32 %v5741, 4294901760
        %5743 = vmatpush1.msra.mxu0 %v5742
        %5744 = vmatprep.subr.mxu0 0.0
        %v5745 = vand.u32 %v4686, 4294901760
        %v5746 = vsub.f32 %v4686, %v5745
        %v5747 = vand.u32 %v5746, 4294901760
        %5748 = vmatpush1.msra.mxu0 %v5747
        %5749 = vmatprep.subr.mxu0 0.0
        %v5750 = vand.u32 %v4687, 4294901760
        %v5751 = vsub.f32 %v4687, %v5750
        %v5752 = vand.u32 %v5751, 4294901760
        %5753 = vmatpush1.msra.mxu0 %v5752
        %5754 = vmatprep.subr.mxu0 0.0
        %5755 = vmatpush1.msra.mxu0 0.0
        %5756 = vmatprep.subr.mxu0 0.0
        %5757 = vmatpush1.msra.mxu0 0.0
        %5758 = vmatprep.subr.mxu0 0.0
        %5759 = vmatpush1.msra.mxu0 0.0
        %5760 = vmatprep.subr.mxu0 0.0
        %5761 = vmatpush1.msra.mxu0 0.0
        %5762 = vmatprep.subr.mxu0 0.0
        %5763 = vmatpush1.msra.mxu0 0.0
        %5764 = vmatprep.subr.mxu0 0.0
        %5765 = vmatpush1.msra.mxu0 0.0
        %5766 = vmatprep.subr.mxu0 0.0
        %5767 = vmatpush1.msra.mxu0 0.0
        %5768 = vmatprep.subr.mxu0 0.0
        %5769 = vmatpush1.msra.mxu0 0.0
        %5770 = vmatprep.subr.mxu0 0.0
        %5771 = vmatpush1.msra.mxu0 0.0
        %5772 = vmatprep.subr.mxu0 0.0
        %5773 = vmatpush1.msra.mxu0 0.0
        %5774 = vmatprep.subr.mxu0 0.0
        %5775 = vmatpush1.msra.mxu0 0.0
        %5776 = vmatprep.subr.mxu0 0.0
        %5777 = vmatpush1.msra.mxu0 0.0
        %5778 = vmatprep.subr.mxu0 0.0
        %5779 = vmatpush1.msra.mxu0 0.0
        %5780 = vmatprep.subr.mxu0 0.0
        %5781 = vmatpush1.msra.mxu0 0.0
        %5782 = vmatprep.subr.mxu0 0.0
        %5783 = vmatpush1.msra.mxu0 0.0
        %5784 = vmatprep.subr.mxu0 0.0
        %5785 = vmatpush1.msra.mxu0 0.0
        %5786 = vmatprep.mubr.f32.mxu0 0.0
        %v5787 = vand.u32 %v4742, 4294901760
        %5788 = vmatmul.mubr.f32.gmra.mrb[0].mxu0 %v5787
        %v5789 = vpop.f32.mrb[0].mxu0
        %v5790 = vadd.f32 %v5551, %v5789
        %v5791 = vpop.f32.mrb[0].mxu0
        %5792 = vmatprep.mubr.f32.mxu0 0.0
        %v5793 = vand.u32 %v4743, 4294901760
        %5794 = vmatmul.mubr.f32.gmra.mrb[0].mxu0 %v5793
        %v5795 = vpop.f32.mrb[0].mxu0
        %v5796 = vadd.f32 %v5559, %v5795
        %v5797 = vpop.f32.mrb[0].mxu0
        %5798 = vmatprep.mubr.f32.mxu0 0.0
        %v5799 = vand.u32 %v4744, 4294901760
        %5800 = vmatmul.mubr.f32.gmra.mrb[0].mxu0 %v5799
        %v5801 = vpop.f32.mrb[0].mxu0
        %v5802 = vadd.f32 %v5567, %v5801
        %v5803 = vpop.f32.mrb[0].mxu0
        %5804 = vmatprep.mubr.f32.mxu0 0.0
        %v5805 = vand.u32 %v4745, 4294901760
        %5806 = vmatmul.mubr.f32.gmra.mrb[0].mxu0 %v5805
        %v5807 = vpop.f32.mrb[0].mxu0
        %v5808 = vadd.f32 %v5575, %v5807
        %v5809 = vpop.f32.mrb[0].mxu0
        %5810 = vmatprep.mubr.f32.mxu0 0.0
        %v5811 = vand.u32 %v4746, 4294901760
        %5812 = vmatmul.mubr.f32.gmra.mrb[0].mxu0 %v5811
        %v5813 = vpop.f32.mrb[0].mxu0
        %v5814 = vadd.f32 %v5583, %v5813
        %v5815 = vpop.f32.mrb[0].mxu0
        %5816 = vmatprep.mubr.f32.mxu0 0.0
        %v5817 = vand.u32 %v4747, 4294901760
        %5818 = vmatmul.mubr.f32.gmra.mrb[0].mxu0 %v5817
        %v5819 = vpop.f32.mrb[0].mxu0
        %v5820 = vadd.f32 %v5591, %v5819
        %v5821 = vpop.f32.mrb[0].mxu0
        %5822 = vmatprep.mubr.f32.mxu0 0.0
        %v5823 = vand.u32 %v4748, 4294901760
        %5824 = vmatmul.mubr.f32.gmra.mrb[0].mxu0 %v5823
        %v5825 = vpop.f32.mrb[0].mxu0
        %v5826 = vadd.f32 %v5599, %v5825
        %v5827 = vpop.f32.mrb[0].mxu0
        %5828 = vmatprep.mubr.f32.mxu0 0.0
        %v5829 = vand.u32 %v4749, 4294901760
        %5830 = vmatmul.mubr.f32.gmra.mrb[0].mxu0 %v5829
        %v5831 = vpop.f32.mrb[0].mxu0
        %v5832 = vadd.f32 %v5607, %v5831
        %v5833 = vpop.f32.mrb[0].mxu0
        %5834 = vmatprep.mubr.f32.mxu0 0.0
        %v5835 = vand.u32 %v4750, 4294901760
        %5836 = vmatmul.mubr.f32.gmra.mrb[0].mxu0 %v5835
        %v5837 = vpop.f32.mrb[0].mxu0
        %v5838 = vadd.f32 %v5615, %v5837
        %v5839 = vpop.f32.mrb[0].mxu0
        %5840 = vmatprep.mubr.f32.mxu0 0.0
        %v5841 = vand.u32 %v4751, 4294901760
        %5842 = vmatmul.mubr.f32.gmra.mrb[0].mxu0 %v5841
        %v5843 = vpop.f32.mrb[0].mxu0
        %v5844 = vadd.f32 %v5623, %v5843
        %v5845 = vpop.f32.mrb[0].mxu0
        %5846 = vmatprep.mubr.f32.mxu0 0.0
        %v5847 = vand.u32 %v4752, 4294901760
        %5848 = vmatmul.mubr.f32.gmra.mrb[0].mxu0 %v5847
        %v5849 = vpop.f32.mrb[0].mxu0
        %v5850 = vadd.f32 %v5631, %v5849
        %v5851 = vpop.f32.mrb[0].mxu0
        %5852 = vmatprep.mubr.f32.mxu0 0.0
        %v5853 = vand.u32 %v4753, 4294901760
        %5854 = vmatmul.mubr.f32.gmra.mrb[0].mxu0 %v5853
        %v5855 = vpop.f32.mrb[0].mxu0
        %v5856 = vadd.f32 %v5639, %v5855
        %v5857 = vpop.f32.mrb[0].mxu0
        %5858 = vmatprep.mubr.f32.mxu0 0.0
        %v5859 = vand.u32 %v4754, 4294901760
        %5860 = vmatmul.mubr.f32.gmra.mrb[0].mxu0 %v5859
        %v5861 = vpop.f32.mrb[0].mxu0
        %v5862 = vadd.f32 %v5647, %v5861
        %v5863 = vpop.f32.mrb[0].mxu0
        %5864 = vmatprep.mubr.f32.mxu0 0.0
        %v5865 = vand.u32 %v4755, 4294901760
        %5866 = vmatmul.mubr.f32.gmra.mrb[0].mxu0 %v5865
        %v5867 = vpop.f32.mrb[0].mxu0
        %v5868 = vadd.f32 %v5655, %v5867
        %v5869 = vpop.f32.mrb[0].mxu0
        %5870 = vmatprep.mubr.f32.mxu0 0.0
        %v5871 = vand.u32 %v4756, 4294901760
        %5872 = vmatmul.mubr.f32.gmra.mrb[0].mxu0 %v5871
        %v5873 = vpop.f32.mrb[0].mxu0
        %v5874 = vadd.f32 %v5663, %v5873
        %v5875 = vpop.f32.mrb[0].mxu0
        %5876 = vmatprep.mubr.f32.mxu0 0.0
        %v5877 = vand.u32 %v4757, 4294901760
        %5878 = vmatmul.mubr.f32.gmra.mrb[0].mxu0 %v5877
        %v5879 = vpop.f32.mrb[0].mxu0
        %v5880 = vadd.f32 %v5671, %v5879
        %v5881 = vpop.f32.mrb[0].mxu0
        %5882 = vdwg.mxu0
        %5883 = vmatprep.subr.mxu0 0.0
        %v5884 = vand.u32 %v4672, 4294901760
        %5885 = vmatpush1.msra.mxu0 %v5884
        %5886 = vmatprep.subr.mxu0 0.0
        %v5887 = vand.u32 %v4673, 4294901760
        %5888 = vmatpush1.msra.mxu0 %v5887
        %5889 = vmatprep.subr.mxu0 0.0
        %v5890 = vand.u32 %v4674, 4294901760
        %5891 = vmatpush1.msra.mxu0 %v5890
        %5892 = vmatprep.subr.mxu0 0.0
        %v5893 = vand.u32 %v4675, 4294901760
        %5894 = vmatpush1.msra.mxu0 %v5893
        %5895 = vmatprep.subr.mxu0 0.0
        %v5896 = vand.u32 %v4676, 4294901760
        %5897 = vmatpush1.msra.mxu0 %v5896
        %5898 = vmatprep.subr.mxu0 0.0
        %v5899 = vand.u32 %v4677, 4294901760
        %5900 = vmatpush1.msra.mxu0 %v5899
        %5901 = vmatprep.subr.mxu0 0.0
        %v5902 = vand.u32 %v4678, 4294901760
        %5903 = vmatpush1.msra.mxu0 %v5902
        %5904 = vmatprep.subr.mxu0 0.0
        %v5905 = vand.u32 %v4679, 4294901760
        %5906 = vmatpush1.msra.mxu0 %v5905
        %5907 = vmatprep.subr.mxu0 0.0
        %v5908 = vand.u32 %v4680, 4294901760
        %5909 = vmatpush1.msra.mxu0 %v5908
        %5910 = vmatprep.subr.mxu0 0.0
        %v5911 = vand.u32 %v4681, 4294901760
        %5912 = vmatpush1.msra.mxu0 %v5911
        %5913 = vmatprep.subr.mxu0 0.0
        %v5914 = vand.u32 %v4682, 4294901760
        %5915 = vmatpush1.msra.mxu0 %v5914
        %5916 = vmatprep.subr.mxu0 0.0
        %v5917 = vand.u32 %v4683, 4294901760
        %5918 = vmatpush1.msra.mxu0 %v5917
        %5919 = vmatprep.subr.mxu0 0.0
        %v5920 = vand.u32 %v4684, 4294901760
        %5921 = vmatpush1.msra.mxu0 %v5920
        %5922 = vmatprep.subr.mxu0 0.0
        %v5923 = vand.u32 %v4685, 4294901760
        %5924 = vmatpush1.msra.mxu0 %v5923
        %5925 = vmatprep.subr.mxu0 0.0
        %v5926 = vand.u32 %v4686, 4294901760
        %5927 = vmatpush1.msra.mxu0 %v5926
        %5928 = vmatprep.subr.mxu0 0.0
        %v5929 = vand.u32 %v4687, 4294901760
        %5930 = vmatpush1.msra.mxu0 %v5929
        %5931 = vmatprep.subr.mxu0 0.0
        %5932 = vmatpush1.msra.mxu0 0.0
        %5933 = vmatprep.subr.mxu0 0.0
        %5934 = vmatpush1.msra.mxu0 0.0
        %5935 = vmatprep.subr.mxu0 0.0
        %5936 = vmatpush1.msra.mxu0 0.0
        %5937 = vmatprep.subr.mxu0 0.0
        %5938 = vmatpush1.msra.mxu0 0.0
        %5939 = vmatprep.subr.mxu0 0.0
        %5940 = vmatpush1.msra.mxu0 0.0
        %5941 = vmatprep.subr.mxu0 0.0
        %5942 = vmatpush1.msra.mxu0 0.0
        %5943 = vmatprep.subr.mxu0 0.0
        %5944 = vmatpush1.msra.mxu0 0.0
        %5945 = vmatprep.subr.mxu0 0.0
        %5946 = vmatpush1.msra.mxu0 0.0
        %5947 = vmatprep.subr.mxu0 0.0
        %5948 = vmatpush1.msra.mxu0 0.0
        %5949 = vmatprep.subr.mxu0 0.0
        %5950 = vmatpush1.msra.mxu0 0.0
        %5951 = vmatprep.subr.mxu0 0.0
        %5952 = vmatpush1.msra.mxu0 0.0
        %5953 = vmatprep.subr.mxu0 0.0
        %5954 = vmatpush1.msra.mxu0 0.0
        %5955 = vmatprep.subr.mxu0 0.0
        %5956 = vmatpush1.msra.mxu0 0.0
        %5957 = vmatprep.subr.mxu0 0.0
        %5958 = vmatpush1.msra.mxu0 0.0
        %5959 = vmatprep.subr.mxu0 0.0
        %5960 = vmatpush1.msra.mxu0 0.0
        %5961 = vmatprep.subr.mxu0 0.0
        %5962 = vmatpush1.msra.mxu0 0.0
        %5963 = vmatprep.mubr.f32.mxu0 0.0
        %v5964 = vand.u32 %v4742, 4294901760
        %5965 = vmatmul.mubr.f32.gmra.mrb[0].mxu0 %v5964
        %v5966 = vpop.f32.mrb[0].mxu0
        %v5967 = vadd.f32 %v5790, %v5966
        %v5968 = vpop.f32.mrb[0].mxu0
        %5969 = vmatprep.mubr.f32.mxu0 0.0
        %v5970 = vand.u32 %v4743, 4294901760
        %5971 = vmatmul.mubr.f32.gmra.mrb[0].mxu0 %v5970
        %v5972 = vpop.f32.mrb[0].mxu0
        %v5973 = vadd.f32 %v5796, %v5972
        %v5974 = vpop.f32.mrb[0].mxu0
        %5975 = vmatprep.mubr.f32.mxu0 0.0
        %v5976 = vand.u32 %v4744, 4294901760
        %5977 = vmatmul.mubr.f32.gmra.mrb[0].mxu0 %v5976
        %v5978 = vpop.f32.mrb[0].mxu0
        %v5979 = vadd.f32 %v5802, %v5978
        %v5980 = vpop.f32.mrb[0].mxu0
        %5981 = vmatprep.mubr.f32.mxu0 0.0
        %v5982 = vand.u32 %v4745, 4294901760
        %5983 = vmatmul.mubr.f32.gmra.mrb[0].mxu0 %v5982
        %v5984 = vpop.f32.mrb[0].mxu0
        %v5985 = vadd.f32 %v5808, %v5984
        %v5986 = vpop.f32.mrb[0].mxu0
        %5987 = vmatprep.mubr.f32.mxu0 0.0
        %v5988 = vand.u32 %v4746, 4294901760
        %5989 = vmatmul.mubr.f32.gmra.mrb[0].mxu0 %v5988
        %v5990 = vpop.f32.mrb[0].mxu0
        %v5991 = vadd.f32 %v5814, %v5990
        %v5992 = vpop.f32.mrb[0].mxu0
        %5993 = vmatprep.mubr.f32.mxu0 0.0
        %v5994 = vand.u32 %v4747, 4294901760
        %5995 = vmatmul.mubr.f32.gmra.mrb[0].mxu0 %v5994
        %v5996 = vpop.f32.mrb[0].mxu0
        %v5997 = vadd.f32 %v5820, %v5996
        %v5998 = vpop.f32.mrb[0].mxu0
        %5999 = vmatprep.mubr.f32.mxu0 0.0
        %v6000 = vand.u32 %v4748, 4294901760
        %6001 = vmatmul.mubr.f32.gmra.mrb[0].mxu0 %v6000
        %v6002 = vpop.f32.mrb[0].mxu0
        %v6003 = vadd.f32 %v5826, %v6002
        %v6004 = vpop.f32.mrb[0].mxu0
        %6005 = vmatprep.mubr.f32.mxu0 0.0
        %v6006 = vand.u32 %v4749, 4294901760
        %6007 = vmatmul.mubr.f32.gmra.mrb[0].mxu0 %v6006
        %v6008 = vpop.f32.mrb[0].mxu0
        %v6009 = vadd.f32 %v5832, %v6008
        %v6010 = vpop.f32.mrb[0].mxu0
        %6011 = vmatprep.mubr.f32.mxu0 0.0
        %v6012 = vand.u32 %v4750, 4294901760
        %6013 = vmatmul.mubr.f32.gmra.mrb[0].mxu0 %v6012
        %v6014 = vpop.f32.mrb[0].mxu0
        %v6015 = vadd.f32 %v5838, %v6014
        %v6016 = vpop.f32.mrb[0].mxu0
        %6017 = vmatprep.mubr.f32.mxu0 0.0
        %v6018 = vand.u32 %v4751, 4294901760
        %6019 = vmatmul.mubr.f32.gmra.mrb[0].mxu0 %v6018
        %v6020 = vpop.f32.mrb[0].mxu0
        %v6021 = vadd.f32 %v5844, %v6020
        %v6022 = vpop.f32.mrb[0].mxu0
        %6023 = vmatprep.mubr.f32.mxu0 0.0
        %v6024 = vand.u32 %v4752, 4294901760
        %6025 = vmatmul.mubr.f32.gmra.mrb[0].mxu0 %v6024
        %v6026 = vpop.f32.mrb[0].mxu0
        %v6027 = vadd.f32 %v5850, %v6026
        %v6028 = vpop.f32.mrb[0].mxu0
        %6029 = vmatprep.mubr.f32.mxu0 0.0
        %v6030 = vand.u32 %v4753, 4294901760
        %6031 = vmatmul.mubr.f32.gmra.mrb[0].mxu0 %v6030
        %v6032 = vpop.f32.mrb[0].mxu0
        %v6033 = vadd.f32 %v5856, %v6032
        %v6034 = vpop.f32.mrb[0].mxu0
        %6035 = vmatprep.mubr.f32.mxu0 0.0
        %v6036 = vand.u32 %v4754, 4294901760
        %6037 = vmatmul.mubr.f32.gmra.mrb[0].mxu0 %v6036
        %v6038 = vpop.f32.mrb[0].mxu0
        %v6039 = vadd.f32 %v5862, %v6038
        %v6040 = vpop.f32.mrb[0].mxu0
        %6041 = vmatprep.mubr.f32.mxu0 0.0
        %v6042 = vand.u32 %v4755, 4294901760
        %6043 = vmatmul.mubr.f32.gmra.mrb[0].mxu0 %v6042
        %v6044 = vpop.f32.mrb[0].mxu0
        %v6045 = vadd.f32 %v5868, %v6044
        %v6046 = vpop.f32.mrb[0].mxu0
        %6047 = vmatprep.mubr.f32.mxu0 0.0
        %v6048 = vand.u32 %v4756, 4294901760
        %6049 = vmatmul.mubr.f32.gmra.mrb[0].mxu0 %v6048
        %v6050 = vpop.f32.mrb[0].mxu0
        %v6051 = vadd.f32 %v5874, %v6050
        %v6052 = vpop.f32.mrb[0].mxu0
        %6053 = vmatprep.mubr.f32.mxu0 0.0
        %v6054 = vand.u32 %v4757, 4294901760
        %6055 = vmatmul.mubr.f32.gmra.mrb[0].mxu0 %v6054
        %v6056 = vpop.f32.mrb[0].mxu0
        %v6057 = vadd.f32 %v5880, %v6056
        %v6058 = vpop.f32.mrb[0].mxu0
        %6059 = vdwg.mxu0
        %v6060 = vadd.f32 %v4758, %v5967
        %v6061 = vadd.f32 %v4759, %v5973
        %v6062 = vadd.f32 %v4760, %v5979
        %v6063 = vadd.f32 %v4761, %v5985
        %v6064 = vadd.f32 %v4762, %v5991
        %v6065 = vadd.f32 %v4763, %v5997
        %v6066 = vadd.f32 %v4764, %v6003
        %v6067 = vadd.f32 %v4765, %v6009
        %v6068 = vadd.f32 %v4766, %v6015
        %v6069 = vadd.f32 %v4767, %v6021
        %v6070 = vadd.f32 %v4768, %v6027
        %v6071 = vadd.f32 %v4769, %v6033
        %v6072 = vadd.f32 %v4770, %v6039
        %v6073 = vadd.f32 %v4771, %v6045
        %v6074 = vadd.f32 %v4772, %v6051
        %v6075 = vadd.f32 %v4773, %v6057
        %6076 = vst [vmem:[#allocation5] sm:$0xff] %v6060
        %6077 = vst [vmem:[#allocation5 + $0x8] sm:$0xff] %v6061
        %6078 = vst [vmem:[#allocation5 + $0x10] sm:$0xff] %v6062
        %6079 = vst [vmem:[#allocation5 + $0x18] sm:$0xff] %v6063
        %6080 = vst [vmem:[#allocation5 + $0x20] sm:$0xff] %v6064
        %6081 = vst [vmem:[#allocation5 + $0x28] sm:$0xff] %v6065
        %6082 = vst [vmem:[#allocation5 + $0x30] sm:$0xff] %v6066
        %6083 = vst [vmem:[#allocation5 + $0x38] sm:$0xff] %v6067
        %6084 = vst [vmem:[#allocation5 + $0x40] sm:$0xff] %v6068
        %6085 = vst [vmem:[#allocation5 + $0x48] sm:$0xff] %v6069
        %6086 = vst [vmem:[#allocation5 + $0x50] sm:$0xff] %v6070
        %6087 = vst [vmem:[#allocation5 + $0x58] sm:$0xff] %v6071
        %6088 = vst [vmem:[#allocation5 + $0x60] sm:$0xff] %v6072
        %6089 = vst [vmem:[#allocation5 + $0x68] sm:$0xff] %v6073
        %6090 = vst [vmem:[#allocation5 + $0x70] sm:$0xff] %v6074
        %6091 = vst [vmem:[#allocation5 + $0x78] sm:$0xff] %v6075
        // Predicated region
        $region61: #{tpu_custom_call.1} parent=51 // pred_check
          %p6092 = pneg %p233
        $region62: #{tpu_custom_call.1} parent=51 // pred_check_branch
          %6094 = sbr.rel (%p6092) target = $region64
        $region63: #{tpu_custom_call.1} parent=51 // pred_region
          %s6095 = smul.u32 16, %s25
          %s6097 = ssub.s32 2048, 2048
          %6098 = vsyncadd [#allocation4], %s6097
          %s6099 = smul.addr %s6095, 128
          %s6100 = scalar_lea.hbm %s8, %s6099
          %s6101 = sshll.u32 [#allocation5], 4
          %s6102 = int_to_ptr.vmem [resolvable:$true] %s6101
          %6107 = dma.vmem_to_hbm [thread:$0]  %s6102, 2048, %s6100, [#allocation4], 128, 128, 8
        $region64: #{tpu_custom_call.1} parent=51 // pred_fallthru
          _
        // Predicated region
        $region65: #{tpu_custom_call.1} parent=51 // pred_check
          %p6108 = pneg %p233
        $region66: #{tpu_custom_call.1} parent=51 // pred_check_branch
          %6110 = sbr.rel (%p6108) target = $region68
        $region67: #{tpu_custom_call.1} parent=51 // pred_region
          %6111 = dma.done [#allocation4], 2048
        $region68: #{tpu_custom_call.1} parent=51 // pred_fallthru
          _
      $region52: #{tpu_custom_call.1} parent=5 // pred_fallthru
        _
      %p6112 = scmp.le.s32.totalorder 2, %s16
      // Predicated region
      $region69: #{tpu_custom_call.1} parent=5 // pred_check
        %p6113 = pneg %p6112
      $region70: #{tpu_custom_call.1} parent=5 // pred_check_branch
        %6115 = sbr.rel (%p6113) target = $region72
      $region71: #{tpu_custom_call.1} parent=5 // pred_region
        %s6116 = ssub.s32 %s16, 2
      $region72: #{tpu_custom_call.1} parent=5 // pred_fallthru
        _
    $region6: #{tpu_custom_call.1} parent=1 // loop_footer
      %s20 = sadd.s32 1, %s16
    $region7: #{tpu_custom_call.1} parent=1 // loop_footer_branch
      %15 = sbr.rel target = $region3
    $region8: #{tpu_custom_call.1} parent=1 // loop_exit
      _
    %6117 = vsyncpa [#allocation3], 1
    %s6118 = scalar_lea.sflag [#allocation3], 1
    %6119 = vsyncpa %s6118, 1
    %6120 = vsyncpa [#allocation4], 1
    %s6121 = scalar_lea.sflag [#allocation4], 1
    %6122 = vsyncpa %s6121, 1

</llo_original>
